<compile_context>
chip_gen: v7x
topology: tpu7x:2x2x1
jax: 0.10.0
libtpu: 0.0.40
codegen_flags: <defaults>
</compile_context>

<pallas_src>
import jax
import jax.numpy as jnp
from jax import lax
from jax.experimental import pallas as pl
from jax.experimental.pallas import tpu as pltpu

C_IN = 2064
C_OUT = 344
H = 7
W = 7
HW = H * W
EPS = 1e-3


def _se_conv_bn_kernel(xse_ref, x_ref, w_ref, gamma_ref, beta_ref, o_ref):
    # xse_ref:   (1, C_IN)      f32   squeeze-excite logits (sublane-broadcast row)
    # x_ref:     (HW, C_IN)     f32   input feature map, channels-last
    # w_ref:     (C_IN, C_OUT)  bf16  1x1 conv weight, channels-last
    # gamma_ref: (1, C_OUT)     f32   BN weight
    # beta_ref:  (1, C_OUT)     f32   BN bias
    # o_ref:     (HW, C_OUT)    f32
    scale = jax.nn.sigmoid(xse_ref[...])                         # (1, Cin)   -- EUP
    scaled = (scale * x_ref[...]).astype(jnp.bfloat16)           # (HW, Cin)  bf16
    # 1x1 conv == matmul over channels (MXU, bf16 inputs, f32 accumulation)
    out = jnp.dot(scaled, w_ref[...],
                  preferred_element_type=jnp.float32)            # (HW, Cout) f32
    # BatchNorm2d in training mode with N=1: batch stats == per-channel spatial stats
    mean = jnp.mean(out, axis=0, keepdims=True)                  # (1, Cout)
    centered = out - mean
    var = jnp.mean(centered * centered, axis=0, keepdims=True)   # biased variance
    inv_std = lax.rsqrt(var + EPS)
    o_ref[...] = centered * inv_std * gamma_ref[...] + beta_ref[...]


def prepare_conv_weight(conv_w):
    """Store the 1x1 conv weight once as channels-last bf16 [Cin, Cout]."""
    return jnp.asarray(conv_w.reshape(C_OUT, C_IN).T, dtype=jnp.bfloat16)


def se_conv_bn(x628, x632, w_cl_bf16, bn_gamma, bn_beta):
    """x628: [1, C_IN, H, W], x632: [1, C_IN, 1, 1], w_cl_bf16: [C_IN, C_OUT] bf16."""
    n, cin, h, w = x628.shape
    assert n == 1 and cin == C_IN and h == H and w == W
    assert w_cl_bf16.shape == (C_IN, C_OUT) and w_cl_bf16.dtype == jnp.bfloat16

    # channels-last activation: [HW, Cin]
    x_mat = jnp.transpose(x628, (0, 2, 3, 1)).reshape(HW, C_IN).astype(jnp.float32)
    x_se = x632.reshape(1, C_IN).astype(jnp.float32)
    gamma = bn_gamma.reshape(1, C_OUT).astype(jnp.float32)
    beta = bn_beta.reshape(1, C_OUT).astype(jnp.float32)

    vmem_spec = pl.BlockSpec(memory_space=pltpu.MemorySpace.VMEM)
    cost = pl.CostEstimate(
        flops=2 * HW * C_IN * C_OUT,                      # ~69.6 MFLOP matmul
        transcendentals=C_IN + C_OUT,                     # sigmoid + rsqrt
        bytes_accessed=(C_IN * 4                          # x_se
                        + HW * C_IN * 4                   # x
                        + C_IN * C_OUT * 2                # weight (bf16)
                        + 2 * C_OUT * 4                   # gamma, beta
                        + HW * C_OUT * 4),                # out
    )

    out = pl.pallas_call(
        _se_conv_bn_kernel,
        out_shape=jax.ShapeDtypeStruct((HW, C_OUT), jnp.float32),
        in_specs=[vmem_spec] * 5,
        out_specs=vmem_spec,
        cost_estimate=cost,
    )(x_se, x_mat, w_cl_bf16, gamma, beta)

    # [HW, Cout] -> [1, Cout, H, W]
    return jnp.transpose(out.reshape(H, W, C_OUT), (2, 0, 1))[None]


def _reference(x628, x632, conv_w, bn_gamma, bn_beta):
    s = jax.nn.sigmoid(x632)
    y = s * x628                                                  # [1, Cin, H, W]
    y_mat = y.reshape(C_IN, HW)
    conv = (conv_w.reshape(C_OUT, C_IN) @ y_mat).reshape(1, C_OUT, H, W)
    mean = jnp.mean(conv, axis=(0, 2, 3), keepdims=True)
    var = jnp.mean((conv - mean) ** 2, axis=(0, 2, 3), keepdims=True)
    gamma = bn_gamma.reshape(1, C_OUT, 1, 1)
    beta = bn_beta.reshape(1, C_OUT, 1, 1)
    return (conv - mean) * lax.rsqrt(var + EPS) * gamma + beta


if __name__ == "__main__":
    key = jax.random.PRNGKey(0)
    k1, k2, k3 = jax.random.split(key, 3)

    # Inputs (shapes taken from the PyTorch module)
    x628 = jax.random.normal(k1, (1, C_IN, H, W), dtype=jnp.float32)
    x632 = jax.random.normal(k2, (1, C_IN, 1, 1), dtype=jnp.float32)

    # Deterministic parameter init
    conv_w = jax.random.normal(k3, (C_OUT, C_IN, 1, 1), dtype=jnp.float32) * 0.02
    bn_gamma = jnp.ones((C_OUT,), dtype=jnp.float32)   # PyTorch BN default init
    bn_beta = jnp.zeros((C_OUT,), dtype=jnp.float32)

    # Weight is "stored" channels-last in bf16 (done once, outside the hot call).
    w_cl_bf16 = jax.block_until_ready(prepare_conv_weight(conv_w))

    out = se_conv_bn(x628, x632, w_cl_bf16, bn_gamma, bn_beta)
    out = jax.block_until_ready(out)

    ref = _reference(x628, x632, conv_w, bn_gamma, bn_beta)
    assert out.shape == (1, C_OUT, H, W)
    # bf16 matmul (f32 accumulation over K=2064) -> slightly looser tolerance.
    assert jnp.allclose(out, ref, atol=2e-2, rtol=2e-2), "mismatch vs reference"

    print("KERNEL_OK")
</pallas_src>

<mosaic_0001>
module attributes {stable_mosaic.version = 11 : i64} {
  func.func @_se_conv_bn_kernel(%arg0: memref<1x2064xf32, #tpu.memory_space<vmem>>, %arg1: memref<49x2064xf32, #tpu.memory_space<vmem>>, %arg2: memref<2064x344xbf16, #tpu.memory_space<vmem>>, %arg3: memref<1x344xf32, #tpu.memory_space<vmem>>, %arg4: memref<1x344xf32, #tpu.memory_space<vmem>>, %arg5: memref<49x344xf32, #tpu.memory_space<vmem>>) attributes {dimension_semantics = [], scalar_prefetch = 0 : i64, scratch_operands = 0 : i64, tpu.core_type = #tpu.core_type<tc>} {
    %c0 = arith.constant 0 : index
    %c0_0 = arith.constant 0 : index
    %0 = vector.load %arg0[%c0, %c0_0] : memref<1x2064xf32, #tpu.memory_space<vmem>>, vector<1x2064xf32>
    %1 = arith.negf %0 : vector<1x2064xf32>
    %2 = math.exp %1 : vector<1x2064xf32>
    %cst = arith.constant 1.000000e+00 : f32
    %3 = vector.broadcast %cst : f32 to vector<1x2064xf32>
    %4 = arith.addf %3, %2 : vector<1x2064xf32>
    %5 = arith.divf %3, %4 : vector<1x2064xf32>
    %c0_1 = arith.constant 0 : index
    %c0_2 = arith.constant 0 : index
    %6 = vector.load %arg1[%c0_1, %c0_2] : memref<49x2064xf32, #tpu.memory_space<vmem>>, vector<49x2064xf32>
    %7 = vector.broadcast %5 : vector<1x2064xf32> to vector<49x2064xf32>
    %8 = arith.mulf %7, %6 : vector<49x2064xf32>
    %9 = arith.truncf %8 : vector<49x2064xf32> to vector<49x2064xbf16>
    %c0_3 = arith.constant 0 : index
    %c0_4 = arith.constant 0 : index
    %10 = vector.load %arg2[%c0_3, %c0_4] : memref<2064x344xbf16, #tpu.memory_space<vmem>>, vector<2064x344xbf16>
    %cst_5 = arith.constant dense<0.000000e+00> : vector<49x344xf32>
    %11 = tpu.matmul %9, %10, %cst_5 {dimension_numbers = #tpu.dot_dimension_numbers<[1], [0], [0], [1], [0, 0, 1, 1], [], []>} : vector<49x2064xbf16>, vector<2064x344xbf16>, vector<49x344xf32> -> vector<49x344xf32>
    %cst_6 = arith.constant dense<0.000000e+00> : vector<344xf32>
    %12 = vector.multi_reduction <add>, %11, %cst_6 [0] : vector<49x344xf32> to vector<344xf32>
    %13 = vector.shape_cast %12 : vector<344xf32> to vector<1x344xf32>
    %cst_7 = arith.constant 4.900000e+01 : f32
    %14 = vector.broadcast %cst_7 : f32 to vector<1x344xf32>
    %15 = arith.divf %13, %14 : vector<1x344xf32>
    %16 = vector.broadcast %15 : vector<1x344xf32> to vector<49x344xf32>
    %17 = arith.subf %11, %16 : vector<49x344xf32>
    %18 = arith.mulf %17, %17 : vector<49x344xf32>
    %cst_8 = arith.constant dense<0.000000e+00> : vector<344xf32>
    %19 = vector.multi_reduction <add>, %18, %cst_8 [0] : vector<49x344xf32> to vector<344xf32>
    %20 = vector.shape_cast %19 : vector<344xf32> to vector<1x344xf32>
    %cst_9 = arith.constant 4.900000e+01 : f32
    %21 = vector.broadcast %cst_9 : f32 to vector<1x344xf32>
    %22 = arith.divf %20, %21 : vector<1x344xf32>
    %cst_10 = arith.constant 1.000000e-03 : f32
    %23 = vector.broadcast %cst_10 : f32 to vector<1x344xf32>
    %24 = arith.addf %22, %23 : vector<1x344xf32>
    %25 = math.rsqrt %24 : vector<1x344xf32>
    %26 = vector.broadcast %25 : vector<1x344xf32> to vector<49x344xf32>
    %27 = arith.mulf %17, %26 : vector<49x344xf32>
    %c0_11 = arith.constant 0 : index
    %c0_12 = arith.constant 0 : index
    %28 = vector.load %arg3[%c0_11, %c0_12] : memref<1x344xf32, #tpu.memory_space<vmem>>, vector<1x344xf32>
    %29 = vector.broadcast %28 : vector<1x344xf32> to vector<49x344xf32>
    %30 = arith.mulf %27, %29 : vector<49x344xf32>
    %c0_13 = arith.constant 0 : index
    %c0_14 = arith.constant 0 : index
    %31 = vector.load %arg4[%c0_13, %c0_14] : memref<1x344xf32, #tpu.memory_space<vmem>>, vector<1x344xf32>
    %32 = vector.broadcast %31 : vector<1x344xf32> to vector<49x344xf32>
    %33 = arith.addf %30, %32 : vector<49x344xf32>
    %c0_15 = arith.constant 0 : index
    %c0_16 = arith.constant 0 : index
    %34 = vector.load %arg5[%c0_15, %c0_16] : memref<49x344xf32, #tpu.memory_space<vmem>>, vector<49x344xf32>
    tpu.vector_store %arg5[%c0_15, %c0_16], %33 {strides = array<i32>} : memref<49x344xf32, #tpu.memory_space<vmem>>, vector<49x344xf32>,
    return
  }
}

</mosaic_0001>

<llo_original>
// kernel: tpu_custom_call.1
$region0: #{tpu_custom_call.1}
  #allocation0 [shape = 'u32[]', space=smem, size = 0x4, offset = 0x4, fixed_abs, tag = 'smem constant byte address 0x4 - core index']
  #allocation1 [shape = 'u32[144,128]{1,0:T(1,128)}', space=vmem, size = 0x12000, scoped, tag = 'internal scratch']
  %s0 = inlined_call_operand.vmem [shape: f32[1,2064], index: 0, kind: input, shape index: {}]
  %s1 = inlined_call_operand.vmem [shape: f32[49,2064], index: 1, kind: input, shape index: {}]
  %s2 = inlined_call_operand.vmem [shape: bf16[2064,344], index: 2, kind: input, shape index: {}]
  %s3 = inlined_call_operand.vmem [shape: f32[1,344], index: 3, kind: input, shape index: {}]
  %s4 = inlined_call_operand.vmem [shape: f32[1,344], index: 4, kind: input, shape index: {}]
  %s5 = inlined_call_operand.hbm [shape: f32[49,344], index: 5, kind: output, shape index: {}]
  %s6 = sld [smem:[#allocation0]]
  $region30: #{tpu_custom_call.1} parent=0
    _
  %s8 = ssub.s32 1, %s6
  %s9 = scalar_select 0, %s8, %s6
  $region1: #{tpu_custom_call.1} parent=0
    #allocation2 [shape = 'u8[86016]{0}', space=vmem, size = 0x15000, scoped, tag = 'output window, operand 0, single buffered']
    #allocation3 [shape = 's32[1]{0}', space=sflag, size = 0x4, scoped, tag = 'scoped memory for tpu_custom_call.1']
    %10 = vsyncpa [#allocation3], 0
    // Predicated region
    $region2: #{tpu_custom_call.1} parent=1 // pred_check
      _
    $region3: #{tpu_custom_call.1} parent=1 // pred_check_branch
      %12 = sbr.rel (0) target = $region5
    $region4: #{tpu_custom_call.1} parent=1 // pred_region
      _
    $region5: #{tpu_custom_call.1} parent=1 // pred_fallthru
      _
    // Predicated region
    $region6: #{tpu_custom_call.1} parent=1 // pred_check
      _
    $region7: #{tpu_custom_call.1} parent=1 // pred_check_branch
      %14 = sbr.rel (0) target = $region9
    $region8: #{tpu_custom_call.1} parent=1 // pred_region
      _
    $region9: #{tpu_custom_call.1} parent=1 // pred_fallthru
      _
    // Predicated region
    $region10: #{tpu_custom_call.1} parent=1 // pred_check
      _
    $region11: #{tpu_custom_call.1} parent=1 // pred_check_branch
      %16 = sbr.rel (0) target = $region13
    $region12: #{tpu_custom_call.1} parent=1 // pred_region
      _
    $region13: #{tpu_custom_call.1} parent=1 // pred_fallthru
      _
    // Predicated region
    $region14: #{tpu_custom_call.1} parent=1 // pred_check
      _
    $region15: #{tpu_custom_call.1} parent=1 // pred_check_branch
      %18 = sbr.rel (0) target = $region17
    $region16: #{tpu_custom_call.1} parent=1 // pred_region
      _
    $region17: #{tpu_custom_call.1} parent=1 // pred_fallthru
      _
    // Predicated region
    $region18: #{tpu_custom_call.1} parent=1 // pred_check
      _
    $region19: #{tpu_custom_call.1} parent=1 // pred_check_branch
      %20 = sbr.rel (0) target = $region21
    $region20: #{tpu_custom_call.1} parent=1 // pred_region
      _
    $region21: #{tpu_custom_call.1} parent=1 // pred_fallthru
      _
    %v22 = vld [vmem:[%s0] sm:$0xff]
    %v23 = vld [vmem:[%s0 + $0x8] sm:$0xff]
    %v24 = vld [vmem:[%s0 + $0x10] sm:$0x1]
    %v25 = vxor.u32 %v22, 2147483648
    %v26 = vxor.u32 %v23, 2147483648
    %v27 = vxor.u32 %v24, 2147483648
    %v28 = vmul.f32 %v25, 1.442695
    %v29 = vpow.pop %v28
    %v30 = vmul.f32 %v26, 1.442695
    %v31 = vpow.pop %v30
    %v32 = vmul.f32 %v27, 1.442695
    %v33 = vpow.pop %v32
    %v34 = vadd.f32 %v29, 1.0
    %v35 = vadd.f32 %v31, 1.0
    %v36 = vadd.f32 %v33, 1.0
    %v37 = vrcp.pop %v34
    %v38 = vmul.f32 1.0, %v37
    %v39 = vrcp.pop %v35
    %v40 = vmul.f32 1.0, %v39
    %v41 = vrcp.pop %v36
    %v42 = vmul.f32 1.0, %v41
    %v43 = vld [vmem:[%s1] sm:$0xff]
    %v44 = vld [vmem:[%s1 + $0x8] sm:$0xff]
    %v45 = vld [vmem:[%s1 + $0x10] sm:$0xff]
    %v46 = vld [vmem:[%s1 + $0x18] sm:$0xff]
    %v47 = vld [vmem:[%s1 + $0x20] sm:$0xff]
    %v48 = vld [vmem:[%s1 + $0x28] sm:$0xff]
    %v49 = vld [vmem:[%s1 + $0x30] sm:$0xff]
    %v50 = vld [vmem:[%s1 + $0x38] sm:$0xff]
    %v51 = vld [vmem:[%s1 + $0x40] sm:$0xff]
    %v52 = vld [vmem:[%s1 + $0x48] sm:$0xff]
    %v53 = vld [vmem:[%s1 + $0x50] sm:$0xff]
    %v54 = vld [vmem:[%s1 + $0x58] sm:$0xff]
    %v55 = vld [vmem:[%s1 + $0x60] sm:$0xff]
    %v56 = vld [vmem:[%s1 + $0x68] sm:$0xff]
    %v57 = vld [vmem:[%s1 + $0x70] sm:$0xff]
    %v58 = vld [vmem:[%s1 + $0x78] sm:$0xff]
    %v59 = vld [vmem:[%s1 + $0x80] sm:$0xff]
    %v60 = vld [vmem:[%s1 + $0x88] sm:$0xff]
    %v61 = vld [vmem:[%s1 + $0x90] sm:$0xff]
    %v62 = vld [vmem:[%s1 + $0x98] sm:$0xff]
    %v63 = vld [vmem:[%s1 + $0xa0] sm:$0xff]
    %v64 = vld [vmem:[%s1 + $0xa8] sm:$0xff]
    %v65 = vld [vmem:[%s1 + $0xb0] sm:$0xff]
    %v66 = vld [vmem:[%s1 + $0xb8] sm:$0xff]
    %v67 = vld [vmem:[%s1 + $0xc0] sm:$0xff]
    %v68 = vld [vmem:[%s1 + $0xc8] sm:$0xff]
    %v69 = vld [vmem:[%s1 + $0xd0] sm:$0xff]
    %v70 = vld [vmem:[%s1 + $0xd8] sm:$0xff]
    %v71 = vld [vmem:[%s1 + $0xe0] sm:$0xff]
    %v72 = vld [vmem:[%s1 + $0xe8] sm:$0xff]
    %v73 = vld [vmem:[%s1 + $0xf0] sm:$0xff]
    %v74 = vld [vmem:[%s1 + $0xf8] sm:$0xff]
    %v75 = vld [vmem:[%s1 + $0x100] sm:$0xff]
    %v76 = vld [vmem:[%s1 + $0x108] sm:$0xff]
    %v77 = vld [vmem:[%s1 + $0x110] sm:$0xff]
    %v78 = vld [vmem:[%s1 + $0x118] sm:$0xff]
    %v79 = vld [vmem:[%s1 + $0x120] sm:$0xff]
    %v80 = vld [vmem:[%s1 + $0x128] sm:$0xff]
    %v81 = vld [vmem:[%s1 + $0x130] sm:$0xff]
    %v82 = vld [vmem:[%s1 + $0x138] sm:$0xff]
    %v83 = vld [vmem:[%s1 + $0x140] sm:$0xff]
    %v84 = vld [vmem:[%s1 + $0x148] sm:$0xff]
    %v85 = vld [vmem:[%s1 + $0x150] sm:$0xff]
    %v86 = vld [vmem:[%s1 + $0x158] sm:$0xff]
    %v87 = vld [vmem:[%s1 + $0x160] sm:$0xff]
    %v88 = vld [vmem:[%s1 + $0x168] sm:$0xff]
    %v89 = vld [vmem:[%s1 + $0x170] sm:$0xff]
    %v90 = vld [vmem:[%s1 + $0x178] sm:$0xff]
    %v91 = vld [vmem:[%s1 + $0x180] sm:$0xff]
    %v92 = vld [vmem:[%s1 + $0x188] sm:$0xff]
    %v93 = vld [vmem:[%s1 + $0x190] sm:$0xff]
    %v94 = vld [vmem:[%s1 + $0x198] sm:$0xff]
    %v95 = vld [vmem:[%s1 + $0x1a0] sm:$0xff]
    %v96 = vld [vmem:[%s1 + $0x1a8] sm:$0xff]
    %v97 = vld [vmem:[%s1 + $0x1b0] sm:$0xff]
    %v98 = vld [vmem:[%s1 + $0x1b8] sm:$0xff]
    %v99 = vld [vmem:[%s1 + $0x1c0] sm:$0xff]
    %v100 = vld [vmem:[%s1 + $0x1c8] sm:$0xff]
    %v101 = vld [vmem:[%s1 + $0x1d0] sm:$0xff]
    %v102 = vld [vmem:[%s1 + $0x1d8] sm:$0xff]
    %v103 = vld [vmem:[%s1 + $0x1e0] sm:$0xff]
    %v104 = vld [vmem:[%s1 + $0x1e8] sm:$0xff]
    %v105 = vld [vmem:[%s1 + $0x1f0] sm:$0xff]
    %v106 = vld [vmem:[%s1 + $0x1f8] sm:$0xff]
    %v107 = vld [vmem:[%s1 + $0x200] sm:$0xff]
    %v108 = vld [vmem:[%s1 + $0x208] sm:$0xff]
    %v109 = vld [vmem:[%s1 + $0x210] sm:$0xff]
    %v110 = vld [vmem:[%s1 + $0x218] sm:$0xff]
    %v111 = vld [vmem:[%s1 + $0x220] sm:$0xff]
    %v112 = vld [vmem:[%s1 + $0x228] sm:$0xff]
    %v113 = vld [vmem:[%s1 + $0x230] sm:$0xff]
    %v114 = vld [vmem:[%s1 + $0x238] sm:$0xff]
    %v115 = vld [vmem:[%s1 + $0x240] sm:$0xff]
    %v116 = vld [vmem:[%s1 + $0x248] sm:$0xff]
    %v117 = vld [vmem:[%s1 + $0x250] sm:$0xff]
    %v118 = vld [vmem:[%s1 + $0x258] sm:$0xff]
    %v119 = vld [vmem:[%s1 + $0x260] sm:$0xff]
    %v120 = vld [vmem:[%s1 + $0x268] sm:$0xff]
    %v121 = vld [vmem:[%s1 + $0x270] sm:$0xff]
    %v122 = vld [vmem:[%s1 + $0x278] sm:$0xff]
    %v123 = vld [vmem:[%s1 + $0x280] sm:$0xff]
    %v124 = vld [vmem:[%s1 + $0x288] sm:$0xff]
    %v125 = vld [vmem:[%s1 + $0x290] sm:$0xff]
    %v126 = vld [vmem:[%s1 + $0x298] sm:$0xff]
    %v127 = vld [vmem:[%s1 + $0x2a0] sm:$0xff]
    %v128 = vld [vmem:[%s1 + $0x2a8] sm:$0xff]
    %v129 = vld [vmem:[%s1 + $0x2b0] sm:$0xff]
    %v130 = vld [vmem:[%s1 + $0x2b8] sm:$0xff]
    %v131 = vld [vmem:[%s1 + $0x2c0] sm:$0xff]
    %v132 = vld [vmem:[%s1 + $0x2c8] sm:$0xff]
    %v133 = vld [vmem:[%s1 + $0x2d0] sm:$0xff]
    %v134 = vld [vmem:[%s1 + $0x2d8] sm:$0xff]
    %v135 = vld [vmem:[%s1 + $0x2e0] sm:$0xff]
    %v136 = vld [vmem:[%s1 + $0x2e8] sm:$0xff]
    %v137 = vld [vmem:[%s1 + $0x2f0] sm:$0xff]
    %v138 = vld [vmem:[%s1 + $0x2f8] sm:$0xff]
    %v139 = vld [vmem:[%s1 + $0x300] sm:$0xff]
    %v140 = vld [vmem:[%s1 + $0x308] sm:$0xff]
    %v141 = vld [vmem:[%s1 + $0x310] sm:$0xff]
    %v142 = vld [vmem:[%s1 + $0x318] sm:$0xff]
    %v143 = vld [vmem:[%s1 + $0x320] sm:$0xff]
    %v144 = vld [vmem:[%s1 + $0x328] sm:$0xff]
    %v145 = vld [vmem:[%s1 + $0x330] sm:$0x1]
    %v146 = vld [vmem:[%s1 + $0x338] sm:$0x1]
    %v147 = vld [vmem:[%s1 + $0x340] sm:$0x1]
    %v148 = vld [vmem:[%s1 + $0x348] sm:$0x1]
    %v149 = vld [vmem:[%s1 + $0x350] sm:$0x1]
    %v150 = vld [vmem:[%s1 + $0x358] sm:$0x1]
    %v151 = vld [vmem:[%s1 + $0x360] sm:$0x1]
    %v152 = vld [vmem:[%s1 + $0x368] sm:$0x1]
    %v153 = vld [vmem:[%s1 + $0x370] sm:$0x1]
    %v154 = vld [vmem:[%s1 + $0x378] sm:$0x1]
    %v155 = vld [vmem:[%s1 + $0x380] sm:$0x1]
    %v156 = vld [vmem:[%s1 + $0x388] sm:$0x1]
    %v157 = vld [vmem:[%s1 + $0x390] sm:$0x1]
    %v158 = vld [vmem:[%s1 + $0x398] sm:$0x1]
    %v159 = vld [vmem:[%s1 + $0x3a0] sm:$0x1]
    %v160 = vld [vmem:[%s1 + $0x3a8] sm:$0x1]
    %v161 = vld [vmem:[%s1 + $0x3b0] sm:$0x1]
    %v165 = vlaneseq
    %v166 = vshrl.u32 %v165, 7
    %v167 = vsub.s32 0, %v166
    %v168 = vrot.slane %v38, %v167
    %v169 = vlaneseq
    %v170 = vshrl.u32 %v169, 7
    %v171 = vsub.s32 1, %v170
    %v172 = vrot.slane %v38, %v171
    %v173 = vlaneseq
    %v174 = vshrl.u32 %v173, 7
    %v175 = vsub.s32 2, %v174
    %v176 = vrot.slane %v38, %v175
    %v177 = vlaneseq
    %v178 = vshrl.u32 %v177, 7
    %v179 = vsub.s32 3, %v178
    %v180 = vrot.slane %v38, %v179
    %v181 = vlaneseq
    %v182 = vshrl.u32 %v181, 7
    %v183 = vsub.s32 4, %v182
    %v184 = vrot.slane %v38, %v183
    %v185 = vlaneseq
    %v186 = vshrl.u32 %v185, 7
    %v187 = vsub.s32 5, %v186
    %v188 = vrot.slane %v38, %v187
    %v189 = vlaneseq
    %v190 = vshrl.u32 %v189, 7
    %v191 = vsub.s32 6, %v190
    %v192 = vrot.slane %v38, %v191
    %v193 = vlaneseq
    %v194 = vshrl.u32 %v193, 7
    %v195 = vsub.s32 7, %v194
    %v196 = vrot.slane %v38, %v195
    %v197 = vlaneseq
    %v198 = vshrl.u32 %v197, 7
    %v199 = vsub.s32 0, %v198
    %v200 = vrot.slane %v40, %v199
    %v201 = vlaneseq
    %v202 = vshrl.u32 %v201, 7
    %v203 = vsub.s32 1, %v202
    %v204 = vrot.slane %v40, %v203
    %v205 = vlaneseq
    %v206 = vshrl.u32 %v205, 7
    %v207 = vsub.s32 2, %v206
    %v208 = vrot.slane %v40, %v207
    %v209 = vlaneseq
    %v210 = vshrl.u32 %v209, 7
    %v211 = vsub.s32 3, %v210
    %v212 = vrot.slane %v40, %v211
    %v213 = vlaneseq
    %v214 = vshrl.u32 %v213, 7
    %v215 = vsub.s32 4, %v214
    %v216 = vrot.slane %v40, %v215
    %v217 = vlaneseq
    %v218 = vshrl.u32 %v217, 7
    %v219 = vsub.s32 5, %v218
    %v220 = vrot.slane %v40, %v219
    %v221 = vlaneseq
    %v222 = vshrl.u32 %v221, 7
    %v223 = vsub.s32 6, %v222
    %v224 = vrot.slane %v40, %v223
    %v225 = vlaneseq
    %v226 = vshrl.u32 %v225, 7
    %v227 = vsub.s32 7, %v226
    %v228 = vrot.slane %v40, %v227
    %v229 = vlaneseq
    %v230 = vshrl.u32 %v229, 7
    %v231 = vsub.s32 0, %v230
    %v232 = vrot.slane %v42, %v231
    %v250 = vmul.f32 %v168, %v43
    %v251 = vmul.f32 %v172, %v44
    %v252 = vmul.f32 %v176, %v45
    %v253 = vmul.f32 %v180, %v46
    %v254 = vmul.f32 %v184, %v47
    %v255 = vmul.f32 %v188, %v48
    %v256 = vmul.f32 %v192, %v49
    %v257 = vmul.f32 %v196, %v50
    %v258 = vmul.f32 %v200, %v51
    %v259 = vmul.f32 %v204, %v52
    %v260 = vmul.f32 %v208, %v53
    %v261 = vmul.f32 %v212, %v54
    %v262 = vmul.f32 %v216, %v55
    %v263 = vmul.f32 %v220, %v56
    %v264 = vmul.f32 %v224, %v57
    %v265 = vmul.f32 %v228, %v58
    %v266 = vmul.f32 %v232, %v59
    %v267 = vmul.f32 %v168, %v60
    %v268 = vmul.f32 %v172, %v61
    %v269 = vmul.f32 %v176, %v62
    %v270 = vmul.f32 %v180, %v63
    %v271 = vmul.f32 %v184, %v64
    %v272 = vmul.f32 %v188, %v65
    %v273 = vmul.f32 %v192, %v66
    %v274 = vmul.f32 %v196, %v67
    %v275 = vmul.f32 %v200, %v68
    %v276 = vmul.f32 %v204, %v69
    %v277 = vmul.f32 %v208, %v70
    %v278 = vmul.f32 %v212, %v71
    %v279 = vmul.f32 %v216, %v72
    %v280 = vmul.f32 %v220, %v73
    %v281 = vmul.f32 %v224, %v74
    %v282 = vmul.f32 %v228, %v75
    %v283 = vmul.f32 %v232, %v76
    %v284 = vmul.f32 %v168, %v77
    %v285 = vmul.f32 %v172, %v78
    %v286 = vmul.f32 %v176, %v79
    %v287 = vmul.f32 %v180, %v80
    %v288 = vmul.f32 %v184, %v81
    %v289 = vmul.f32 %v188, %v82
    %v290 = vmul.f32 %v192, %v83
    %v291 = vmul.f32 %v196, %v84
    %v292 = vmul.f32 %v200, %v85
    %v293 = vmul.f32 %v204, %v86
    %v294 = vmul.f32 %v208, %v87
    %v295 = vmul.f32 %v212, %v88
    %v296 = vmul.f32 %v216, %v89
    %v297 = vmul.f32 %v220, %v90
    %v298 = vmul.f32 %v224, %v91
    %v299 = vmul.f32 %v228, %v92
    %v300 = vmul.f32 %v232, %v93
    %v301 = vmul.f32 %v168, %v94
    %v302 = vmul.f32 %v172, %v95
    %v303 = vmul.f32 %v176, %v96
    %v304 = vmul.f32 %v180, %v97
    %v305 = vmul.f32 %v184, %v98
    %v306 = vmul.f32 %v188, %v99
    %v307 = vmul.f32 %v192, %v100
    %v308 = vmul.f32 %v196, %v101
    %v309 = vmul.f32 %v200, %v102
    %v310 = vmul.f32 %v204, %v103
    %v311 = vmul.f32 %v208, %v104
    %v312 = vmul.f32 %v212, %v105
    %v313 = vmul.f32 %v216, %v106
    %v314 = vmul.f32 %v220, %v107
    %v315 = vmul.f32 %v224, %v108
    %v316 = vmul.f32 %v228, %v109
    %v317 = vmul.f32 %v232, %v110
    %v318 = vmul.f32 %v168, %v111
    %v319 = vmul.f32 %v172, %v112
    %v320 = vmul.f32 %v176, %v113
    %v321 = vmul.f32 %v180, %v114
    %v322 = vmul.f32 %v184, %v115
    %v323 = vmul.f32 %v188, %v116
    %v324 = vmul.f32 %v192, %v117
    %v325 = vmul.f32 %v196, %v118
    %v326 = vmul.f32 %v200, %v119
    %v327 = vmul.f32 %v204, %v120
    %v328 = vmul.f32 %v208, %v121
    %v329 = vmul.f32 %v212, %v122
    %v330 = vmul.f32 %v216, %v123
    %v331 = vmul.f32 %v220, %v124
    %v332 = vmul.f32 %v224, %v125
    %v333 = vmul.f32 %v228, %v126
    %v334 = vmul.f32 %v232, %v127
    %v335 = vmul.f32 %v168, %v128
    %v336 = vmul.f32 %v172, %v129
    %v337 = vmul.f32 %v176, %v130
    %v338 = vmul.f32 %v180, %v131
    %v339 = vmul.f32 %v184, %v132
    %v340 = vmul.f32 %v188, %v133
    %v341 = vmul.f32 %v192, %v134
    %v342 = vmul.f32 %v196, %v135
    %v343 = vmul.f32 %v200, %v136
    %v344 = vmul.f32 %v204, %v137
    %v345 = vmul.f32 %v208, %v138
    %v346 = vmul.f32 %v212, %v139
    %v347 = vmul.f32 %v216, %v140
    %v348 = vmul.f32 %v220, %v141
    %v349 = vmul.f32 %v224, %v142
    %v350 = vmul.f32 %v228, %v143
    %v351 = vmul.f32 %v232, %v144
    %v352 = vmul.f32 %v168, %v145
    %v353 = vmul.f32 %v172, %v146
    %v354 = vmul.f32 %v176, %v147
    %v355 = vmul.f32 %v180, %v148
    %v356 = vmul.f32 %v184, %v149
    %v357 = vmul.f32 %v188, %v150
    %v358 = vmul.f32 %v192, %v151
    %v359 = vmul.f32 %v196, %v152
    %v360 = vmul.f32 %v200, %v153
    %v361 = vmul.f32 %v204, %v154
    %v362 = vmul.f32 %v208, %v155
    %v363 = vmul.f32 %v212, %v156
    %v364 = vmul.f32 %v216, %v157
    %v365 = vmul.f32 %v220, %v158
    %v366 = vmul.f32 %v224, %v159
    %v367 = vmul.f32 %v228, %v160
    %v368 = vmul.f32 %v232, %v161
    %v369 = vpack.c.bf16 %v267, %v250
    %v370 = vpack.c.bf16 %v268, %v251
    %v371 = vpack.c.bf16 %v269, %v252
    %v372 = vpack.c.bf16 %v270, %v253
    %v373 = vpack.c.bf16 %v271, %v254
    %v374 = vpack.c.bf16 %v272, %v255
    %v375 = vpack.c.bf16 %v273, %v256
    %v376 = vpack.c.bf16 %v274, %v257
    %v377 = vpack.c.bf16 %v275, %v258
    %v378 = vpack.c.bf16 %v276, %v259
    %v379 = vpack.c.bf16 %v277, %v260
    %v380 = vpack.c.bf16 %v278, %v261
    %v381 = vpack.c.bf16 %v279, %v262
    %v382 = vpack.c.bf16 %v280, %v263
    %v383 = vpack.c.bf16 %v281, %v264
    %v384 = vpack.c.bf16 %v282, %v265
    %v385 = vpack.c.bf16 %v283, %v266
    %v386 = vpack.c.bf16 %v301, %v284
    %v387 = vpack.c.bf16 %v302, %v285
    %v388 = vpack.c.bf16 %v303, %v286
    %v389 = vpack.c.bf16 %v304, %v287
    %v390 = vpack.c.bf16 %v305, %v288
    %v391 = vpack.c.bf16 %v306, %v289
    %v392 = vpack.c.bf16 %v307, %v290
    %v393 = vpack.c.bf16 %v308, %v291
    %v394 = vpack.c.bf16 %v309, %v292
    %v395 = vpack.c.bf16 %v310, %v293
    %v396 = vpack.c.bf16 %v311, %v294
    %v397 = vpack.c.bf16 %v312, %v295
    %v398 = vpack.c.bf16 %v313, %v296
    %v399 = vpack.c.bf16 %v314, %v297
    %v400 = vpack.c.bf16 %v315, %v298
    %v401 = vpack.c.bf16 %v316, %v299
    %v402 = vpack.c.bf16 %v317, %v300
    %v403 = vpack.c.bf16 %v335, %v318
    %v404 = vpack.c.bf16 %v336, %v319
    %v405 = vpack.c.bf16 %v337, %v320
    %v406 = vpack.c.bf16 %v338, %v321
    %v407 = vpack.c.bf16 %v339, %v322
    %v408 = vpack.c.bf16 %v340, %v323
    %v409 = vpack.c.bf16 %v341, %v324
    %v410 = vpack.c.bf16 %v342, %v325
    %v411 = vpack.c.bf16 %v343, %v326
    %v412 = vpack.c.bf16 %v344, %v327
    %v413 = vpack.c.bf16 %v345, %v328
    %v414 = vpack.c.bf16 %v346, %v329
    %v415 = vpack.c.bf16 %v347, %v330
    %v416 = vpack.c.bf16 %v348, %v331
    %v417 = vpack.c.bf16 %v349, %v332
    %v418 = vpack.c.bf16 %v350, %v333
    %v419 = vpack.c.bf16 %v351, %v334
    %v420 = vpack.c.bf16 %v352, %v352
    %v421 = vpack.c.bf16 %v353, %v353
    %v422 = vpack.c.bf16 %v354, %v354
    %v423 = vpack.c.bf16 %v355, %v355
    %v424 = vpack.c.bf16 %v356, %v356
    %v425 = vpack.c.bf16 %v357, %v357
    %v426 = vpack.c.bf16 %v358, %v358
    %v427 = vpack.c.bf16 %v359, %v359
    %v428 = vpack.c.bf16 %v360, %v360
    %v429 = vpack.c.bf16 %v361, %v361
    %v430 = vpack.c.bf16 %v362, %v362
    %v431 = vpack.c.bf16 %v363, %v363
    %v432 = vpack.c.bf16 %v364, %v364
    %v433 = vpack.c.bf16 %v365, %v365
    %v434 = vpack.c.bf16 %v366, %v366
    %v435 = vpack.c.bf16 %v367, %v367
    %v436 = vpack.c.bf16 %v368, %v368
    %v437 = vld [vmem:[%s2] sm:$0xff]
    %v438 = vld [vmem:[%s2 + $0x8] sm:$0xf]
    %v439 = vld [vmem:[%s2 + $0xc] sm:$0xff]
    %v440 = vld [vmem:[%s2 + $0x14] sm:$0xf]
    %v441 = vld [vmem:[%s2 + $0x18] sm:$0xff]
    %v442 = vld [vmem:[%s2 + $0x20] sm:$0xf]
    %v443 = vld [vmem:[%s2 + $0x24] sm:$0xff]
    %v444 = vld [vmem:[%s2 + $0x2c] sm:$0xf]
    %v445 = vld [vmem:[%s2 + $0x30] sm:$0xff]
    %v446 = vld [vmem:[%s2 + $0x38] sm:$0xf]
    %v447 = vld [vmem:[%s2 + $0x3c] sm:$0xff]
    %v448 = vld [vmem:[%s2 + $0x44] sm:$0xf]
    %v449 = vld [vmem:[%s2 + $0x48] sm:$0xff]
    %v450 = vld [vmem:[%s2 + $0x50] sm:$0xf]
    %v451 = vld [vmem:[%s2 + $0x54] sm:$0xff]
    %v452 = vld [vmem:[%s2 + $0x5c] sm:$0xf]
    %v453 = vld [vmem:[%s2 + $0x60] sm:$0xff]
    %v454 = vld [vmem:[%s2 + $0x68] sm:$0xf]
    %v455 = vld [vmem:[%s2 + $0x6c] sm:$0xff]
    %v456 = vld [vmem:[%s2 + $0x74] sm:$0xf]
    %v457 = vld [vmem:[%s2 + $0x78] sm:$0xff]
    %v458 = vld [vmem:[%s2 + $0x80] sm:$0xf]
    %v459 = vld [vmem:[%s2 + $0x84] sm:$0xff]
    %v460 = vld [vmem:[%s2 + $0x8c] sm:$0xf]
    %v461 = vld [vmem:[%s2 + $0x90] sm:$0xff]
    %v462 = vld [vmem:[%s2 + $0x98] sm:$0xf]
    %v463 = vld [vmem:[%s2 + $0x9c] sm:$0xff]
    %v464 = vld [vmem:[%s2 + $0xa4] sm:$0xf]
    %v465 = vld [vmem:[%s2 + $0xa8] sm:$0xff]
    %v466 = vld [vmem:[%s2 + $0xb0] sm:$0xf]
    %v467 = vld [vmem:[%s2 + $0xb4] sm:$0xff]
    %v468 = vld [vmem:[%s2 + $0xbc] sm:$0xf]
    %v469 = vld [vmem:[%s2 + $0xc0] sm:$0xff]
    %v470 = vld [vmem:[%s2 + $0xc8] sm:$0xf]
    %v471 = vld [vmem:[%s2 + $0xcc] sm:$0xff]
    %v472 = vld [vmem:[%s2 + $0xd4] sm:$0xf]
    %v473 = vld [vmem:[%s2 + $0xd8] sm:$0xff]
    %v474 = vld [vmem:[%s2 + $0xe0] sm:$0xf]
    %v475 = vld [vmem:[%s2 + $0xe4] sm:$0xff]
    %v476 = vld [vmem:[%s2 + $0xec] sm:$0xf]
    %v477 = vld [vmem:[%s2 + $0xf0] sm:$0xff]
    %v478 = vld [vmem:[%s2 + $0xf8] sm:$0xf]
    %v479 = vld [vmem:[%s2 + $0xfc] sm:$0xff]
    %v480 = vld [vmem:[%s2 + $0x104] sm:$0xf]
    %v481 = vld [vmem:[%s2 + $0x108] sm:$0xff]
    %v482 = vld [vmem:[%s2 + $0x110] sm:$0xf]
    %v483 = vld [vmem:[%s2 + $0x114] sm:$0xff]
    %v484 = vld [vmem:[%s2 + $0x11c] sm:$0xf]
    %v485 = vld [vmem:[%s2 + $0x120] sm:$0xff]
    %v486 = vld [vmem:[%s2 + $0x128] sm:$0xf]
    %v487 = vld [vmem:[%s2 + $0x12c] sm:$0xff]
    %v488 = vld [vmem:[%s2 + $0x134] sm:$0xf]
    %v489 = vld [vmem:[%s2 + $0x138] sm:$0xff]
    %v490 = vld [vmem:[%s2 + $0x140] sm:$0xf]
    %v491 = vld [vmem:[%s2 + $0x144] sm:$0xff]
    %v492 = vld [vmem:[%s2 + $0x14c] sm:$0xf]
    %v493 = vld [vmem:[%s2 + $0x150] sm:$0xff]
    %v494 = vld [vmem:[%s2 + $0x158] sm:$0xf]
    %v495 = vld [vmem:[%s2 + $0x15c] sm:$0xff]
    %v496 = vld [vmem:[%s2 + $0x164] sm:$0xf]
    %v497 = vld [vmem:[%s2 + $0x168] sm:$0xff]
    %v498 = vld [vmem:[%s2 + $0x170] sm:$0xf]
    %v499 = vld [vmem:[%s2 + $0x174] sm:$0xff]
    %v500 = vld [vmem:[%s2 + $0x17c] sm:$0xf]
    %v501 = vld [vmem:[%s2 + $0x180] sm:$0xff]
    %v502 = vld [vmem:[%s2 + $0x188] sm:$0xf]
    %v503 = vld [vmem:[%s2 + $0x18c] sm:$0xff]
    %v504 = vld [vmem:[%s2 + $0x194] sm:$0xf]
    %v505 = vld [vmem:[%s2 + $0x198] sm:$0xff]
    %v506 = vld [vmem:[%s2 + $0x1a0] sm:$0xf]
    %v507 = vld [vmem:[%s2 + $0x1a4] sm:$0xff]
    %v508 = vld [vmem:[%s2 + $0x1ac] sm:$0xf]
    %v509 = vld [vmem:[%s2 + $0x1b0] sm:$0xff]
    %v510 = vld [vmem:[%s2 + $0x1b8] sm:$0xf]
    %v511 = vld [vmem:[%s2 + $0x1bc] sm:$0xff]
    %v512 = vld [vmem:[%s2 + $0x1c4] sm:$0xf]
    %v513 = vld [vmem:[%s2 + $0x1c8] sm:$0xff]
    %v514 = vld [vmem:[%s2 + $0x1d0] sm:$0xf]
    %v515 = vld [vmem:[%s2 + $0x1d4] sm:$0xff]
    %v516 = vld [vmem:[%s2 + $0x1dc] sm:$0xf]
    %v517 = vld [vmem:[%s2 + $0x1e0] sm:$0xff]
    %v518 = vld [vmem:[%s2 + $0x1e8] sm:$0xf]
    %v519 = vld [vmem:[%s2 + $0x1ec] sm:$0xff]
    %v520 = vld [vmem:[%s2 + $0x1f4] sm:$0xf]
    %v521 = vld [vmem:[%s2 + $0x1f8] sm:$0xff]
    %v522 = vld [vmem:[%s2 + $0x200] sm:$0xf]
    %v523 = vld [vmem:[%s2 + $0x204] sm:$0xff]
    %v524 = vld [vmem:[%s2 + $0x20c] sm:$0xf]
    %v525 = vld [vmem:[%s2 + $0x210] sm:$0xff]
    %v526 = vld [vmem:[%s2 + $0x218] sm:$0xf]
    %v527 = vld [vmem:[%s2 + $0x21c] sm:$0xff]
    %v528 = vld [vmem:[%s2 + $0x224] sm:$0xf]
    %v529 = vld [vmem:[%s2 + $0x228] sm:$0xff]
    %v530 = vld [vmem:[%s2 + $0x230] sm:$0xf]
    %v531 = vld [vmem:[%s2 + $0x234] sm:$0xff]
    %v532 = vld [vmem:[%s2 + $0x23c] sm:$0xf]
    %v533 = vld [vmem:[%s2 + $0x240] sm:$0xff]
    %v534 = vld [vmem:[%s2 + $0x248] sm:$0xf]
    %v535 = vld [vmem:[%s2 + $0x24c] sm:$0xff]
    %v536 = vld [vmem:[%s2 + $0x254] sm:$0xf]
    %v537 = vld [vmem:[%s2 + $0x258] sm:$0xff]
    %v538 = vld [vmem:[%s2 + $0x260] sm:$0xf]
    %v539 = vld [vmem:[%s2 + $0x264] sm:$0xff]
    %v540 = vld [vmem:[%s2 + $0x26c] sm:$0xf]
    %v541 = vld [vmem:[%s2 + $0x270] sm:$0xff]
    %v542 = vld [vmem:[%s2 + $0x278] sm:$0xf]
    %v543 = vld [vmem:[%s2 + $0x27c] sm:$0xff]
    %v544 = vld [vmem:[%s2 + $0x284] sm:$0xf]
    %v545 = vld [vmem:[%s2 + $0x288] sm:$0xff]
    %v546 = vld [vmem:[%s2 + $0x290] sm:$0xf]
    %v547 = vld [vmem:[%s2 + $0x294] sm:$0xff]
    %v548 = vld [vmem:[%s2 + $0x29c] sm:$0xf]
    %v549 = vld [vmem:[%s2 + $0x2a0] sm:$0xff]
    %v550 = vld [vmem:[%s2 + $0x2a8] sm:$0xf]
    %v551 = vld [vmem:[%s2 + $0x2ac] sm:$0xff]
    %v552 = vld [vmem:[%s2 + $0x2b4] sm:$0xf]
    %v553 = vld [vmem:[%s2 + $0x2b8] sm:$0xff]
    %v554 = vld [vmem:[%s2 + $0x2c0] sm:$0xf]
    %v555 = vld [vmem:[%s2 + $0x2c4] sm:$0xff]
    %v556 = vld [vmem:[%s2 + $0x2cc] sm:$0xf]
    %v557 = vld [vmem:[%s2 + $0x2d0] sm:$0xff]
    %v558 = vld [vmem:[%s2 + $0x2d8] sm:$0xf]
    %v559 = vld [vmem:[%s2 + $0x2dc] sm:$0xff]
    %v560 = vld [vmem:[%s2 + $0x2e4] sm:$0xf]
    %v561 = vld [vmem:[%s2 + $0x2e8] sm:$0xff]
    %v562 = vld [vmem:[%s2 + $0x2f0] sm:$0xf]
    %v563 = vld [vmem:[%s2 + $0x2f4] sm:$0xff]
    %v564 = vld [vmem:[%s2 + $0x2fc] sm:$0xf]
    %v565 = vld [vmem:[%s2 + $0x300] sm:$0xff]
    %v566 = vld [vmem:[%s2 + $0x308] sm:$0xf]
    %v567 = vld [vmem:[%s2 + $0x30c] sm:$0xff]
    %v568 = vld [vmem:[%s2 + $0x314] sm:$0xf]
    %v569 = vld [vmem:[%s2 + $0x318] sm:$0xff]
    %v570 = vld [vmem:[%s2 + $0x320] sm:$0xf]
    %v571 = vld [vmem:[%s2 + $0x324] sm:$0xff]
    %v572 = vld [vmem:[%s2 + $0x32c] sm:$0xf]
    %v573 = vld [vmem:[%s2 + $0x330] sm:$0xff]
    %v574 = vld [vmem:[%s2 + $0x338] sm:$0xf]
    %v575 = vld [vmem:[%s2 + $0x33c] sm:$0xff]
    %v576 = vld [vmem:[%s2 + $0x344] sm:$0xf]
    %v577 = vld [vmem:[%s2 + $0x348] sm:$0xff]
    %v578 = vld [vmem:[%s2 + $0x350] sm:$0xf]
    %v579 = vld [vmem:[%s2 + $0x354] sm:$0xff]
    %v580 = vld [vmem:[%s2 + $0x35c] sm:$0xf]
    %v581 = vld [vmem:[%s2 + $0x360] sm:$0xff]
    %v582 = vld [vmem:[%s2 + $0x368] sm:$0xf]
    %v583 = vld [vmem:[%s2 + $0x36c] sm:$0xff]
    %v584 = vld [vmem:[%s2 + $0x374] sm:$0xf]
    %v585 = vld [vmem:[%s2 + $0x378] sm:$0xff]
    %v586 = vld [vmem:[%s2 + $0x380] sm:$0xf]
    %v587 = vld [vmem:[%s2 + $0x384] sm:$0xff]
    %v588 = vld [vmem:[%s2 + $0x38c] sm:$0xf]
    %v589 = vld [vmem:[%s2 + $0x390] sm:$0xff]
    %v590 = vld [vmem:[%s2 + $0x398] sm:$0xf]
    %v591 = vld [vmem:[%s2 + $0x39c] sm:$0xff]
    %v592 = vld [vmem:[%s2 + $0x3a4] sm:$0xf]
    %v593 = vld [vmem:[%s2 + $0x3a8] sm:$0xff]
    %v594 = vld [vmem:[%s2 + $0x3b0] sm:$0xf]
    %v595 = vld [vmem:[%s2 + $0x3b4] sm:$0xff]
    %v596 = vld [vmem:[%s2 + $0x3bc] sm:$0xf]
    %v597 = vld [vmem:[%s2 + $0x3c0] sm:$0xff]
    %v598 = vld [vmem:[%s2 + $0x3c8] sm:$0xf]
    %v599 = vld [vmem:[%s2 + $0x3cc] sm:$0xff]
    %v600 = vld [vmem:[%s2 + $0x3d4] sm:$0xf]
    %v601 = vld [vmem:[%s2 + $0x3d8] sm:$0xff]
    %v602 = vld [vmem:[%s2 + $0x3e0] sm:$0xf]
    %v603 = vld [vmem:[%s2 + $0x3e4] sm:$0xff]
    %v604 = vld [vmem:[%s2 + $0x3ec] sm:$0xf]
    %v605 = vld [vmem:[%s2 + $0x3f0] sm:$0xff]
    %v606 = vld [vmem:[%s2 + $0x3f8] sm:$0xf]
    %v607 = vld [vmem:[%s2 + $0x3fc] sm:$0xff]
    %v608 = vld [vmem:[%s2 + $0x404] sm:$0xf]
    %v609 = vld [vmem:[%s2 + $0x408] sm:$0xff]
    %v610 = vld [vmem:[%s2 + $0x410] sm:$0xf]
    %v611 = vld [vmem:[%s2 + $0x414] sm:$0xff]
    %v612 = vld [vmem:[%s2 + $0x41c] sm:$0xf]
    %v613 = vld [vmem:[%s2 + $0x420] sm:$0xff]
    %v614 = vld [vmem:[%s2 + $0x428] sm:$0xf]
    %v615 = vld [vmem:[%s2 + $0x42c] sm:$0xff]
    %v616 = vld [vmem:[%s2 + $0x434] sm:$0xf]
    %v617 = vld [vmem:[%s2 + $0x438] sm:$0xff]
    %v618 = vld [vmem:[%s2 + $0x440] sm:$0xf]
    %v619 = vld [vmem:[%s2 + $0x444] sm:$0xff]
    %v620 = vld [vmem:[%s2 + $0x44c] sm:$0xf]
    %v621 = vld [vmem:[%s2 + $0x450] sm:$0xff]
    %v622 = vld [vmem:[%s2 + $0x458] sm:$0xf]
    %v623 = vld [vmem:[%s2 + $0x45c] sm:$0xff]
    %v624 = vld [vmem:[%s2 + $0x464] sm:$0xf]
    %v625 = vld [vmem:[%s2 + $0x468] sm:$0xff]
    %v626 = vld [vmem:[%s2 + $0x470] sm:$0xf]
    %v627 = vld [vmem:[%s2 + $0x474] sm:$0xff]
    %v628 = vld [vmem:[%s2 + $0x47c] sm:$0xf]
    %v629 = vld [vmem:[%s2 + $0x480] sm:$0xff]
    %v630 = vld [vmem:[%s2 + $0x488] sm:$0xf]
    %v631 = vld [vmem:[%s2 + $0x48c] sm:$0xff]
    %v632 = vld [vmem:[%s2 + $0x494] sm:$0xf]
    %v633 = vld [vmem:[%s2 + $0x498] sm:$0xff]
    %v634 = vld [vmem:[%s2 + $0x4a0] sm:$0xf]
    %v635 = vld [vmem:[%s2 + $0x4a4] sm:$0xff]
    %v636 = vld [vmem:[%s2 + $0x4ac] sm:$0xf]
    %v637 = vld [vmem:[%s2 + $0x4b0] sm:$0xff]
    %v638 = vld [vmem:[%s2 + $0x4b8] sm:$0xf]
    %v639 = vld [vmem:[%s2 + $0x4bc] sm:$0xff]
    %v640 = vld [vmem:[%s2 + $0x4c4] sm:$0xf]
    %v641 = vld [vmem:[%s2 + $0x4c8] sm:$0xff]
    %v642 = vld [vmem:[%s2 + $0x4d0] sm:$0xf]
    %v643 = vld [vmem:[%s2 + $0x4d4] sm:$0xff]
    %v644 = vld [vmem:[%s2 + $0x4dc] sm:$0xf]
    %v645 = vld [vmem:[%s2 + $0x4e0] sm:$0xff]
    %v646 = vld [vmem:[%s2 + $0x4e8] sm:$0xf]
    %v647 = vld [vmem:[%s2 + $0x4ec] sm:$0xff]
    %v648 = vld [vmem:[%s2 + $0x4f4] sm:$0xf]
    %v649 = vld [vmem:[%s2 + $0x4f8] sm:$0xff]
    %v650 = vld [vmem:[%s2 + $0x500] sm:$0xf]
    %v651 = vld [vmem:[%s2 + $0x504] sm:$0xff]
    %v652 = vld [vmem:[%s2 + $0x50c] sm:$0xf]
    %v653 = vld [vmem:[%s2 + $0x510] sm:$0xff]
    %v654 = vld [vmem:[%s2 + $0x518] sm:$0xf]
    %v655 = vld [vmem:[%s2 + $0x51c] sm:$0xff]
    %v656 = vld [vmem:[%s2 + $0x524] sm:$0xf]
    %v657 = vld [vmem:[%s2 + $0x528] sm:$0xff]
    %v658 = vld [vmem:[%s2 + $0x530] sm:$0xf]
    %v659 = vld [vmem:[%s2 + $0x534] sm:$0xff]
    %v660 = vld [vmem:[%s2 + $0x53c] sm:$0xf]
    %v661 = vld [vmem:[%s2 + $0x540] sm:$0xff]
    %v662 = vld [vmem:[%s2 + $0x548] sm:$0xf]
    %v663 = vld [vmem:[%s2 + $0x54c] sm:$0xff]
    %v664 = vld [vmem:[%s2 + $0x554] sm:$0xf]
    %v665 = vld [vmem:[%s2 + $0x558] sm:$0xff]
    %v666 = vld [vmem:[%s2 + $0x560] sm:$0xf]
    %v667 = vld [vmem:[%s2 + $0x564] sm:$0xff]
    %v668 = vld [vmem:[%s2 + $0x56c] sm:$0xf]
    %v669 = vld [vmem:[%s2 + $0x570] sm:$0xff]
    %v670 = vld [vmem:[%s2 + $0x578] sm:$0xf]
    %v671 = vld [vmem:[%s2 + $0x57c] sm:$0xff]
    %v672 = vld [vmem:[%s2 + $0x584] sm:$0xf]
    %v673 = vld [vmem:[%s2 + $0x588] sm:$0xff]
    %v674 = vld [vmem:[%s2 + $0x590] sm:$0xf]
    %v675 = vld [vmem:[%s2 + $0x594] sm:$0xff]
    %v676 = vld [vmem:[%s2 + $0x59c] sm:$0xf]
    %v677 = vld [vmem:[%s2 + $0x5a0] sm:$0xff]
    %v678 = vld [vmem:[%s2 + $0x5a8] sm:$0xf]
    %v679 = vld [vmem:[%s2 + $0x5ac] sm:$0xff]
    %v680 = vld [vmem:[%s2 + $0x5b4] sm:$0xf]
    %v681 = vld [vmem:[%s2 + $0x5b8] sm:$0xff]
    %v682 = vld [vmem:[%s2 + $0x5c0] sm:$0xf]
    %v683 = vld [vmem:[%s2 + $0x5c4] sm:$0xff]
    %v684 = vld [vmem:[%s2 + $0x5cc] sm:$0xf]
    %v685 = vld [vmem:[%s2 + $0x5d0] sm:$0xff]
    %v686 = vld [vmem:[%s2 + $0x5d8] sm:$0xf]
    %v687 = vld [vmem:[%s2 + $0x5dc] sm:$0xff]
    %v688 = vld [vmem:[%s2 + $0x5e4] sm:$0xf]
    %v689 = vld [vmem:[%s2 + $0x5e8] sm:$0xff]
    %v690 = vld [vmem:[%s2 + $0x5f0] sm:$0xf]
    %v691 = vld [vmem:[%s2 + $0x5f4] sm:$0xff]
    %v692 = vld [vmem:[%s2 + $0x5fc] sm:$0xf]
    %v693 = vld [vmem:[%s2 + $0x600] sm:$0xff]
    %v694 = vld [vmem:[%s2 + $0x608] sm:$0xf]
    %v695 = vld [vmem:[%s2 + $0x60c] sm:$0xff]
    %v696 = vld [vmem:[%s2 + $0x614] sm:$0xf]
    %v697 = vld [vmem:[%s2 + $0x618] sm:$0xff]
    %v698 = vld [vmem:[%s2 + $0x620] sm:$0xf]
    %v699 = vld [vmem:[%s2 + $0x624] sm:$0xff]
    %v700 = vld [vmem:[%s2 + $0x62c] sm:$0xf]
    %v701 = vld [vmem:[%s2 + $0x630] sm:$0xff]
    %v702 = vld [vmem:[%s2 + $0x638] sm:$0xf]
    %v703 = vld [vmem:[%s2 + $0x63c] sm:$0xff]
    %v704 = vld [vmem:[%s2 + $0x644] sm:$0xf]
    %v705 = vld [vmem:[%s2 + $0x648] sm:$0xff]
    %v706 = vld [vmem:[%s2 + $0x650] sm:$0xf]
    %v707 = vld [vmem:[%s2 + $0x654] sm:$0xff]
    %v708 = vld [vmem:[%s2 + $0x65c] sm:$0xf]
    %v709 = vld [vmem:[%s2 + $0x660] sm:$0xff]
    %v710 = vld [vmem:[%s2 + $0x668] sm:$0xf]
    %v711 = vld [vmem:[%s2 + $0x66c] sm:$0xff]
    %v712 = vld [vmem:[%s2 + $0x674] sm:$0xf]
    %v713 = vld [vmem:[%s2 + $0x678] sm:$0xff]
    %v714 = vld [vmem:[%s2 + $0x680] sm:$0xf]
    %v715 = vld [vmem:[%s2 + $0x684] sm:$0xff]
    %v716 = vld [vmem:[%s2 + $0x68c] sm:$0xf]
    %v717 = vld [vmem:[%s2 + $0x690] sm:$0xff]
    %v718 = vld [vmem:[%s2 + $0x698] sm:$0xf]
    %v719 = vld [vmem:[%s2 + $0x69c] sm:$0xff]
    %v720 = vld [vmem:[%s2 + $0x6a4] sm:$0xf]
    %v721 = vld [vmem:[%s2 + $0x6a8] sm:$0xff]
    %v722 = vld [vmem:[%s2 + $0x6b0] sm:$0xf]
    %v723 = vld [vmem:[%s2 + $0x6b4] sm:$0xff]
    %v724 = vld [vmem:[%s2 + $0x6bc] sm:$0xf]
    %v725 = vld [vmem:[%s2 + $0x6c0] sm:$0xff]
    %v726 = vld [vmem:[%s2 + $0x6c8] sm:$0xf]
    %v727 = vld [vmem:[%s2 + $0x6cc] sm:$0xff]
    %v728 = vld [vmem:[%s2 + $0x6d4] sm:$0xf]
    %v729 = vld [vmem:[%s2 + $0x6d8] sm:$0xff]
    %v730 = vld [vmem:[%s2 + $0x6e0] sm:$0xf]
    %v731 = vld [vmem:[%s2 + $0x6e4] sm:$0xff]
    %v732 = vld [vmem:[%s2 + $0x6ec] sm:$0xf]
    %v733 = vld [vmem:[%s2 + $0x6f0] sm:$0xff]
    %v734 = vld [vmem:[%s2 + $0x6f8] sm:$0xf]
    %v735 = vld [vmem:[%s2 + $0x6fc] sm:$0xff]
    %v736 = vld [vmem:[%s2 + $0x704] sm:$0xf]
    %v737 = vld [vmem:[%s2 + $0x708] sm:$0xff]
    %v738 = vld [vmem:[%s2 + $0x710] sm:$0xf]
    %v739 = vld [vmem:[%s2 + $0x714] sm:$0xff]
    %v740 = vld [vmem:[%s2 + $0x71c] sm:$0xf]
    %v741 = vld [vmem:[%s2 + $0x720] sm:$0xff]
    %v742 = vld [vmem:[%s2 + $0x728] sm:$0xf]
    %v743 = vld [vmem:[%s2 + $0x72c] sm:$0xff]
    %v744 = vld [vmem:[%s2 + $0x734] sm:$0xf]
    %v745 = vld [vmem:[%s2 + $0x738] sm:$0xff]
    %v746 = vld [vmem:[%s2 + $0x740] sm:$0xf]
    %v747 = vld [vmem:[%s2 + $0x744] sm:$0xff]
    %v748 = vld [vmem:[%s2 + $0x74c] sm:$0xf]
    %v749 = vld [vmem:[%s2 + $0x750] sm:$0xff]
    %v750 = vld [vmem:[%s2 + $0x758] sm:$0xf]
    %v751 = vld [vmem:[%s2 + $0x75c] sm:$0xff]
    %v752 = vld [vmem:[%s2 + $0x764] sm:$0xf]
    %v753 = vld [vmem:[%s2 + $0x768] sm:$0xff]
    %v754 = vld [vmem:[%s2 + $0x770] sm:$0xf]
    %v755 = vld [vmem:[%s2 + $0x774] sm:$0xff]
    %v756 = vld [vmem:[%s2 + $0x77c] sm:$0xf]
    %v757 = vld [vmem:[%s2 + $0x780] sm:$0xff]
    %v758 = vld [vmem:[%s2 + $0x788] sm:$0xf]
    %v759 = vld [vmem:[%s2 + $0x78c] sm:$0xff]
    %v760 = vld [vmem:[%s2 + $0x794] sm:$0xf]
    %v761 = vld [vmem:[%s2 + $0x798] sm:$0xff]
    %v762 = vld [vmem:[%s2 + $0x7a0] sm:$0xf]
    %v763 = vld [vmem:[%s2 + $0x7a4] sm:$0xff]
    %v764 = vld [vmem:[%s2 + $0x7ac] sm:$0xf]
    %v765 = vld [vmem:[%s2 + $0x7b0] sm:$0xff]
    %v766 = vld [vmem:[%s2 + $0x7b8] sm:$0xf]
    %v767 = vld [vmem:[%s2 + $0x7bc] sm:$0xff]
    %v768 = vld [vmem:[%s2 + $0x7c4] sm:$0xf]
    %v769 = vld [vmem:[%s2 + $0x7c8] sm:$0xff]
    %v770 = vld [vmem:[%s2 + $0x7d0] sm:$0xf]
    %v771 = vld [vmem:[%s2 + $0x7d4] sm:$0xff]
    %v772 = vld [vmem:[%s2 + $0x7dc] sm:$0xf]
    %v773 = vld [vmem:[%s2 + $0x7e0] sm:$0xff]
    %v774 = vld [vmem:[%s2 + $0x7e8] sm:$0xf]
    %v775 = vld [vmem:[%s2 + $0x7ec] sm:$0xff]
    %v776 = vld [vmem:[%s2 + $0x7f4] sm:$0xf]
    %v777 = vld [vmem:[%s2 + $0x7f8] sm:$0xff]
    %v778 = vld [vmem:[%s2 + $0x800] sm:$0xf]
    %v779 = vld [vmem:[%s2 + $0x804] sm:$0xff]
    %v780 = vld [vmem:[%s2 + $0x80c] sm:$0xf]
    %v781 = vld [vmem:[%s2 + $0x810] sm:$0xff]
    %v782 = vld [vmem:[%s2 + $0x818] sm:$0xf]
    %v783 = vld [vmem:[%s2 + $0x81c] sm:$0xff]
    %v784 = vld [vmem:[%s2 + $0x824] sm:$0xf]
    %v785 = vld [vmem:[%s2 + $0x828] sm:$0xff]
    %v786 = vld [vmem:[%s2 + $0x830] sm:$0xf]
    %v787 = vld [vmem:[%s2 + $0x834] sm:$0xff]
    %v788 = vld [vmem:[%s2 + $0x83c] sm:$0xf]
    %v789 = vld [vmem:[%s2 + $0x840] sm:$0xff]
    %v790 = vld [vmem:[%s2 + $0x848] sm:$0xf]
    %v791 = vld [vmem:[%s2 + $0x84c] sm:$0xff]
    %v792 = vld [vmem:[%s2 + $0x854] sm:$0xf]
    %v793 = vld [vmem:[%s2 + $0x858] sm:$0xff]
    %v794 = vld [vmem:[%s2 + $0x860] sm:$0xf]
    %v795 = vld [vmem:[%s2 + $0x864] sm:$0xff]
    %v796 = vld [vmem:[%s2 + $0x86c] sm:$0xf]
    %v797 = vld [vmem:[%s2 + $0x870] sm:$0xff]
    %v798 = vld [vmem:[%s2 + $0x878] sm:$0xf]
    %v799 = vld [vmem:[%s2 + $0x87c] sm:$0xff]
    %v800 = vld [vmem:[%s2 + $0x884] sm:$0xf]
    %v801 = vld [vmem:[%s2 + $0x888] sm:$0xff]
    %v802 = vld [vmem:[%s2 + $0x890] sm:$0xf]
    %v803 = vld [vmem:[%s2 + $0x894] sm:$0xff]
    %v804 = vld [vmem:[%s2 + $0x89c] sm:$0xf]
    %v805 = vld [vmem:[%s2 + $0x8a0] sm:$0xff]
    %v806 = vld [vmem:[%s2 + $0x8a8] sm:$0xf]
    %v807 = vld [vmem:[%s2 + $0x8ac] sm:$0xff]
    %v808 = vld [vmem:[%s2 + $0x8b4] sm:$0xf]
    %v809 = vld [vmem:[%s2 + $0x8b8] sm:$0xff]
    %v810 = vld [vmem:[%s2 + $0x8c0] sm:$0xf]
    %v811 = vld [vmem:[%s2 + $0x8c4] sm:$0xff]
    %v812 = vld [vmem:[%s2 + $0x8cc] sm:$0xf]
    %v813 = vld [vmem:[%s2 + $0x8d0] sm:$0xff]
    %v814 = vld [vmem:[%s2 + $0x8d8] sm:$0xf]
    %v815 = vld [vmem:[%s2 + $0x8dc] sm:$0xff]
    %v816 = vld [vmem:[%s2 + $0x8e4] sm:$0xf]
    %v817 = vld [vmem:[%s2 + $0x8e8] sm:$0xff]
    %v818 = vld [vmem:[%s2 + $0x8f0] sm:$0xf]
    %v819 = vld [vmem:[%s2 + $0x8f4] sm:$0xff]
    %v820 = vld [vmem:[%s2 + $0x8fc] sm:$0xf]
    %v821 = vld [vmem:[%s2 + $0x900] sm:$0xff]
    %v822 = vld [vmem:[%s2 + $0x908] sm:$0xf]
    %v823 = vld [vmem:[%s2 + $0x90c] sm:$0xff]
    %v824 = vld [vmem:[%s2 + $0x914] sm:$0xf]
    %v825 = vld [vmem:[%s2 + $0x918] sm:$0xff]
    %v826 = vld [vmem:[%s2 + $0x920] sm:$0xf]
    %v827 = vld [vmem:[%s2 + $0x924] sm:$0xff]
    %v828 = vld [vmem:[%s2 + $0x92c] sm:$0xf]
    %v829 = vld [vmem:[%s2 + $0x930] sm:$0xff]
    %v830 = vld [vmem:[%s2 + $0x938] sm:$0xf]
    %v831 = vld [vmem:[%s2 + $0x93c] sm:$0xff]
    %v832 = vld [vmem:[%s2 + $0x944] sm:$0xf]
    %v833 = vld [vmem:[%s2 + $0x948] sm:$0xff]
    %v834 = vld [vmem:[%s2 + $0x950] sm:$0xf]
    %v835 = vld [vmem:[%s2 + $0x954] sm:$0xff]
    %v836 = vld [vmem:[%s2 + $0x95c] sm:$0xf]
    %v837 = vld [vmem:[%s2 + $0x960] sm:$0xff]
    %v838 = vld [vmem:[%s2 + $0x968] sm:$0xf]
    %v839 = vld [vmem:[%s2 + $0x96c] sm:$0xff]
    %v840 = vld [vmem:[%s2 + $0x974] sm:$0xf]
    %v841 = vld [vmem:[%s2 + $0x978] sm:$0xff]
    %v842 = vld [vmem:[%s2 + $0x980] sm:$0xf]
    %v843 = vld [vmem:[%s2 + $0x984] sm:$0xff]
    %v844 = vld [vmem:[%s2 + $0x98c] sm:$0xf]
    %v845 = vld [vmem:[%s2 + $0x990] sm:$0xff]
    %v846 = vld [vmem:[%s2 + $0x998] sm:$0xf]
    %v847 = vld [vmem:[%s2 + $0x99c] sm:$0xff]
    %v848 = vld [vmem:[%s2 + $0x9a4] sm:$0xf]
    %v849 = vld [vmem:[%s2 + $0x9a8] sm:$0xff]
    %v850 = vld [vmem:[%s2 + $0x9b0] sm:$0xf]
    %v851 = vld [vmem:[%s2 + $0x9b4] sm:$0xff]
    %v852 = vld [vmem:[%s2 + $0x9bc] sm:$0xf]
    %v853 = vld [vmem:[%s2 + $0x9c0] sm:$0xff]
    %v854 = vld [vmem:[%s2 + $0x9c8] sm:$0xf]
    %v855 = vld [vmem:[%s2 + $0x9cc] sm:$0xff]
    %v856 = vld [vmem:[%s2 + $0x9d4] sm:$0xf]
    %v857 = vld [vmem:[%s2 + $0x9d8] sm:$0xff]
    %v858 = vld [vmem:[%s2 + $0x9e0] sm:$0xf]
    %v859 = vld [vmem:[%s2 + $0x9e4] sm:$0xff]
    %v860 = vld [vmem:[%s2 + $0x9ec] sm:$0xf]
    %v861 = vld [vmem:[%s2 + $0x9f0] sm:$0xff]
    %v862 = vld [vmem:[%s2 + $0x9f8] sm:$0xf]
    %v863 = vld [vmem:[%s2 + $0x9fc] sm:$0xff]
    %v864 = vld [vmem:[%s2 + $0xa04] sm:$0xf]
    %v865 = vld [vmem:[%s2 + $0xa08] sm:$0xff]
    %v866 = vld [vmem:[%s2 + $0xa10] sm:$0xf]
    %v867 = vld [vmem:[%s2 + $0xa14] sm:$0xff]
    %v868 = vld [vmem:[%s2 + $0xa1c] sm:$0xf]
    %v869 = vld [vmem:[%s2 + $0xa20] sm:$0xff]
    %v870 = vld [vmem:[%s2 + $0xa28] sm:$0xf]
    %v871 = vld [vmem:[%s2 + $0xa2c] sm:$0xff]
    %v872 = vld [vmem:[%s2 + $0xa34] sm:$0xf]
    %v873 = vld [vmem:[%s2 + $0xa38] sm:$0xff]
    %v874 = vld [vmem:[%s2 + $0xa40] sm:$0xf]
    %v875 = vld [vmem:[%s2 + $0xa44] sm:$0xff]
    %v876 = vld [vmem:[%s2 + $0xa4c] sm:$0xf]
    %v877 = vld [vmem:[%s2 + $0xa50] sm:$0xff]
    %v878 = vld [vmem:[%s2 + $0xa58] sm:$0xf]
    %v879 = vld [vmem:[%s2 + $0xa5c] sm:$0xff]
    %v880 = vld [vmem:[%s2 + $0xa64] sm:$0xf]
    %v881 = vld [vmem:[%s2 + $0xa68] sm:$0xff]
    %v882 = vld [vmem:[%s2 + $0xa70] sm:$0xf]
    %v883 = vld [vmem:[%s2 + $0xa74] sm:$0xff]
    %v884 = vld [vmem:[%s2 + $0xa7c] sm:$0xf]
    %v885 = vld [vmem:[%s2 + $0xa80] sm:$0xff]
    %v886 = vld [vmem:[%s2 + $0xa88] sm:$0xf]
    %v887 = vld [vmem:[%s2 + $0xa8c] sm:$0xff]
    %v888 = vld [vmem:[%s2 + $0xa94] sm:$0xf]
    %v889 = vld [vmem:[%s2 + $0xa98] sm:$0xff]
    %v890 = vld [vmem:[%s2 + $0xaa0] sm:$0xf]
    %v891 = vld [vmem:[%s2 + $0xaa4] sm:$0xff]
    %v892 = vld [vmem:[%s2 + $0xaac] sm:$0xf]
    %v893 = vld [vmem:[%s2 + $0xab0] sm:$0xff]
    %v894 = vld [vmem:[%s2 + $0xab8] sm:$0xf]
    %v895 = vld [vmem:[%s2 + $0xabc] sm:$0xff]
    %v896 = vld [vmem:[%s2 + $0xac4] sm:$0xf]
    %v897 = vld [vmem:[%s2 + $0xac8] sm:$0xff]
    %v898 = vld [vmem:[%s2 + $0xad0] sm:$0xf]
    %v899 = vld [vmem:[%s2 + $0xad4] sm:$0xff]
    %v900 = vld [vmem:[%s2 + $0xadc] sm:$0xf]
    %v901 = vld [vmem:[%s2 + $0xae0] sm:$0xff]
    %v902 = vld [vmem:[%s2 + $0xae8] sm:$0xf]
    %v903 = vld [vmem:[%s2 + $0xaec] sm:$0xff]
    %v904 = vld [vmem:[%s2 + $0xaf4] sm:$0xf]
    %v905 = vld [vmem:[%s2 + $0xaf8] sm:$0xff]
    %v906 = vld [vmem:[%s2 + $0xb00] sm:$0xf]
    %v907 = vld [vmem:[%s2 + $0xb04] sm:$0xff]
    %v908 = vld [vmem:[%s2 + $0xb0c] sm:$0xf]
    %v909 = vld [vmem:[%s2 + $0xb10] sm:$0xff]
    %v910 = vld [vmem:[%s2 + $0xb18] sm:$0xf]
    %v911 = vld [vmem:[%s2 + $0xb1c] sm:$0xff]
    %v912 = vld [vmem:[%s2 + $0xb24] sm:$0xf]
    %v913 = vld [vmem:[%s2 + $0xb28] sm:$0xff]
    %v914 = vld [vmem:[%s2 + $0xb30] sm:$0xf]
    %v915 = vld [vmem:[%s2 + $0xb34] sm:$0xff]
    %v916 = vld [vmem:[%s2 + $0xb3c] sm:$0xf]
    %v917 = vld [vmem:[%s2 + $0xb40] sm:$0xff]
    %v918 = vld [vmem:[%s2 + $0xb48] sm:$0xf]
    %v919 = vld [vmem:[%s2 + $0xb4c] sm:$0xff]
    %v920 = vld [vmem:[%s2 + $0xb54] sm:$0xf]
    %v921 = vld [vmem:[%s2 + $0xb58] sm:$0xff]
    %v922 = vld [vmem:[%s2 + $0xb60] sm:$0xf]
    %v923 = vld [vmem:[%s2 + $0xb64] sm:$0xff]
    %v924 = vld [vmem:[%s2 + $0xb6c] sm:$0xf]
    %v925 = vld [vmem:[%s2 + $0xb70] sm:$0xff]
    %v926 = vld [vmem:[%s2 + $0xb78] sm:$0xf]
    %v927 = vld [vmem:[%s2 + $0xb7c] sm:$0xff]
    %v928 = vld [vmem:[%s2 + $0xb84] sm:$0xf]
    %v929 = vld [vmem:[%s2 + $0xb88] sm:$0xff]
    %v930 = vld [vmem:[%s2 + $0xb90] sm:$0xf]
    %v931 = vld [vmem:[%s2 + $0xb94] sm:$0xff]
    %v932 = vld [vmem:[%s2 + $0xb9c] sm:$0xf]
    %v933 = vld [vmem:[%s2 + $0xba0] sm:$0xff]
    %v934 = vld [vmem:[%s2 + $0xba8] sm:$0xf]
    %v935 = vld [vmem:[%s2 + $0xbac] sm:$0xff]
    %v936 = vld [vmem:[%s2 + $0xbb4] sm:$0xf]
    %v937 = vld [vmem:[%s2 + $0xbb8] sm:$0xff]
    %v938 = vld [vmem:[%s2 + $0xbc0] sm:$0xf]
    %v939 = vld [vmem:[%s2 + $0xbc4] sm:$0xff]
    %v940 = vld [vmem:[%s2 + $0xbcc] sm:$0xf]
    %v941 = vld [vmem:[%s2 + $0xbd0] sm:$0xff]
    %v942 = vld [vmem:[%s2 + $0xbd8] sm:$0xf]
    %v943 = vld [vmem:[%s2 + $0xbdc] sm:$0xff]
    %v944 = vld [vmem:[%s2 + $0xbe4] sm:$0xf]
    %v945 = vld [vmem:[%s2 + $0xbe8] sm:$0xff]
    %v946 = vld [vmem:[%s2 + $0xbf0] sm:$0xf]
    %v947 = vld [vmem:[%s2 + $0xbf4] sm:$0xff]
    %v948 = vld [vmem:[%s2 + $0xbfc] sm:$0xf]
    %v949 = vld [vmem:[%s2 + $0xc00] sm:$0xff]
    %v950 = vld [vmem:[%s2 + $0xc08] sm:$0xf]
    %v951 = vld [vmem:[%s2 + $0xc0c] sm:$0xff]
    %v952 = vld [vmem:[%s2 + $0xc14] sm:$0xf]
    %v1469 = vunpack.c.l.b16 %v437
    %v1470 = vunpack.c.h.b16 %v437
    %v1471 = vunpack.c.l.b16 %v438
    %v1472 = vunpack.c.l.b16 %v439
    %v1473 = vunpack.c.h.b16 %v439
    %v1474 = vunpack.c.l.b16 %v440
    %v1475 = vunpack.c.l.b16 %v441
    %v1476 = vunpack.c.h.b16 %v441
    %v1477 = vunpack.c.l.b16 %v442
    %v1478 = vunpack.c.l.b16 %v443
    %v1479 = vunpack.c.h.b16 %v443
    %v1480 = vunpack.c.l.b16 %v444
    %v1481 = vunpack.c.l.b16 %v445
    %v1482 = vunpack.c.h.b16 %v445
    %v1483 = vunpack.c.l.b16 %v446
    %v1484 = vunpack.c.l.b16 %v447
    %v1485 = vunpack.c.h.b16 %v447
    %v1486 = vunpack.c.l.b16 %v448
    %v1487 = vunpack.c.l.b16 %v449
    %v1488 = vunpack.c.h.b16 %v449
    %v1489 = vunpack.c.l.b16 %v450
    %v1490 = vunpack.c.l.b16 %v451
    %v1491 = vunpack.c.h.b16 %v451
    %v1492 = vunpack.c.l.b16 %v452
    %v1493 = vunpack.c.l.b16 %v453
    %v1494 = vunpack.c.h.b16 %v453
    %v1495 = vunpack.c.l.b16 %v454
    %v1496 = vunpack.c.l.b16 %v455
    %v1497 = vunpack.c.h.b16 %v455
    %v1498 = vunpack.c.l.b16 %v456
    %v1499 = vunpack.c.l.b16 %v457
    %v1500 = vunpack.c.h.b16 %v457
    %v1501 = vunpack.c.l.b16 %v458
    %v1502 = vunpack.c.l.b16 %v459
    %v1503 = vunpack.c.h.b16 %v459
    %v1504 = vunpack.c.l.b16 %v460
    %v1505 = vunpack.c.l.b16 %v461
    %v1506 = vunpack.c.h.b16 %v461
    %v1507 = vunpack.c.l.b16 %v462
    %v1508 = vunpack.c.l.b16 %v463
    %v1509 = vunpack.c.h.b16 %v463
    %v1510 = vunpack.c.l.b16 %v464
    %v1511 = vunpack.c.l.b16 %v465
    %v1512 = vunpack.c.h.b16 %v465
    %v1513 = vunpack.c.l.b16 %v466
    %v1514 = vunpack.c.l.b16 %v467
    %v1515 = vunpack.c.h.b16 %v467
    %v1516 = vunpack.c.l.b16 %v468
    %v1517 = vunpack.c.l.b16 %v469
    %v1518 = vunpack.c.h.b16 %v469
    %v1519 = vunpack.c.l.b16 %v470
    %v1520 = vunpack.c.l.b16 %v471
    %v1521 = vunpack.c.h.b16 %v471
    %v1522 = vunpack.c.l.b16 %v472
    %v1523 = vunpack.c.l.b16 %v473
    %v1524 = vunpack.c.h.b16 %v473
    %v1525 = vunpack.c.l.b16 %v474
    %v1526 = vunpack.c.l.b16 %v475
    %v1527 = vunpack.c.h.b16 %v475
    %v1528 = vunpack.c.l.b16 %v476
    %v1529 = vunpack.c.l.b16 %v477
    %v1530 = vunpack.c.h.b16 %v477
    %v1531 = vunpack.c.l.b16 %v478
    %v1532 = vunpack.c.l.b16 %v479
    %v1533 = vunpack.c.h.b16 %v479
    %v1534 = vunpack.c.l.b16 %v480
    %v1535 = vunpack.c.l.b16 %v481
    %v1536 = vunpack.c.h.b16 %v481
    %v1537 = vunpack.c.l.b16 %v482
    %v1538 = vunpack.c.l.b16 %v483
    %v1539 = vunpack.c.h.b16 %v483
    %v1540 = vunpack.c.l.b16 %v484
    %v1541 = vunpack.c.l.b16 %v485
    %v1542 = vunpack.c.h.b16 %v485
    %v1543 = vunpack.c.l.b16 %v486
    %v1544 = vunpack.c.l.b16 %v487
    %v1545 = vunpack.c.h.b16 %v487
    %v1546 = vunpack.c.l.b16 %v488
    %v1547 = vunpack.c.l.b16 %v489
    %v1548 = vunpack.c.h.b16 %v489
    %v1549 = vunpack.c.l.b16 %v490
    %v1550 = vunpack.c.l.b16 %v491
    %v1551 = vunpack.c.h.b16 %v491
    %v1552 = vunpack.c.l.b16 %v492
    %v1553 = vunpack.c.l.b16 %v493
    %v1554 = vunpack.c.h.b16 %v493
    %v1555 = vunpack.c.l.b16 %v494
    %v1556 = vunpack.c.l.b16 %v495
    %v1557 = vunpack.c.h.b16 %v495
    %v1558 = vunpack.c.l.b16 %v496
    %v1559 = vunpack.c.l.b16 %v497
    %v1560 = vunpack.c.h.b16 %v497
    %v1561 = vunpack.c.l.b16 %v498
    %v1562 = vunpack.c.l.b16 %v499
    %v1563 = vunpack.c.h.b16 %v499
    %v1564 = vunpack.c.l.b16 %v500
    %v1565 = vunpack.c.l.b16 %v501
    %v1566 = vunpack.c.h.b16 %v501
    %v1567 = vunpack.c.l.b16 %v502
    %v1568 = vunpack.c.l.b16 %v503
    %v1569 = vunpack.c.h.b16 %v503
    %v1570 = vunpack.c.l.b16 %v504
    %v1571 = vunpack.c.l.b16 %v505
    %v1572 = vunpack.c.h.b16 %v505
    %v1573 = vunpack.c.l.b16 %v506
    %v1574 = vunpack.c.l.b16 %v507
    %v1575 = vunpack.c.h.b16 %v507
    %v1576 = vunpack.c.l.b16 %v508
    %v1577 = vunpack.c.l.b16 %v509
    %v1578 = vunpack.c.h.b16 %v509
    %v1579 = vunpack.c.l.b16 %v510
    %v1580 = vunpack.c.l.b16 %v511
    %v1581 = vunpack.c.h.b16 %v511
    %v1582 = vunpack.c.l.b16 %v512
    %v1583 = vunpack.c.l.b16 %v513
    %v1584 = vunpack.c.h.b16 %v513
    %v1585 = vunpack.c.l.b16 %v514
    %v1586 = vunpack.c.l.b16 %v515
    %v1587 = vunpack.c.h.b16 %v515
    %v1588 = vunpack.c.l.b16 %v516
    %v1589 = vunpack.c.l.b16 %v517
    %v1590 = vunpack.c.h.b16 %v517
    %v1591 = vunpack.c.l.b16 %v518
    %v1592 = vunpack.c.l.b16 %v519
    %v1593 = vunpack.c.h.b16 %v519
    %v1594 = vunpack.c.l.b16 %v520
    %v1595 = vunpack.c.l.b16 %v521
    %v1596 = vunpack.c.h.b16 %v521
    %v1597 = vunpack.c.l.b16 %v522
    %v1598 = vunpack.c.l.b16 %v523
    %v1599 = vunpack.c.h.b16 %v523
    %v1600 = vunpack.c.l.b16 %v524
    %v1601 = vunpack.c.l.b16 %v525
    %v1602 = vunpack.c.h.b16 %v525
    %v1603 = vunpack.c.l.b16 %v526
    %v1604 = vunpack.c.l.b16 %v527
    %v1605 = vunpack.c.h.b16 %v527
    %v1606 = vunpack.c.l.b16 %v528
    %v1607 = vunpack.c.l.b16 %v529
    %v1608 = vunpack.c.h.b16 %v529
    %v1609 = vunpack.c.l.b16 %v530
    %v1610 = vunpack.c.l.b16 %v531
    %v1611 = vunpack.c.h.b16 %v531
    %v1612 = vunpack.c.l.b16 %v532
    %v1613 = vunpack.c.l.b16 %v533
    %v1614 = vunpack.c.h.b16 %v533
    %v1615 = vunpack.c.l.b16 %v534
    %v1616 = vunpack.c.l.b16 %v535
    %v1617 = vunpack.c.h.b16 %v535
    %v1618 = vunpack.c.l.b16 %v536
    %v1619 = vunpack.c.l.b16 %v537
    %v1620 = vunpack.c.h.b16 %v537
    %v1621 = vunpack.c.l.b16 %v538
    %v1622 = vunpack.c.l.b16 %v539
    %v1623 = vunpack.c.h.b16 %v539
    %v1624 = vunpack.c.l.b16 %v540
    %v1625 = vunpack.c.l.b16 %v541
    %v1626 = vunpack.c.h.b16 %v541
    %v1627 = vunpack.c.l.b16 %v542
    %v1628 = vunpack.c.l.b16 %v543
    %v1629 = vunpack.c.h.b16 %v543
    %v1630 = vunpack.c.l.b16 %v544
    %v1631 = vunpack.c.l.b16 %v545
    %v1632 = vunpack.c.h.b16 %v545
    %v1633 = vunpack.c.l.b16 %v546
    %v1634 = vunpack.c.l.b16 %v547
    %v1635 = vunpack.c.h.b16 %v547
    %v1636 = vunpack.c.l.b16 %v548
    %v1637 = vunpack.c.l.b16 %v549
    %v1638 = vunpack.c.h.b16 %v549
    %v1639 = vunpack.c.l.b16 %v550
    %v1640 = vunpack.c.l.b16 %v551
    %v1641 = vunpack.c.h.b16 %v551
    %v1642 = vunpack.c.l.b16 %v552
    %v1643 = vunpack.c.l.b16 %v553
    %v1644 = vunpack.c.h.b16 %v553
    %v1645 = vunpack.c.l.b16 %v554
    %v1646 = vunpack.c.l.b16 %v555
    %v1647 = vunpack.c.h.b16 %v555
    %v1648 = vunpack.c.l.b16 %v556
    %v1649 = vunpack.c.l.b16 %v557
    %v1650 = vunpack.c.h.b16 %v557
    %v1651 = vunpack.c.l.b16 %v558
    %v1652 = vunpack.c.l.b16 %v559
    %v1653 = vunpack.c.h.b16 %v559
    %v1654 = vunpack.c.l.b16 %v560
    %v1655 = vunpack.c.l.b16 %v561
    %v1656 = vunpack.c.h.b16 %v561
    %v1657 = vunpack.c.l.b16 %v562
    %v1658 = vunpack.c.l.b16 %v563
    %v1659 = vunpack.c.h.b16 %v563
    %v1660 = vunpack.c.l.b16 %v564
    %v1661 = vunpack.c.l.b16 %v565
    %v1662 = vunpack.c.h.b16 %v565
    %v1663 = vunpack.c.l.b16 %v566
    %v1664 = vunpack.c.l.b16 %v567
    %v1665 = vunpack.c.h.b16 %v567
    %v1666 = vunpack.c.l.b16 %v568
    %v1667 = vunpack.c.l.b16 %v569
    %v1668 = vunpack.c.h.b16 %v569
    %v1669 = vunpack.c.l.b16 %v570
    %v1670 = vunpack.c.l.b16 %v571
    %v1671 = vunpack.c.h.b16 %v571
    %v1672 = vunpack.c.l.b16 %v572
    %v1673 = vunpack.c.l.b16 %v573
    %v1674 = vunpack.c.h.b16 %v573
    %v1675 = vunpack.c.l.b16 %v574
    %v1676 = vunpack.c.l.b16 %v575
    %v1677 = vunpack.c.h.b16 %v575
    %v1678 = vunpack.c.l.b16 %v576
    %v1679 = vunpack.c.l.b16 %v577
    %v1680 = vunpack.c.h.b16 %v577
    %v1681 = vunpack.c.l.b16 %v578
    %v1682 = vunpack.c.l.b16 %v579
    %v1683 = vunpack.c.h.b16 %v579
    %v1684 = vunpack.c.l.b16 %v580
    %v1685 = vunpack.c.l.b16 %v581
    %v1686 = vunpack.c.h.b16 %v581
    %v1687 = vunpack.c.l.b16 %v582
    %v1688 = vunpack.c.l.b16 %v583
    %v1689 = vunpack.c.h.b16 %v583
    %v1690 = vunpack.c.l.b16 %v584
    %v1691 = vunpack.c.l.b16 %v585
    %v1692 = vunpack.c.h.b16 %v585
    %v1693 = vunpack.c.l.b16 %v586
    %v1694 = vunpack.c.l.b16 %v587
    %v1695 = vunpack.c.h.b16 %v587
    %v1696 = vunpack.c.l.b16 %v588
    %v1697 = vunpack.c.l.b16 %v589
    %v1698 = vunpack.c.h.b16 %v589
    %v1699 = vunpack.c.l.b16 %v590
    %v1700 = vunpack.c.l.b16 %v591
    %v1701 = vunpack.c.h.b16 %v591
    %v1702 = vunpack.c.l.b16 %v592
    %v1703 = vunpack.c.l.b16 %v593
    %v1704 = vunpack.c.h.b16 %v593
    %v1705 = vunpack.c.l.b16 %v594
    %v1706 = vunpack.c.l.b16 %v595
    %v1707 = vunpack.c.h.b16 %v595
    %v1708 = vunpack.c.l.b16 %v596
    %v1709 = vunpack.c.l.b16 %v597
    %v1710 = vunpack.c.h.b16 %v597
    %v1711 = vunpack.c.l.b16 %v598
    %v1712 = vunpack.c.l.b16 %v599
    %v1713 = vunpack.c.h.b16 %v599
    %v1714 = vunpack.c.l.b16 %v600
    %v1715 = vunpack.c.l.b16 %v601
    %v1716 = vunpack.c.h.b16 %v601
    %v1717 = vunpack.c.l.b16 %v602
    %v1718 = vunpack.c.l.b16 %v603
    %v1719 = vunpack.c.h.b16 %v603
    %v1720 = vunpack.c.l.b16 %v604
    %v1721 = vunpack.c.l.b16 %v605
    %v1722 = vunpack.c.h.b16 %v605
    %v1723 = vunpack.c.l.b16 %v606
    %v1724 = vunpack.c.l.b16 %v607
    %v1725 = vunpack.c.h.b16 %v607
    %v1726 = vunpack.c.l.b16 %v608
    %v1727 = vunpack.c.l.b16 %v609
    %v1728 = vunpack.c.h.b16 %v609
    %v1729 = vunpack.c.l.b16 %v610
    %v1730 = vunpack.c.l.b16 %v611
    %v1731 = vunpack.c.h.b16 %v611
    %v1732 = vunpack.c.l.b16 %v612
    %v1733 = vunpack.c.l.b16 %v613
    %v1734 = vunpack.c.h.b16 %v613
    %v1735 = vunpack.c.l.b16 %v614
    %v1736 = vunpack.c.l.b16 %v615
    %v1737 = vunpack.c.h.b16 %v615
    %v1738 = vunpack.c.l.b16 %v616
    %v1739 = vunpack.c.l.b16 %v617
    %v1740 = vunpack.c.h.b16 %v617
    %v1741 = vunpack.c.l.b16 %v618
    %v1742 = vunpack.c.l.b16 %v619
    %v1743 = vunpack.c.h.b16 %v619
    %v1744 = vunpack.c.l.b16 %v620
    %v1745 = vunpack.c.l.b16 %v621
    %v1746 = vunpack.c.h.b16 %v621
    %v1747 = vunpack.c.l.b16 %v622
    %v1748 = vunpack.c.l.b16 %v623
    %v1749 = vunpack.c.h.b16 %v623
    %v1750 = vunpack.c.l.b16 %v624
    %v1751 = vunpack.c.l.b16 %v625
    %v1752 = vunpack.c.h.b16 %v625
    %v1753 = vunpack.c.l.b16 %v626
    %v1754 = vunpack.c.l.b16 %v627
    %v1755 = vunpack.c.h.b16 %v627
    %v1756 = vunpack.c.l.b16 %v628
    %v1757 = vunpack.c.l.b16 %v629
    %v1758 = vunpack.c.h.b16 %v629
    %v1759 = vunpack.c.l.b16 %v630
    %v1760 = vunpack.c.l.b16 %v631
    %v1761 = vunpack.c.h.b16 %v631
    %v1762 = vunpack.c.l.b16 %v632
    %v1763 = vunpack.c.l.b16 %v633
    %v1764 = vunpack.c.h.b16 %v633
    %v1765 = vunpack.c.l.b16 %v634
    %v1766 = vunpack.c.l.b16 %v635
    %v1767 = vunpack.c.h.b16 %v635
    %v1768 = vunpack.c.l.b16 %v636
    %v1769 = vunpack.c.l.b16 %v637
    %v1770 = vunpack.c.h.b16 %v637
    %v1771 = vunpack.c.l.b16 %v638
    %v1772 = vunpack.c.l.b16 %v639
    %v1773 = vunpack.c.h.b16 %v639
    %v1774 = vunpack.c.l.b16 %v640
    %v1775 = vunpack.c.l.b16 %v641
    %v1776 = vunpack.c.h.b16 %v641
    %v1777 = vunpack.c.l.b16 %v642
    %v1778 = vunpack.c.l.b16 %v643
    %v1779 = vunpack.c.h.b16 %v643
    %v1780 = vunpack.c.l.b16 %v644
    %v1781 = vunpack.c.l.b16 %v645
    %v1782 = vunpack.c.h.b16 %v645
    %v1783 = vunpack.c.l.b16 %v646
    %v1784 = vunpack.c.l.b16 %v647
    %v1785 = vunpack.c.h.b16 %v647
    %v1786 = vunpack.c.l.b16 %v648
    %v1787 = vunpack.c.l.b16 %v649
    %v1788 = vunpack.c.h.b16 %v649
    %v1789 = vunpack.c.l.b16 %v650
    %v1790 = vunpack.c.l.b16 %v651
    %v1791 = vunpack.c.h.b16 %v651
    %v1792 = vunpack.c.l.b16 %v652
    %v1793 = vunpack.c.l.b16 %v653
    %v1794 = vunpack.c.h.b16 %v653
    %v1795 = vunpack.c.l.b16 %v654
    %v1796 = vunpack.c.l.b16 %v655
    %v1797 = vunpack.c.h.b16 %v655
    %v1798 = vunpack.c.l.b16 %v656
    %v1799 = vunpack.c.l.b16 %v657
    %v1800 = vunpack.c.h.b16 %v657
    %v1801 = vunpack.c.l.b16 %v658
    %v1802 = vunpack.c.l.b16 %v659
    %v1803 = vunpack.c.h.b16 %v659
    %v1804 = vunpack.c.l.b16 %v660
    %v1805 = vunpack.c.l.b16 %v661
    %v1806 = vunpack.c.h.b16 %v661
    %v1807 = vunpack.c.l.b16 %v662
    %v1808 = vunpack.c.l.b16 %v663
    %v1809 = vunpack.c.h.b16 %v663
    %v1810 = vunpack.c.l.b16 %v664
    %v1811 = vunpack.c.l.b16 %v665
    %v1812 = vunpack.c.h.b16 %v665
    %v1813 = vunpack.c.l.b16 %v666
    %v1814 = vunpack.c.l.b16 %v667
    %v1815 = vunpack.c.h.b16 %v667
    %v1816 = vunpack.c.l.b16 %v668
    %v1817 = vunpack.c.l.b16 %v669
    %v1818 = vunpack.c.h.b16 %v669
    %v1819 = vunpack.c.l.b16 %v670
    %v1820 = vunpack.c.l.b16 %v671
    %v1821 = vunpack.c.h.b16 %v671
    %v1822 = vunpack.c.l.b16 %v672
    %v1823 = vunpack.c.l.b16 %v673
    %v1824 = vunpack.c.h.b16 %v673
    %v1825 = vunpack.c.l.b16 %v674
    %v1826 = vunpack.c.l.b16 %v675
    %v1827 = vunpack.c.h.b16 %v675
    %v1828 = vunpack.c.l.b16 %v676
    %v1829 = vunpack.c.l.b16 %v677
    %v1830 = vunpack.c.h.b16 %v677
    %v1831 = vunpack.c.l.b16 %v678
    %v1832 = vunpack.c.l.b16 %v679
    %v1833 = vunpack.c.h.b16 %v679
    %v1834 = vunpack.c.l.b16 %v680
    %v1835 = vunpack.c.l.b16 %v681
    %v1836 = vunpack.c.h.b16 %v681
    %v1837 = vunpack.c.l.b16 %v682
    %v1838 = vunpack.c.l.b16 %v683
    %v1839 = vunpack.c.h.b16 %v683
    %v1840 = vunpack.c.l.b16 %v684
    %v1841 = vunpack.c.l.b16 %v685
    %v1842 = vunpack.c.h.b16 %v685
    %v1843 = vunpack.c.l.b16 %v686
    %v1844 = vunpack.c.l.b16 %v687
    %v1845 = vunpack.c.h.b16 %v687
    %v1846 = vunpack.c.l.b16 %v688
    %v1847 = vunpack.c.l.b16 %v689
    %v1848 = vunpack.c.h.b16 %v689
    %v1849 = vunpack.c.l.b16 %v690
    %v1850 = vunpack.c.l.b16 %v691
    %v1851 = vunpack.c.h.b16 %v691
    %v1852 = vunpack.c.l.b16 %v692
    %v1853 = vunpack.c.l.b16 %v693
    %v1854 = vunpack.c.h.b16 %v693
    %v1855 = vunpack.c.l.b16 %v694
    %v1856 = vunpack.c.l.b16 %v695
    %v1857 = vunpack.c.h.b16 %v695
    %v1858 = vunpack.c.l.b16 %v696
    %v1859 = vunpack.c.l.b16 %v697
    %v1860 = vunpack.c.h.b16 %v697
    %v1861 = vunpack.c.l.b16 %v698
    %v1862 = vunpack.c.l.b16 %v699
    %v1863 = vunpack.c.h.b16 %v699
    %v1864 = vunpack.c.l.b16 %v700
    %v1865 = vunpack.c.l.b16 %v701
    %v1866 = vunpack.c.h.b16 %v701
    %v1867 = vunpack.c.l.b16 %v702
    %v1868 = vunpack.c.l.b16 %v703
    %v1869 = vunpack.c.h.b16 %v703
    %v1870 = vunpack.c.l.b16 %v704
    %v1871 = vunpack.c.l.b16 %v705
    %v1872 = vunpack.c.h.b16 %v705
    %v1873 = vunpack.c.l.b16 %v706
    %v1874 = vunpack.c.l.b16 %v707
    %v1875 = vunpack.c.h.b16 %v707
    %v1876 = vunpack.c.l.b16 %v708
    %v1877 = vunpack.c.l.b16 %v709
    %v1878 = vunpack.c.h.b16 %v709
    %v1879 = vunpack.c.l.b16 %v710
    %v1880 = vunpack.c.l.b16 %v711
    %v1881 = vunpack.c.h.b16 %v711
    %v1882 = vunpack.c.l.b16 %v712
    %v1883 = vunpack.c.l.b16 %v713
    %v1884 = vunpack.c.h.b16 %v713
    %v1885 = vunpack.c.l.b16 %v714
    %v1886 = vunpack.c.l.b16 %v715
    %v1887 = vunpack.c.h.b16 %v715
    %v1888 = vunpack.c.l.b16 %v716
    %v1889 = vunpack.c.l.b16 %v717
    %v1890 = vunpack.c.h.b16 %v717
    %v1891 = vunpack.c.l.b16 %v718
    %v1892 = vunpack.c.l.b16 %v719
    %v1893 = vunpack.c.h.b16 %v719
    %v1894 = vunpack.c.l.b16 %v720
    %v1895 = vunpack.c.l.b16 %v721
    %v1896 = vunpack.c.h.b16 %v721
    %v1897 = vunpack.c.l.b16 %v722
    %v1898 = vunpack.c.l.b16 %v723
    %v1899 = vunpack.c.h.b16 %v723
    %v1900 = vunpack.c.l.b16 %v724
    %v1901 = vunpack.c.l.b16 %v725
    %v1902 = vunpack.c.h.b16 %v725
    %v1903 = vunpack.c.l.b16 %v726
    %v1904 = vunpack.c.l.b16 %v727
    %v1905 = vunpack.c.h.b16 %v727
    %v1906 = vunpack.c.l.b16 %v728
    %v1907 = vunpack.c.l.b16 %v729
    %v1908 = vunpack.c.h.b16 %v729
    %v1909 = vunpack.c.l.b16 %v730
    %v1910 = vunpack.c.l.b16 %v731
    %v1911 = vunpack.c.h.b16 %v731
    %v1912 = vunpack.c.l.b16 %v732
    %v1913 = vunpack.c.l.b16 %v733
    %v1914 = vunpack.c.h.b16 %v733
    %v1915 = vunpack.c.l.b16 %v734
    %v1916 = vunpack.c.l.b16 %v735
    %v1917 = vunpack.c.h.b16 %v735
    %v1918 = vunpack.c.l.b16 %v736
    %v1919 = vunpack.c.l.b16 %v737
    %v1920 = vunpack.c.h.b16 %v737
    %v1921 = vunpack.c.l.b16 %v738
    %v1922 = vunpack.c.l.b16 %v739
    %v1923 = vunpack.c.h.b16 %v739
    %v1924 = vunpack.c.l.b16 %v740
    %v1925 = vunpack.c.l.b16 %v741
    %v1926 = vunpack.c.h.b16 %v741
    %v1927 = vunpack.c.l.b16 %v742
    %v1928 = vunpack.c.l.b16 %v743
    %v1929 = vunpack.c.h.b16 %v743
    %v1930 = vunpack.c.l.b16 %v744
    %v1931 = vunpack.c.l.b16 %v745
    %v1932 = vunpack.c.h.b16 %v745
    %v1933 = vunpack.c.l.b16 %v746
    %v1934 = vunpack.c.l.b16 %v747
    %v1935 = vunpack.c.h.b16 %v747
    %v1936 = vunpack.c.l.b16 %v748
    %v1937 = vunpack.c.l.b16 %v749
    %v1938 = vunpack.c.h.b16 %v749
    %v1939 = vunpack.c.l.b16 %v750
    %v1940 = vunpack.c.l.b16 %v751
    %v1941 = vunpack.c.h.b16 %v751
    %v1942 = vunpack.c.l.b16 %v752
    %v1943 = vunpack.c.l.b16 %v753
    %v1944 = vunpack.c.h.b16 %v753
    %v1945 = vunpack.c.l.b16 %v754
    %v1946 = vunpack.c.l.b16 %v755
    %v1947 = vunpack.c.h.b16 %v755
    %v1948 = vunpack.c.l.b16 %v756
    %v1949 = vunpack.c.l.b16 %v757
    %v1950 = vunpack.c.h.b16 %v757
    %v1951 = vunpack.c.l.b16 %v758
    %v1952 = vunpack.c.l.b16 %v759
    %v1953 = vunpack.c.h.b16 %v759
    %v1954 = vunpack.c.l.b16 %v760
    %v1955 = vunpack.c.l.b16 %v761
    %v1956 = vunpack.c.h.b16 %v761
    %v1957 = vunpack.c.l.b16 %v762
    %v1958 = vunpack.c.l.b16 %v763
    %v1959 = vunpack.c.h.b16 %v763
    %v1960 = vunpack.c.l.b16 %v764
    %v1961 = vunpack.c.l.b16 %v765
    %v1962 = vunpack.c.h.b16 %v765
    %v1963 = vunpack.c.l.b16 %v766
    %v1964 = vunpack.c.l.b16 %v767
    %v1965 = vunpack.c.h.b16 %v767
    %v1966 = vunpack.c.l.b16 %v768
    %v1967 = vunpack.c.l.b16 %v769
    %v1968 = vunpack.c.h.b16 %v769
    %v1969 = vunpack.c.l.b16 %v770
    %v1970 = vunpack.c.l.b16 %v771
    %v1971 = vunpack.c.h.b16 %v771
    %v1972 = vunpack.c.l.b16 %v772
    %v1973 = vunpack.c.l.b16 %v773
    %v1974 = vunpack.c.h.b16 %v773
    %v1975 = vunpack.c.l.b16 %v774
    %v1976 = vunpack.c.l.b16 %v775
    %v1977 = vunpack.c.h.b16 %v775
    %v1978 = vunpack.c.l.b16 %v776
    %v1979 = vunpack.c.l.b16 %v777
    %v1980 = vunpack.c.h.b16 %v777
    %v1981 = vunpack.c.l.b16 %v778
    %v1982 = vunpack.c.l.b16 %v779
    %v1983 = vunpack.c.h.b16 %v779
    %v1984 = vunpack.c.l.b16 %v780
    %v1985 = vunpack.c.l.b16 %v781
    %v1986 = vunpack.c.h.b16 %v781
    %v1987 = vunpack.c.l.b16 %v782
    %v1988 = vunpack.c.l.b16 %v783
    %v1989 = vunpack.c.h.b16 %v783
    %v1990 = vunpack.c.l.b16 %v784
    %v1991 = vunpack.c.l.b16 %v785
    %v1992 = vunpack.c.h.b16 %v785
    %v1993 = vunpack.c.l.b16 %v786
    %v1994 = vunpack.c.l.b16 %v787
    %v1995 = vunpack.c.h.b16 %v787
    %v1996 = vunpack.c.l.b16 %v788
    %v1997 = vunpack.c.l.b16 %v789
    %v1998 = vunpack.c.h.b16 %v789
    %v1999 = vunpack.c.l.b16 %v790
    %v2000 = vunpack.c.l.b16 %v791
    %v2001 = vunpack.c.h.b16 %v791
    %v2002 = vunpack.c.l.b16 %v792
    %v2003 = vunpack.c.l.b16 %v793
    %v2004 = vunpack.c.h.b16 %v793
    %v2005 = vunpack.c.l.b16 %v794
    %v2006 = vunpack.c.l.b16 %v795
    %v2007 = vunpack.c.h.b16 %v795
    %v2008 = vunpack.c.l.b16 %v796
    %v2009 = vunpack.c.l.b16 %v797
    %v2010 = vunpack.c.h.b16 %v797
    %v2011 = vunpack.c.l.b16 %v798
    %v2012 = vunpack.c.l.b16 %v799
    %v2013 = vunpack.c.h.b16 %v799
    %v2014 = vunpack.c.l.b16 %v800
    %v2015 = vunpack.c.l.b16 %v801
    %v2016 = vunpack.c.h.b16 %v801
    %v2017 = vunpack.c.l.b16 %v802
    %v2018 = vunpack.c.l.b16 %v803
    %v2019 = vunpack.c.h.b16 %v803
    %v2020 = vunpack.c.l.b16 %v804
    %v2021 = vunpack.c.l.b16 %v805
    %v2022 = vunpack.c.h.b16 %v805
    %v2023 = vunpack.c.l.b16 %v806
    %v2024 = vunpack.c.l.b16 %v807
    %v2025 = vunpack.c.h.b16 %v807
    %v2026 = vunpack.c.l.b16 %v808
    %v2027 = vunpack.c.l.b16 %v809
    %v2028 = vunpack.c.h.b16 %v809
    %v2029 = vunpack.c.l.b16 %v810
    %v2030 = vunpack.c.l.b16 %v811
    %v2031 = vunpack.c.h.b16 %v811
    %v2032 = vunpack.c.l.b16 %v812
    %v2033 = vunpack.c.l.b16 %v813
    %v2034 = vunpack.c.h.b16 %v813
    %v2035 = vunpack.c.l.b16 %v814
    %v2036 = vunpack.c.l.b16 %v815
    %v2037 = vunpack.c.h.b16 %v815
    %v2038 = vunpack.c.l.b16 %v816
    %v2039 = vunpack.c.l.b16 %v817
    %v2040 = vunpack.c.h.b16 %v817
    %v2041 = vunpack.c.l.b16 %v818
    %v2042 = vunpack.c.l.b16 %v819
    %v2043 = vunpack.c.h.b16 %v819
    %v2044 = vunpack.c.l.b16 %v820
    %v2045 = vunpack.c.l.b16 %v821
    %v2046 = vunpack.c.h.b16 %v821
    %v2047 = vunpack.c.l.b16 %v822
    %v2048 = vunpack.c.l.b16 %v823
    %v2049 = vunpack.c.h.b16 %v823
    %v2050 = vunpack.c.l.b16 %v824
    %v2051 = vunpack.c.l.b16 %v825
    %v2052 = vunpack.c.h.b16 %v825
    %v2053 = vunpack.c.l.b16 %v826
    %v2054 = vunpack.c.l.b16 %v827
    %v2055 = vunpack.c.h.b16 %v827
    %v2056 = vunpack.c.l.b16 %v828
    %v2057 = vunpack.c.l.b16 %v829
    %v2058 = vunpack.c.h.b16 %v829
    %v2059 = vunpack.c.l.b16 %v830
    %v2060 = vunpack.c.l.b16 %v831
    %v2061 = vunpack.c.h.b16 %v831
    %v2062 = vunpack.c.l.b16 %v832
    %v2063 = vunpack.c.l.b16 %v833
    %v2064 = vunpack.c.h.b16 %v833
    %v2065 = vunpack.c.l.b16 %v834
    %v2066 = vunpack.c.l.b16 %v835
    %v2067 = vunpack.c.h.b16 %v835
    %v2068 = vunpack.c.l.b16 %v836
    %v2069 = vunpack.c.l.b16 %v837
    %v2070 = vunpack.c.h.b16 %v837
    %v2071 = vunpack.c.l.b16 %v838
    %v2072 = vunpack.c.l.b16 %v839
    %v2073 = vunpack.c.h.b16 %v839
    %v2074 = vunpack.c.l.b16 %v840
    %v2075 = vunpack.c.l.b16 %v841
    %v2076 = vunpack.c.h.b16 %v841
    %v2077 = vunpack.c.l.b16 %v842
    %v2078 = vunpack.c.l.b16 %v843
    %v2079 = vunpack.c.h.b16 %v843
    %v2080 = vunpack.c.l.b16 %v844
    %v2081 = vunpack.c.l.b16 %v845
    %v2082 = vunpack.c.h.b16 %v845
    %v2083 = vunpack.c.l.b16 %v846
    %v2084 = vunpack.c.l.b16 %v847
    %v2085 = vunpack.c.h.b16 %v847
    %v2086 = vunpack.c.l.b16 %v848
    %v2087 = vunpack.c.l.b16 %v849
    %v2088 = vunpack.c.h.b16 %v849
    %v2089 = vunpack.c.l.b16 %v850
    %v2090 = vunpack.c.l.b16 %v851
    %v2091 = vunpack.c.h.b16 %v851
    %v2092 = vunpack.c.l.b16 %v852
    %v2093 = vunpack.c.l.b16 %v853
    %v2094 = vunpack.c.h.b16 %v853
    %v2095 = vunpack.c.l.b16 %v854
    %v2096 = vunpack.c.l.b16 %v855
    %v2097 = vunpack.c.h.b16 %v855
    %v2098 = vunpack.c.l.b16 %v856
    %v2099 = vunpack.c.l.b16 %v857
    %v2100 = vunpack.c.h.b16 %v857
    %v2101 = vunpack.c.l.b16 %v858
    %v2102 = vunpack.c.l.b16 %v859
    %v2103 = vunpack.c.h.b16 %v859
    %v2104 = vunpack.c.l.b16 %v860
    %v2105 = vunpack.c.l.b16 %v861
    %v2106 = vunpack.c.h.b16 %v861
    %v2107 = vunpack.c.l.b16 %v862
    %v2108 = vunpack.c.l.b16 %v863
    %v2109 = vunpack.c.h.b16 %v863
    %v2110 = vunpack.c.l.b16 %v864
    %v2111 = vunpack.c.l.b16 %v865
    %v2112 = vunpack.c.h.b16 %v865
    %v2113 = vunpack.c.l.b16 %v866
    %v2114 = vunpack.c.l.b16 %v867
    %v2115 = vunpack.c.h.b16 %v867
    %v2116 = vunpack.c.l.b16 %v868
    %v2117 = vunpack.c.l.b16 %v869
    %v2118 = vunpack.c.h.b16 %v869
    %v2119 = vunpack.c.l.b16 %v870
    %v2120 = vunpack.c.l.b16 %v871
    %v2121 = vunpack.c.h.b16 %v871
    %v2122 = vunpack.c.l.b16 %v872
    %v2123 = vunpack.c.l.b16 %v873
    %v2124 = vunpack.c.h.b16 %v873
    %v2125 = vunpack.c.l.b16 %v874
    %v2126 = vunpack.c.l.b16 %v875
    %v2127 = vunpack.c.h.b16 %v875
    %v2128 = vunpack.c.l.b16 %v876
    %v2129 = vunpack.c.l.b16 %v877
    %v2130 = vunpack.c.h.b16 %v877
    %v2131 = vunpack.c.l.b16 %v878
    %v2132 = vunpack.c.l.b16 %v879
    %v2133 = vunpack.c.h.b16 %v879
    %v2134 = vunpack.c.l.b16 %v880
    %v2135 = vunpack.c.l.b16 %v881
    %v2136 = vunpack.c.h.b16 %v881
    %v2137 = vunpack.c.l.b16 %v882
    %v2138 = vunpack.c.l.b16 %v883
    %v2139 = vunpack.c.h.b16 %v883
    %v2140 = vunpack.c.l.b16 %v884
    %v2141 = vunpack.c.l.b16 %v885
    %v2142 = vunpack.c.h.b16 %v885
    %v2143 = vunpack.c.l.b16 %v886
    %v2144 = vunpack.c.l.b16 %v887
    %v2145 = vunpack.c.h.b16 %v887
    %v2146 = vunpack.c.l.b16 %v888
    %v2147 = vunpack.c.l.b16 %v889
    %v2148 = vunpack.c.h.b16 %v889
    %v2149 = vunpack.c.l.b16 %v890
    %v2150 = vunpack.c.l.b16 %v891
    %v2151 = vunpack.c.h.b16 %v891
    %v2152 = vunpack.c.l.b16 %v892
    %v2153 = vunpack.c.l.b16 %v893
    %v2154 = vunpack.c.h.b16 %v893
    %v2155 = vunpack.c.l.b16 %v894
    %v2156 = vunpack.c.l.b16 %v895
    %v2157 = vunpack.c.h.b16 %v895
    %v2158 = vunpack.c.l.b16 %v896
    %v2159 = vunpack.c.l.b16 %v897
    %v2160 = vunpack.c.h.b16 %v897
    %v2161 = vunpack.c.l.b16 %v898
    %v2162 = vunpack.c.l.b16 %v899
    %v2163 = vunpack.c.h.b16 %v899
    %v2164 = vunpack.c.l.b16 %v900
    %v2165 = vunpack.c.l.b16 %v901
    %v2166 = vunpack.c.h.b16 %v901
    %v2167 = vunpack.c.l.b16 %v902
    %v2168 = vunpack.c.l.b16 %v903
    %v2169 = vunpack.c.h.b16 %v903
    %v2170 = vunpack.c.l.b16 %v904
    %v2171 = vunpack.c.l.b16 %v905
    %v2172 = vunpack.c.h.b16 %v905
    %v2173 = vunpack.c.l.b16 %v906
    %v2174 = vunpack.c.l.b16 %v907
    %v2175 = vunpack.c.h.b16 %v907
    %v2176 = vunpack.c.l.b16 %v908
    %v2177 = vunpack.c.l.b16 %v909
    %v2178 = vunpack.c.h.b16 %v909
    %v2179 = vunpack.c.l.b16 %v910
    %v2180 = vunpack.c.l.b16 %v911
    %v2181 = vunpack.c.h.b16 %v911
    %v2182 = vunpack.c.l.b16 %v912
    %v2183 = vunpack.c.l.b16 %v913
    %v2184 = vunpack.c.h.b16 %v913
    %v2185 = vunpack.c.l.b16 %v914
    %v2186 = vunpack.c.l.b16 %v915
    %v2187 = vunpack.c.h.b16 %v915
    %v2188 = vunpack.c.l.b16 %v916
    %v2189 = vunpack.c.l.b16 %v917
    %v2190 = vunpack.c.h.b16 %v917
    %v2191 = vunpack.c.l.b16 %v918
    %v2192 = vunpack.c.l.b16 %v919
    %v2193 = vunpack.c.h.b16 %v919
    %v2194 = vunpack.c.l.b16 %v920
    %v2195 = vunpack.c.l.b16 %v921
    %v2196 = vunpack.c.h.b16 %v921
    %v2197 = vunpack.c.l.b16 %v922
    %v2198 = vunpack.c.l.b16 %v923
    %v2199 = vunpack.c.h.b16 %v923
    %v2200 = vunpack.c.l.b16 %v924
    %v2201 = vunpack.c.l.b16 %v925
    %v2202 = vunpack.c.h.b16 %v925
    %v2203 = vunpack.c.l.b16 %v926
    %v2204 = vunpack.c.l.b16 %v927
    %v2205 = vunpack.c.h.b16 %v927
    %v2206 = vunpack.c.l.b16 %v928
    %v2207 = vunpack.c.l.b16 %v929
    %v2208 = vunpack.c.h.b16 %v929
    %v2209 = vunpack.c.l.b16 %v930
    %v2210 = vunpack.c.l.b16 %v931
    %v2211 = vunpack.c.h.b16 %v931
    %v2212 = vunpack.c.l.b16 %v932
    %v2213 = vunpack.c.l.b16 %v933
    %v2214 = vunpack.c.h.b16 %v933
    %v2215 = vunpack.c.l.b16 %v934
    %v2216 = vunpack.c.l.b16 %v935
    %v2217 = vunpack.c.h.b16 %v935
    %v2218 = vunpack.c.l.b16 %v936
    %v2219 = vunpack.c.l.b16 %v937
    %v2220 = vunpack.c.h.b16 %v937
    %v2221 = vunpack.c.l.b16 %v938
    %v2222 = vunpack.c.l.b16 %v939
    %v2223 = vunpack.c.h.b16 %v939
    %v2224 = vunpack.c.l.b16 %v940
    %v2225 = vunpack.c.l.b16 %v941
    %v2226 = vunpack.c.h.b16 %v941
    %v2227 = vunpack.c.l.b16 %v942
    %v2228 = vunpack.c.l.b16 %v943
    %v2229 = vunpack.c.h.b16 %v943
    %v2230 = vunpack.c.l.b16 %v944
    %v2231 = vunpack.c.l.b16 %v945
    %v2232 = vunpack.c.h.b16 %v945
    %v2233 = vunpack.c.l.b16 %v946
    %v2234 = vunpack.c.l.b16 %v947
    %v2235 = vunpack.c.h.b16 %v947
    %v2236 = vunpack.c.l.b16 %v948
    %v2237 = vunpack.c.l.b16 %v949
    %v2238 = vunpack.c.h.b16 %v949
    %v2239 = vunpack.c.l.b16 %v950
    %v2240 = vunpack.c.l.b16 %v951
    %v2241 = vunpack.c.h.b16 %v951
    %v2242 = vunpack.c.l.b16 %v952
    %v2243 = vpack.c.b16 %v1472, %v1469
    %v2244 = vpack.c.b16 %v1473, %v1470
    %v2245 = vpack.c.b16 %v1474, %v1471
    %v2246 = vpack.c.b16 %v1478, %v1475
    %v2247 = vpack.c.b16 %v1479, %v1476
    %v2248 = vpack.c.b16 %v1480, %v1477
    %v2249 = vpack.c.b16 %v1484, %v1481
    %v2250 = vpack.c.b16 %v1485, %v1482
    %v2251 = vpack.c.b16 %v1486, %v1483
    %v2252 = vpack.c.b16 %v1490, %v1487
    %v2253 = vpack.c.b16 %v1491, %v1488
    %v2254 = vpack.c.b16 %v1492, %v1489
    %v2255 = vpack.c.b16 %v1496, %v1493
    %v2256 = vpack.c.b16 %v1497, %v1494
    %v2257 = vpack.c.b16 %v1498, %v1495
    %v2258 = vpack.c.b16 %v1502, %v1499
    %v2259 = vpack.c.b16 %v1503, %v1500
    %v2260 = vpack.c.b16 %v1504, %v1501
    %v2261 = vpack.c.b16 %v1508, %v1505
    %v2262 = vpack.c.b16 %v1509, %v1506
    %v2263 = vpack.c.b16 %v1510, %v1507
    %v2264 = vpack.c.b16 %v1514, %v1511
    %v2265 = vpack.c.b16 %v1515, %v1512
    %v2266 = vpack.c.b16 %v1516, %v1513
    %v2267 = vpack.c.b16 %v1520, %v1517
    %v2268 = vpack.c.b16 %v1521, %v1518
    %v2269 = vpack.c.b16 %v1522, %v1519
    %v2270 = vpack.c.b16 %v1526, %v1523
    %v2271 = vpack.c.b16 %v1527, %v1524
    %v2272 = vpack.c.b16 %v1528, %v1525
    %v2273 = vpack.c.b16 %v1532, %v1529
    %v2274 = vpack.c.b16 %v1533, %v1530
    %v2275 = vpack.c.b16 %v1534, %v1531
    %v2276 = vpack.c.b16 %v1538, %v1535
    %v2277 = vpack.c.b16 %v1539, %v1536
    %v2278 = vpack.c.b16 %v1540, %v1537
    %v2279 = vpack.c.b16 %v1544, %v1541
    %v2280 = vpack.c.b16 %v1545, %v1542
    %v2281 = vpack.c.b16 %v1546, %v1543
    %v2282 = vpack.c.b16 %v1550, %v1547
    %v2283 = vpack.c.b16 %v1551, %v1548
    %v2284 = vpack.c.b16 %v1552, %v1549
    %v2285 = vpack.c.b16 %v1556, %v1553
    %v2286 = vpack.c.b16 %v1557, %v1554
    %v2287 = vpack.c.b16 %v1558, %v1555
    %v2288 = vpack.c.b16 %v1562, %v1559
    %v2289 = vpack.c.b16 %v1563, %v1560
    %v2290 = vpack.c.b16 %v1564, %v1561
    %v2291 = vpack.c.b16 %v1568, %v1565
    %v2292 = vpack.c.b16 %v1569, %v1566
    %v2293 = vpack.c.b16 %v1570, %v1567
    %v2294 = vpack.c.b16 %v1574, %v1571
    %v2295 = vpack.c.b16 %v1575, %v1572
    %v2296 = vpack.c.b16 %v1576, %v1573
    %v2297 = vpack.c.b16 %v1580, %v1577
    %v2298 = vpack.c.b16 %v1581, %v1578
    %v2299 = vpack.c.b16 %v1582, %v1579
    %v2300 = vpack.c.b16 %v1586, %v1583
    %v2301 = vpack.c.b16 %v1587, %v1584
    %v2302 = vpack.c.b16 %v1588, %v1585
    %v2303 = vpack.c.b16 %v1592, %v1589
    %v2304 = vpack.c.b16 %v1593, %v1590
    %v2305 = vpack.c.b16 %v1594, %v1591
    %v2306 = vpack.c.b16 %v1598, %v1595
    %v2307 = vpack.c.b16 %v1599, %v1596
    %v2308 = vpack.c.b16 %v1600, %v1597
    %v2309 = vpack.c.b16 %v1604, %v1601
    %v2310 = vpack.c.b16 %v1605, %v1602
    %v2311 = vpack.c.b16 %v1606, %v1603
    %v2312 = vpack.c.b16 %v1610, %v1607
    %v2313 = vpack.c.b16 %v1611, %v1608
    %v2314 = vpack.c.b16 %v1612, %v1609
    %v2315 = vpack.c.b16 %v1616, %v1613
    %v2316 = vpack.c.b16 %v1617, %v1614
    %v2317 = vpack.c.b16 %v1618, %v1615
    %v2318 = vpack.c.b16 %v1622, %v1619
    %v2319 = vpack.c.b16 %v1623, %v1620
    %v2320 = vpack.c.b16 %v1624, %v1621
    %v2321 = vpack.c.b16 %v1628, %v1625
    %v2322 = vpack.c.b16 %v1629, %v1626
    %v2323 = vpack.c.b16 %v1630, %v1627
    %v2324 = vpack.c.b16 %v1634, %v1631
    %v2325 = vpack.c.b16 %v1635, %v1632
    %v2326 = vpack.c.b16 %v1636, %v1633
    %v2327 = vpack.c.b16 %v1640, %v1637
    %v2328 = vpack.c.b16 %v1641, %v1638
    %v2329 = vpack.c.b16 %v1642, %v1639
    %v2330 = vpack.c.b16 %v1646, %v1643
    %v2331 = vpack.c.b16 %v1647, %v1644
    %v2332 = vpack.c.b16 %v1648, %v1645
    %v2333 = vpack.c.b16 %v1652, %v1649
    %v2334 = vpack.c.b16 %v1653, %v1650
    %v2335 = vpack.c.b16 %v1654, %v1651
    %v2336 = vpack.c.b16 %v1658, %v1655
    %v2337 = vpack.c.b16 %v1659, %v1656
    %v2338 = vpack.c.b16 %v1660, %v1657
    %v2339 = vpack.c.b16 %v1664, %v1661
    %v2340 = vpack.c.b16 %v1665, %v1662
    %v2341 = vpack.c.b16 %v1666, %v1663
    %v2342 = vpack.c.b16 %v1670, %v1667
    %v2343 = vpack.c.b16 %v1671, %v1668
    %v2344 = vpack.c.b16 %v1672, %v1669
    %v2345 = vpack.c.b16 %v1676, %v1673
    %v2346 = vpack.c.b16 %v1677, %v1674
    %v2347 = vpack.c.b16 %v1678, %v1675
    %v2348 = vpack.c.b16 %v1682, %v1679
    %v2349 = vpack.c.b16 %v1683, %v1680
    %v2350 = vpack.c.b16 %v1684, %v1681
    %v2351 = vpack.c.b16 %v1688, %v1685
    %v2352 = vpack.c.b16 %v1689, %v1686
    %v2353 = vpack.c.b16 %v1690, %v1687
    %v2354 = vpack.c.b16 %v1694, %v1691
    %v2355 = vpack.c.b16 %v1695, %v1692
    %v2356 = vpack.c.b16 %v1696, %v1693
    %v2357 = vpack.c.b16 %v1700, %v1697
    %v2358 = vpack.c.b16 %v1701, %v1698
    %v2359 = vpack.c.b16 %v1702, %v1699
    %v2360 = vpack.c.b16 %v1706, %v1703
    %v2361 = vpack.c.b16 %v1707, %v1704
    %v2362 = vpack.c.b16 %v1708, %v1705
    %v2363 = vpack.c.b16 %v1712, %v1709
    %v2364 = vpack.c.b16 %v1713, %v1710
    %v2365 = vpack.c.b16 %v1714, %v1711
    %v2366 = vpack.c.b16 %v1718, %v1715
    %v2367 = vpack.c.b16 %v1719, %v1716
    %v2368 = vpack.c.b16 %v1720, %v1717
    %v2369 = vpack.c.b16 %v1724, %v1721
    %v2370 = vpack.c.b16 %v1725, %v1722
    %v2371 = vpack.c.b16 %v1726, %v1723
    %v2372 = vpack.c.b16 %v1730, %v1727
    %v2373 = vpack.c.b16 %v1731, %v1728
    %v2374 = vpack.c.b16 %v1732, %v1729
    %v2375 = vpack.c.b16 %v1736, %v1733
    %v2376 = vpack.c.b16 %v1737, %v1734
    %v2377 = vpack.c.b16 %v1738, %v1735
    %v2378 = vpack.c.b16 %v1742, %v1739
    %v2379 = vpack.c.b16 %v1743, %v1740
    %v2380 = vpack.c.b16 %v1744, %v1741
    %v2381 = vpack.c.b16 %v1748, %v1745
    %v2382 = vpack.c.b16 %v1749, %v1746
    %v2383 = vpack.c.b16 %v1750, %v1747
    %v2384 = vpack.c.b16 %v1754, %v1751
    %v2385 = vpack.c.b16 %v1755, %v1752
    %v2386 = vpack.c.b16 %v1756, %v1753
    %v2387 = vpack.c.b16 %v1760, %v1757
    %v2388 = vpack.c.b16 %v1761, %v1758
    %v2389 = vpack.c.b16 %v1762, %v1759
    %v2390 = vpack.c.b16 %v1766, %v1763
    %v2391 = vpack.c.b16 %v1767, %v1764
    %v2392 = vpack.c.b16 %v1768, %v1765
    %v2393 = vpack.c.b16 %v1772, %v1769
    %v2394 = vpack.c.b16 %v1773, %v1770
    %v2395 = vpack.c.b16 %v1774, %v1771
    %v2396 = vpack.c.b16 %v1778, %v1775
    %v2397 = vpack.c.b16 %v1779, %v1776
    %v2398 = vpack.c.b16 %v1780, %v1777
    %v2399 = vpack.c.b16 %v1784, %v1781
    %v2400 = vpack.c.b16 %v1785, %v1782
    %v2401 = vpack.c.b16 %v1786, %v1783
    %v2402 = vpack.c.b16 %v1790, %v1787
    %v2403 = vpack.c.b16 %v1791, %v1788
    %v2404 = vpack.c.b16 %v1792, %v1789
    %v2405 = vpack.c.b16 %v1796, %v1793
    %v2406 = vpack.c.b16 %v1797, %v1794
    %v2407 = vpack.c.b16 %v1798, %v1795
    %v2408 = vpack.c.b16 %v1802, %v1799
    %v2409 = vpack.c.b16 %v1803, %v1800
    %v2410 = vpack.c.b16 %v1804, %v1801
    %v2411 = vpack.c.b16 %v1808, %v1805
    %v2412 = vpack.c.b16 %v1809, %v1806
    %v2413 = vpack.c.b16 %v1810, %v1807
    %v2414 = vpack.c.b16 %v1814, %v1811
    %v2415 = vpack.c.b16 %v1815, %v1812
    %v2416 = vpack.c.b16 %v1816, %v1813
    %v2417 = vpack.c.b16 %v1820, %v1817
    %v2418 = vpack.c.b16 %v1821, %v1818
    %v2419 = vpack.c.b16 %v1822, %v1819
    %v2420 = vpack.c.b16 %v1826, %v1823
    %v2421 = vpack.c.b16 %v1827, %v1824
    %v2422 = vpack.c.b16 %v1828, %v1825
    %v2423 = vpack.c.b16 %v1832, %v1829
    %v2424 = vpack.c.b16 %v1833, %v1830
    %v2425 = vpack.c.b16 %v1834, %v1831
    %v2426 = vpack.c.b16 %v1838, %v1835
    %v2427 = vpack.c.b16 %v1839, %v1836
    %v2428 = vpack.c.b16 %v1840, %v1837
    %v2429 = vpack.c.b16 %v1844, %v1841
    %v2430 = vpack.c.b16 %v1845, %v1842
    %v2431 = vpack.c.b16 %v1846, %v1843
    %v2432 = vpack.c.b16 %v1850, %v1847
    %v2433 = vpack.c.b16 %v1851, %v1848
    %v2434 = vpack.c.b16 %v1852, %v1849
    %v2435 = vpack.c.b16 %v1856, %v1853
    %v2436 = vpack.c.b16 %v1857, %v1854
    %v2437 = vpack.c.b16 %v1858, %v1855
    %v2438 = vpack.c.b16 %v1862, %v1859
    %v2439 = vpack.c.b16 %v1863, %v1860
    %v2440 = vpack.c.b16 %v1864, %v1861
    %v2441 = vpack.c.b16 %v1868, %v1865
    %v2442 = vpack.c.b16 %v1869, %v1866
    %v2443 = vpack.c.b16 %v1870, %v1867
    %v2444 = vpack.c.b16 %v1874, %v1871
    %v2445 = vpack.c.b16 %v1875, %v1872
    %v2446 = vpack.c.b16 %v1876, %v1873
    %v2447 = vpack.c.b16 %v1880, %v1877
    %v2448 = vpack.c.b16 %v1881, %v1878
    %v2449 = vpack.c.b16 %v1882, %v1879
    %v2450 = vpack.c.b16 %v1886, %v1883
    %v2451 = vpack.c.b16 %v1887, %v1884
    %v2452 = vpack.c.b16 %v1888, %v1885
    %v2453 = vpack.c.b16 %v1892, %v1889
    %v2454 = vpack.c.b16 %v1893, %v1890
    %v2455 = vpack.c.b16 %v1894, %v1891
    %v2456 = vpack.c.b16 %v1898, %v1895
    %v2457 = vpack.c.b16 %v1899, %v1896
    %v2458 = vpack.c.b16 %v1900, %v1897
    %v2459 = vpack.c.b16 %v1904, %v1901
    %v2460 = vpack.c.b16 %v1905, %v1902
    %v2461 = vpack.c.b16 %v1906, %v1903
    %v2462 = vpack.c.b16 %v1910, %v1907
    %v2463 = vpack.c.b16 %v1911, %v1908
    %v2464 = vpack.c.b16 %v1912, %v1909
    %v2465 = vpack.c.b16 %v1916, %v1913
    %v2466 = vpack.c.b16 %v1917, %v1914
    %v2467 = vpack.c.b16 %v1918, %v1915
    %v2468 = vpack.c.b16 %v1922, %v1919
    %v2469 = vpack.c.b16 %v1923, %v1920
    %v2470 = vpack.c.b16 %v1924, %v1921
    %v2471 = vpack.c.b16 %v1928, %v1925
    %v2472 = vpack.c.b16 %v1929, %v1926
    %v2473 = vpack.c.b16 %v1930, %v1927
    %v2474 = vpack.c.b16 %v1934, %v1931
    %v2475 = vpack.c.b16 %v1935, %v1932
    %v2476 = vpack.c.b16 %v1936, %v1933
    %v2477 = vpack.c.b16 %v1940, %v1937
    %v2478 = vpack.c.b16 %v1941, %v1938
    %v2479 = vpack.c.b16 %v1942, %v1939
    %v2480 = vpack.c.b16 %v1946, %v1943
    %v2481 = vpack.c.b16 %v1947, %v1944
    %v2482 = vpack.c.b16 %v1948, %v1945
    %v2483 = vpack.c.b16 %v1952, %v1949
    %v2484 = vpack.c.b16 %v1953, %v1950
    %v2485 = vpack.c.b16 %v1954, %v1951
    %v2486 = vpack.c.b16 %v1958, %v1955
    %v2487 = vpack.c.b16 %v1959, %v1956
    %v2488 = vpack.c.b16 %v1960, %v1957
    %v2489 = vpack.c.b16 %v1964, %v1961
    %v2490 = vpack.c.b16 %v1965, %v1962
    %v2491 = vpack.c.b16 %v1966, %v1963
    %v2492 = vpack.c.b16 %v1970, %v1967
    %v2493 = vpack.c.b16 %v1971, %v1968
    %v2494 = vpack.c.b16 %v1972, %v1969
    %v2495 = vpack.c.b16 %v1976, %v1973
    %v2496 = vpack.c.b16 %v1977, %v1974
    %v2497 = vpack.c.b16 %v1978, %v1975
    %v2498 = vpack.c.b16 %v1982, %v1979
    %v2499 = vpack.c.b16 %v1983, %v1980
    %v2500 = vpack.c.b16 %v1984, %v1981
    %v2501 = vpack.c.b16 %v1988, %v1985
    %v2502 = vpack.c.b16 %v1989, %v1986
    %v2503 = vpack.c.b16 %v1990, %v1987
    %v2504 = vpack.c.b16 %v1994, %v1991
    %v2505 = vpack.c.b16 %v1995, %v1992
    %v2506 = vpack.c.b16 %v1996, %v1993
    %v2507 = vpack.c.b16 %v2000, %v1997
    %v2508 = vpack.c.b16 %v2001, %v1998
    %v2509 = vpack.c.b16 %v2002, %v1999
    %v2510 = vpack.c.b16 %v2006, %v2003
    %v2511 = vpack.c.b16 %v2007, %v2004
    %v2512 = vpack.c.b16 %v2008, %v2005
    %v2513 = vpack.c.b16 %v2012, %v2009
    %v2514 = vpack.c.b16 %v2013, %v2010
    %v2515 = vpack.c.b16 %v2014, %v2011
    %v2516 = vpack.c.b16 %v2018, %v2015
    %v2517 = vpack.c.b16 %v2019, %v2016
    %v2518 = vpack.c.b16 %v2020, %v2017
    %v2519 = vpack.c.b16 %v2024, %v2021
    %v2520 = vpack.c.b16 %v2025, %v2022
    %v2521 = vpack.c.b16 %v2026, %v2023
    %v2522 = vpack.c.b16 %v2030, %v2027
    %v2523 = vpack.c.b16 %v2031, %v2028
    %v2524 = vpack.c.b16 %v2032, %v2029
    %v2525 = vpack.c.b16 %v2036, %v2033
    %v2526 = vpack.c.b16 %v2037, %v2034
    %v2527 = vpack.c.b16 %v2038, %v2035
    %v2528 = vpack.c.b16 %v2042, %v2039
    %v2529 = vpack.c.b16 %v2043, %v2040
    %v2530 = vpack.c.b16 %v2044, %v2041
    %v2531 = vpack.c.b16 %v2048, %v2045
    %v2532 = vpack.c.b16 %v2049, %v2046
    %v2533 = vpack.c.b16 %v2050, %v2047
    %v2534 = vpack.c.b16 %v2054, %v2051
    %v2535 = vpack.c.b16 %v2055, %v2052
    %v2536 = vpack.c.b16 %v2056, %v2053
    %v2537 = vpack.c.b16 %v2060, %v2057
    %v2538 = vpack.c.b16 %v2061, %v2058
    %v2539 = vpack.c.b16 %v2062, %v2059
    %v2540 = vpack.c.b16 %v2066, %v2063
    %v2541 = vpack.c.b16 %v2067, %v2064
    %v2542 = vpack.c.b16 %v2068, %v2065
    %v2543 = vpack.c.b16 %v2072, %v2069
    %v2544 = vpack.c.b16 %v2073, %v2070
    %v2545 = vpack.c.b16 %v2074, %v2071
    %v2546 = vpack.c.b16 %v2078, %v2075
    %v2547 = vpack.c.b16 %v2079, %v2076
    %v2548 = vpack.c.b16 %v2080, %v2077
    %v2549 = vpack.c.b16 %v2084, %v2081
    %v2550 = vpack.c.b16 %v2085, %v2082
    %v2551 = vpack.c.b16 %v2086, %v2083
    %v2552 = vpack.c.b16 %v2090, %v2087
    %v2553 = vpack.c.b16 %v2091, %v2088
    %v2554 = vpack.c.b16 %v2092, %v2089
    %v2555 = vpack.c.b16 %v2096, %v2093
    %v2556 = vpack.c.b16 %v2097, %v2094
    %v2557 = vpack.c.b16 %v2098, %v2095
    %v2558 = vpack.c.b16 %v2102, %v2099
    %v2559 = vpack.c.b16 %v2103, %v2100
    %v2560 = vpack.c.b16 %v2104, %v2101
    %v2561 = vpack.c.b16 %v2108, %v2105
    %v2562 = vpack.c.b16 %v2109, %v2106
    %v2563 = vpack.c.b16 %v2110, %v2107
    %v2564 = vpack.c.b16 %v2114, %v2111
    %v2565 = vpack.c.b16 %v2115, %v2112
    %v2566 = vpack.c.b16 %v2116, %v2113
    %v2567 = vpack.c.b16 %v2120, %v2117
    %v2568 = vpack.c.b16 %v2121, %v2118
    %v2569 = vpack.c.b16 %v2122, %v2119
    %v2570 = vpack.c.b16 %v2126, %v2123
    %v2571 = vpack.c.b16 %v2127, %v2124
    %v2572 = vpack.c.b16 %v2128, %v2125
    %v2573 = vpack.c.b16 %v2132, %v2129
    %v2574 = vpack.c.b16 %v2133, %v2130
    %v2575 = vpack.c.b16 %v2134, %v2131
    %v2576 = vpack.c.b16 %v2138, %v2135
    %v2577 = vpack.c.b16 %v2139, %v2136
    %v2578 = vpack.c.b16 %v2140, %v2137
    %v2579 = vpack.c.b16 %v2144, %v2141
    %v2580 = vpack.c.b16 %v2145, %v2142
    %v2581 = vpack.c.b16 %v2146, %v2143
    %v2582 = vpack.c.b16 %v2150, %v2147
    %v2583 = vpack.c.b16 %v2151, %v2148
    %v2584 = vpack.c.b16 %v2152, %v2149
    %v2585 = vpack.c.b16 %v2156, %v2153
    %v2586 = vpack.c.b16 %v2157, %v2154
    %v2587 = vpack.c.b16 %v2158, %v2155
    %v2588 = vpack.c.b16 %v2162, %v2159
    %v2589 = vpack.c.b16 %v2163, %v2160
    %v2590 = vpack.c.b16 %v2164, %v2161
    %v2591 = vpack.c.b16 %v2168, %v2165
    %v2592 = vpack.c.b16 %v2169, %v2166
    %v2593 = vpack.c.b16 %v2170, %v2167
    %v2594 = vpack.c.b16 %v2174, %v2171
    %v2595 = vpack.c.b16 %v2175, %v2172
    %v2596 = vpack.c.b16 %v2176, %v2173
    %v2597 = vpack.c.b16 %v2180, %v2177
    %v2598 = vpack.c.b16 %v2181, %v2178
    %v2599 = vpack.c.b16 %v2182, %v2179
    %v2600 = vpack.c.b16 %v2186, %v2183
    %v2601 = vpack.c.b16 %v2187, %v2184
    %v2602 = vpack.c.b16 %v2188, %v2185
    %v2603 = vpack.c.b16 %v2192, %v2189
    %v2604 = vpack.c.b16 %v2193, %v2190
    %v2605 = vpack.c.b16 %v2194, %v2191
    %v2606 = vpack.c.b16 %v2198, %v2195
    %v2607 = vpack.c.b16 %v2199, %v2196
    %v2608 = vpack.c.b16 %v2200, %v2197
    %v2609 = vpack.c.b16 %v2204, %v2201
    %v2610 = vpack.c.b16 %v2205, %v2202
    %v2611 = vpack.c.b16 %v2206, %v2203
    %v2612 = vpack.c.b16 %v2210, %v2207
    %v2613 = vpack.c.b16 %v2211, %v2208
    %v2614 = vpack.c.b16 %v2212, %v2209
    %v2615 = vpack.c.b16 %v2216, %v2213
    %v2616 = vpack.c.b16 %v2217, %v2214
    %v2617 = vpack.c.b16 %v2218, %v2215
    %v2618 = vpack.c.b16 %v2222, %v2219
    %v2619 = vpack.c.b16 %v2223, %v2220
    %v2620 = vpack.c.b16 %v2224, %v2221
    %v2621 = vpack.c.b16 %v2228, %v2225
    %v2622 = vpack.c.b16 %v2229, %v2226
    %v2623 = vpack.c.b16 %v2230, %v2227
    %v2624 = vpack.c.b16 %v2234, %v2231
    %v2625 = vpack.c.b16 %v2235, %v2232
    %v2626 = vpack.c.b16 %v2236, %v2233
    %v2627 = vpack.c.b16 %v2240, %v2237
    %v2628 = vpack.c.b16 %v2241, %v2238
    %v2629 = vpack.c.b16 %v2242, %v2239
    %vm3017 = vcmask 130048
    %v3019 = vsel %vm3017, %v385, 0
    %v3022 = vsel %vm3017, %v402, 0
    %v3025 = vsel %vm3017, %v419, 0
    %v3028 = vsel %vm3017, %v436, 0
    %3030 = vmatprep.subr.bf16.mxu0 %v2244
    %3031 = vmatpush1.bf16.msra.mxu0 %v2243
    %3032 = vmatprep.subr.bf16.mxu0 %v2247
    %3033 = vmatpush1.bf16.msra.mxu0 %v2246
    %3034 = vmatprep.subr.bf16.mxu0 %v2250
    %3035 = vmatpush1.bf16.msra.mxu0 %v2249
    %3036 = vmatprep.subr.bf16.mxu0 %v2253
    %3037 = vmatpush1.bf16.msra.mxu0 %v2252
    %3038 = vmatprep.subr.bf16.mxu0 %v2256
    %3039 = vmatpush1.bf16.msra.mxu0 %v2255
    %3040 = vmatprep.subr.bf16.mxu0 %v2259
    %3041 = vmatpush1.bf16.msra.mxu0 %v2258
    %3042 = vmatprep.subr.bf16.mxu0 %v2262
    %3043 = vmatpush1.bf16.msra.mxu0 %v2261
    %3044 = vmatprep.subr.bf16.mxu0 %v2265
    %3045 = vmatpush1.bf16.msra.mxu0 %v2264
    %3046 = vmatprep.subr.bf16.mxu0 %v2268
    %3047 = vmatpush1.bf16.msra.mxu0 %v2267
    %3048 = vmatprep.subr.bf16.mxu0 %v2271
    %3049 = vmatpush1.bf16.msra.mxu0 %v2270
    %3050 = vmatprep.subr.bf16.mxu0 %v2274
    %3051 = vmatpush1.bf16.msra.mxu0 %v2273
    %3052 = vmatprep.subr.bf16.mxu0 %v2277
    %3053 = vmatpush1.bf16.msra.mxu0 %v2276
    %3054 = vmatprep.subr.bf16.mxu0 %v2280
    %3055 = vmatpush1.bf16.msra.mxu0 %v2279
    %3056 = vmatprep.subr.bf16.mxu0 %v2283
    %3057 = vmatpush1.bf16.msra.mxu0 %v2282
    %3058 = vmatprep.subr.bf16.mxu0 %v2286
    %3059 = vmatpush1.bf16.msra.mxu0 %v2285
    %3060 = vmatprep.subr.bf16.mxu0 %v2289
    %3061 = vmatpush1.bf16.msra.mxu0 %v2288
    %3062 = vmatprep.mubr.bf16.mxu0 %v370
    %3063 = vmatmul.mubr.bf16.gmra.mrb[0].mxu0 %v369
    %v3064 = vpop.f32.mrb[0].mxu0
    %v3065 = vadd.f32 0.0, %v3064
    %v3066 = vpop.f32.mrb[0].mxu0
    %v3067 = vadd.f32 0.0, %v3066
    %v3068 = vpop.f32.mrb[0].mxu0
    %v3069 = vadd.f32 0.0, %v3068
    %v3070 = vpop.f32.mrb[0].mxu0
    %v3071 = vadd.f32 0.0, %v3070
    %3072 = vmatprep.mubr.bf16.mxu0 %v387
    %3073 = vmatmul.mubr.bf16.gmra.mrb[0].mxu0 %v386
    %v3074 = vpop.f32.mrb[0].mxu0
    %v3075 = vadd.f32 0.0, %v3074
    %v3076 = vpop.f32.mrb[0].mxu0
    %v3077 = vadd.f32 0.0, %v3076
    %v3078 = vpop.f32.mrb[0].mxu0
    %v3079 = vadd.f32 0.0, %v3078
    %v3080 = vpop.f32.mrb[0].mxu0
    %v3081 = vadd.f32 0.0, %v3080
    %3082 = vmatprep.mubr.bf16.mxu0 %v404
    %3083 = vmatmul.mubr.bf16.gmra.mrb[0].mxu0 %v403
    %v3084 = vpop.f32.mrb[0].mxu0
    %v3085 = vadd.f32 0.0, %v3084
    %v3086 = vpop.f32.mrb[0].mxu0
    %v3087 = vadd.f32 0.0, %v3086
    %v3088 = vpop.f32.mrb[0].mxu0
    %v3089 = vadd.f32 0.0, %v3088
    %v3090 = vpop.f32.mrb[0].mxu0
    %v3091 = vadd.f32 0.0, %v3090
    %3092 = vmatprep.mubr.bf16.mxu0 %v421
    %3093 = vmatmul.mubr.bf16.gmra.mrb[0].mxu0 %v420
    %v3094 = vpop.f32.mrb[0].mxu0
    %v3095 = vadd.f32 0.0, %v3094
    %v3096 = vpop.f32.mrb[0].mxu0
    %v3097 = vadd.f32 0.0, %v3096
    %v3098 = vpop.f32.mrb[0].mxu0
    %v3099 = vpop.f32.mrb[0].mxu0
    %3100 = vdwg.mxu0
    %3101 = vmatprep.subr.bf16.mxu0 %v2292
    %3102 = vmatpush1.bf16.msra.mxu0 %v2291
    %3103 = vmatprep.subr.bf16.mxu0 %v2295
    %3104 = vmatpush1.bf16.msra.mxu0 %v2294
    %3105 = vmatprep.subr.bf16.mxu0 %v2298
    %3106 = vmatpush1.bf16.msra.mxu0 %v2297
    %3107 = vmatprep.subr.bf16.mxu0 %v2301
    %3108 = vmatpush1.bf16.msra.mxu0 %v2300
    %3109 = vmatprep.subr.bf16.mxu0 %v2304
    %3110 = vmatpush1.bf16.msra.mxu0 %v2303
    %3111 = vmatprep.subr.bf16.mxu0 %v2307
    %3112 = vmatpush1.bf16.msra.mxu0 %v2306
    %3113 = vmatprep.subr.bf16.mxu0 %v2310
    %3114 = vmatpush1.bf16.msra.mxu0 %v2309
    %3115 = vmatprep.subr.bf16.mxu0 %v2313
    %3116 = vmatpush1.bf16.msra.mxu0 %v2312
    %3117 = vmatprep.subr.bf16.mxu0 %v2316
    %3118 = vmatpush1.bf16.msra.mxu0 %v2315
    %3119 = vmatprep.subr.bf16.mxu0 %v2319
    %3120 = vmatpush1.bf16.msra.mxu0 %v2318
    %3121 = vmatprep.subr.bf16.mxu0 %v2322
    %3122 = vmatpush1.bf16.msra.mxu0 %v2321
    %3123 = vmatprep.subr.bf16.mxu0 %v2325
    %3124 = vmatpush1.bf16.msra.mxu0 %v2324
    %3125 = vmatprep.subr.bf16.mxu0 %v2328
    %3126 = vmatpush1.bf16.msra.mxu0 %v2327
    %3127 = vmatprep.subr.bf16.mxu0 %v2331
    %3128 = vmatpush1.bf16.msra.mxu0 %v2330
    %3129 = vmatprep.subr.bf16.mxu0 %v2334
    %3130 = vmatpush1.bf16.msra.mxu0 %v2333
    %3131 = vmatprep.subr.bf16.mxu0 %v2337
    %3132 = vmatpush1.bf16.msra.mxu0 %v2336
    %3133 = vmatprep.mubr.bf16.mxu0 %v372
    %3134 = vmatmul.mubr.bf16.gmra.mrb[0].mxu0 %v371
    %v3135 = vpop.f32.mrb[0].mxu0
    %v3136 = vadd.f32 %v3065, %v3135
    %v3137 = vpop.f32.mrb[0].mxu0
    %v3138 = vadd.f32 %v3067, %v3137
    %v3139 = vpop.f32.mrb[0].mxu0
    %v3140 = vadd.f32 %v3069, %v3139
    %v3141 = vpop.f32.mrb[0].mxu0
    %v3142 = vadd.f32 %v3071, %v3141
    %3143 = vmatprep.mubr.bf16.mxu0 %v389
    %3144 = vmatmul.mubr.bf16.gmra.mrb[0].mxu0 %v388
    %v3145 = vpop.f32.mrb[0].mxu0
    %v3146 = vadd.f32 %v3075, %v3145
    %v3147 = vpop.f32.mrb[0].mxu0
    %v3148 = vadd.f32 %v3077, %v3147
    %v3149 = vpop.f32.mrb[0].mxu0
    %v3150 = vadd.f32 %v3079, %v3149
    %v3151 = vpop.f32.mrb[0].mxu0
    %v3152 = vadd.f32 %v3081, %v3151
    %3153 = vmatprep.mubr.bf16.mxu0 %v406
    %3154 = vmatmul.mubr.bf16.gmra.mrb[0].mxu0 %v405
    %v3155 = vpop.f32.mrb[0].mxu0
    %v3156 = vadd.f32 %v3085, %v3155
    %v3157 = vpop.f32.mrb[0].mxu0
    %v3158 = vadd.f32 %v3087, %v3157
    %v3159 = vpop.f32.mrb[0].mxu0
    %v3160 = vadd.f32 %v3089, %v3159
    %v3161 = vpop.f32.mrb[0].mxu0
    %v3162 = vadd.f32 %v3091, %v3161
    %3163 = vmatprep.mubr.bf16.mxu0 %v423
    %3164 = vmatmul.mubr.bf16.gmra.mrb[0].mxu0 %v422
    %v3165 = vpop.f32.mrb[0].mxu0
    %v3166 = vadd.f32 %v3095, %v3165
    %v3167 = vpop.f32.mrb[0].mxu0
    %v3168 = vadd.f32 %v3097, %v3167
    %v3169 = vpop.f32.mrb[0].mxu0
    %v3170 = vpop.f32.mrb[0].mxu0
    %3171 = vdwg.mxu0
    %3172 = vmatprep.subr.bf16.mxu0 %v2340
    %3173 = vmatpush1.bf16.msra.mxu0 %v2339
    %3174 = vmatprep.subr.bf16.mxu0 %v2343
    %3175 = vmatpush1.bf16.msra.mxu0 %v2342
    %3176 = vmatprep.subr.bf16.mxu0 %v2346
    %3177 = vmatpush1.bf16.msra.mxu0 %v2345
    %3178 = vmatprep.subr.bf16.mxu0 %v2349
    %3179 = vmatpush1.bf16.msra.mxu0 %v2348
    %3180 = vmatprep.subr.bf16.mxu0 %v2352
    %3181 = vmatpush1.bf16.msra.mxu0 %v2351
    %3182 = vmatprep.subr.bf16.mxu0 %v2355
    %3183 = vmatpush1.bf16.msra.mxu0 %v2354
    %3184 = vmatprep.subr.bf16.mxu0 %v2358
    %3185 = vmatpush1.bf16.msra.mxu0 %v2357
    %3186 = vmatprep.subr.bf16.mxu0 %v2361
    %3187 = vmatpush1.bf16.msra.mxu0 %v2360
    %3188 = vmatprep.subr.bf16.mxu0 %v2364
    %3189 = vmatpush1.bf16.msra.mxu0 %v2363
    %3190 = vmatprep.subr.bf16.mxu0 %v2367
    %3191 = vmatpush1.bf16.msra.mxu0 %v2366
    %3192 = vmatprep.subr.bf16.mxu0 %v2370
    %3193 = vmatpush1.bf16.msra.mxu0 %v2369
    %3194 = vmatprep.subr.bf16.mxu0 %v2373
    %3195 = vmatpush1.bf16.msra.mxu0 %v2372
    %3196 = vmatprep.subr.bf16.mxu0 %v2376
    %3197 = vmatpush1.bf16.msra.mxu0 %v2375
    %3198 = vmatprep.subr.bf16.mxu0 %v2379
    %3199 = vmatpush1.bf16.msra.mxu0 %v2378
    %3200 = vmatprep.subr.bf16.mxu0 %v2382
    %3201 = vmatpush1.bf16.msra.mxu0 %v2381
    %3202 = vmatprep.subr.bf16.mxu0 %v2385
    %3203 = vmatpush1.bf16.msra.mxu0 %v2384
    %3204 = vmatprep.mubr.bf16.mxu0 %v374
    %3205 = vmatmul.mubr.bf16.gmra.mrb[0].mxu0 %v373
    %v3206 = vpop.f32.mrb[0].mxu0
    %v3207 = vadd.f32 %v3136, %v3206
    %v3208 = vpop.f32.mrb[0].mxu0
    %v3209 = vadd.f32 %v3138, %v3208
    %v3210 = vpop.f32.mrb[0].mxu0
    %v3211 = vadd.f32 %v3140, %v3210
    %v3212 = vpop.f32.mrb[0].mxu0
    %v3213 = vadd.f32 %v3142, %v3212
    %3214 = vmatprep.mubr.bf16.mxu0 %v391
    %3215 = vmatmul.mubr.bf16.gmra.mrb[0].mxu0 %v390
    %v3216 = vpop.f32.mrb[0].mxu0
    %v3217 = vadd.f32 %v3146, %v3216
    %v3218 = vpop.f32.mrb[0].mxu0
    %v3219 = vadd.f32 %v3148, %v3218
    %v3220 = vpop.f32.mrb[0].mxu0
    %v3221 = vadd.f32 %v3150, %v3220
    %v3222 = vpop.f32.mrb[0].mxu0
    %v3223 = vadd.f32 %v3152, %v3222
    %3224 = vmatprep.mubr.bf16.mxu0 %v408
    %3225 = vmatmul.mubr.bf16.gmra.mrb[0].mxu0 %v407
    %v3226 = vpop.f32.mrb[0].mxu0
    %v3227 = vadd.f32 %v3156, %v3226
    %v3228 = vpop.f32.mrb[0].mxu0
    %v3229 = vadd.f32 %v3158, %v3228
    %v3230 = vpop.f32.mrb[0].mxu0
    %v3231 = vadd.f32 %v3160, %v3230
    %v3232 = vpop.f32.mrb[0].mxu0
    %v3233 = vadd.f32 %v3162, %v3232
    %3234 = vmatprep.mubr.bf16.mxu0 %v425
    %3235 = vmatmul.mubr.bf16.gmra.mrb[0].mxu0 %v424
    %v3236 = vpop.f32.mrb[0].mxu0
    %v3237 = vadd.f32 %v3166, %v3236
    %v3238 = vpop.f32.mrb[0].mxu0
    %v3239 = vadd.f32 %v3168, %v3238
    %v3240 = vpop.f32.mrb[0].mxu0
    %v3241 = vpop.f32.mrb[0].mxu0
    %3242 = vdwg.mxu0
    %3243 = vmatprep.subr.bf16.mxu0 %v2388
    %3244 = vmatpush1.bf16.msra.mxu0 %v2387
    %3245 = vmatprep.subr.bf16.mxu0 %v2391
    %3246 = vmatpush1.bf16.msra.mxu0 %v2390
    %3247 = vmatprep.subr.bf16.mxu0 %v2394
    %3248 = vmatpush1.bf16.msra.mxu0 %v2393
    %3249 = vmatprep.subr.bf16.mxu0 %v2397
    %3250 = vmatpush1.bf16.msra.mxu0 %v2396
    %3251 = vmatprep.subr.bf16.mxu0 %v2400
    %3252 = vmatpush1.bf16.msra.mxu0 %v2399
    %3253 = vmatprep.subr.bf16.mxu0 %v2403
    %3254 = vmatpush1.bf16.msra.mxu0 %v2402
    %3255 = vmatprep.subr.bf16.mxu0 %v2406
    %3256 = vmatpush1.bf16.msra.mxu0 %v2405
    %3257 = vmatprep.subr.bf16.mxu0 %v2409
    %3258 = vmatpush1.bf16.msra.mxu0 %v2408
    %3259 = vmatprep.subr.bf16.mxu0 %v2412
    %3260 = vmatpush1.bf16.msra.mxu0 %v2411
    %3261 = vmatprep.subr.bf16.mxu0 %v2415
    %3262 = vmatpush1.bf16.msra.mxu0 %v2414
    %3263 = vmatprep.subr.bf16.mxu0 %v2418
    %3264 = vmatpush1.bf16.msra.mxu0 %v2417
    %3265 = vmatprep.subr.bf16.mxu0 %v2421
    %3266 = vmatpush1.bf16.msra.mxu0 %v2420
    %3267 = vmatprep.subr.bf16.mxu0 %v2424
    %3268 = vmatpush1.bf16.msra.mxu0 %v2423
    %3269 = vmatprep.subr.bf16.mxu0 %v2427
    %3270 = vmatpush1.bf16.msra.mxu0 %v2426
    %3271 = vmatprep.subr.bf16.mxu0 %v2430
    %3272 = vmatpush1.bf16.msra.mxu0 %v2429
    %3273 = vmatprep.subr.bf16.mxu0 %v2433
    %3274 = vmatpush1.bf16.msra.mxu0 %v2432
    %3275 = vmatprep.mubr.bf16.mxu0 %v376
    %3276 = vmatmul.mubr.bf16.gmra.mrb[0].mxu0 %v375
    %v3277 = vpop.f32.mrb[0].mxu0
    %v3278 = vadd.f32 %v3207, %v3277
    %v3279 = vpop.f32.mrb[0].mxu0
    %v3280 = vadd.f32 %v3209, %v3279
    %v3281 = vpop.f32.mrb[0].mxu0
    %v3282 = vadd.f32 %v3211, %v3281
    %v3283 = vpop.f32.mrb[0].mxu0
    %v3284 = vadd.f32 %v3213, %v3283
    %3285 = vmatprep.mubr.bf16.mxu0 %v393
    %3286 = vmatmul.mubr.bf16.gmra.mrb[0].mxu0 %v392
    %v3287 = vpop.f32.mrb[0].mxu0
    %v3288 = vadd.f32 %v3217, %v3287
    %v3289 = vpop.f32.mrb[0].mxu0
    %v3290 = vadd.f32 %v3219, %v3289
    %v3291 = vpop.f32.mrb[0].mxu0
    %v3292 = vadd.f32 %v3221, %v3291
    %v3293 = vpop.f32.mrb[0].mxu0
    %v3294 = vadd.f32 %v3223, %v3293
    %3295 = vmatprep.mubr.bf16.mxu0 %v410
    %3296 = vmatmul.mubr.bf16.gmra.mrb[0].mxu0 %v409
    %v3297 = vpop.f32.mrb[0].mxu0
    %v3298 = vadd.f32 %v3227, %v3297
    %v3299 = vpop.f32.mrb[0].mxu0
    %v3300 = vadd.f32 %v3229, %v3299
    %v3301 = vpop.f32.mrb[0].mxu0
    %v3302 = vadd.f32 %v3231, %v3301
    %v3303 = vpop.f32.mrb[0].mxu0
    %v3304 = vadd.f32 %v3233, %v3303
    %3305 = vmatprep.mubr.bf16.mxu0 %v427
    %3306 = vmatmul.mubr.bf16.gmra.mrb[0].mxu0 %v426
    %v3307 = vpop.f32.mrb[0].mxu0
    %v3308 = vadd.f32 %v3237, %v3307
    %v3309 = vpop.f32.mrb[0].mxu0
    %v3310 = vadd.f32 %v3239, %v3309
    %v3311 = vpop.f32.mrb[0].mxu0
    %v3312 = vpop.f32.mrb[0].mxu0
    %3313 = vdwg.mxu0
    %3314 = vmatprep.subr.bf16.mxu0 %v2436
    %3315 = vmatpush1.bf16.msra.mxu0 %v2435
    %3316 = vmatprep.subr.bf16.mxu0 %v2439
    %3317 = vmatpush1.bf16.msra.mxu0 %v2438
    %3318 = vmatprep.subr.bf16.mxu0 %v2442
    %3319 = vmatpush1.bf16.msra.mxu0 %v2441
    %3320 = vmatprep.subr.bf16.mxu0 %v2445
    %3321 = vmatpush1.bf16.msra.mxu0 %v2444
    %3322 = vmatprep.subr.bf16.mxu0 %v2448
    %3323 = vmatpush1.bf16.msra.mxu0 %v2447
    %3324 = vmatprep.subr.bf16.mxu0 %v2451
    %3325 = vmatpush1.bf16.msra.mxu0 %v2450
    %3326 = vmatprep.subr.bf16.mxu0 %v2454
    %3327 = vmatpush1.bf16.msra.mxu0 %v2453
    %3328 = vmatprep.subr.bf16.mxu0 %v2457
    %3329 = vmatpush1.bf16.msra.mxu0 %v2456
    %3330 = vmatprep.subr.bf16.mxu0 %v2460
    %3331 = vmatpush1.bf16.msra.mxu0 %v2459
    %3332 = vmatprep.subr.bf16.mxu0 %v2463
    %3333 = vmatpush1.bf16.msra.mxu0 %v2462
    %3334 = vmatprep.subr.bf16.mxu0 %v2466
    %3335 = vmatpush1.bf16.msra.mxu0 %v2465
    %3336 = vmatprep.subr.bf16.mxu0 %v2469
    %3337 = vmatpush1.bf16.msra.mxu0 %v2468
    %3338 = vmatprep.subr.bf16.mxu0 %v2472
    %3339 = vmatpush1.bf16.msra.mxu0 %v2471
    %3340 = vmatprep.subr.bf16.mxu0 %v2475
    %3341 = vmatpush1.bf16.msra.mxu0 %v2474
    %3342 = vmatprep.subr.bf16.mxu0 %v2478
    %3343 = vmatpush1.bf16.msra.mxu0 %v2477
    %3344 = vmatprep.subr.bf16.mxu0 %v2481
    %3345 = vmatpush1.bf16.msra.mxu0 %v2480
    %3346 = vmatprep.mubr.bf16.mxu0 %v378
    %3347 = vmatmul.mubr.bf16.gmra.mrb[0].mxu0 %v377
    %v3348 = vpop.f32.mrb[0].mxu0
    %v3349 = vadd.f32 %v3278, %v3348
    %v3350 = vpop.f32.mrb[0].mxu0
    %v3351 = vadd.f32 %v3280, %v3350
    %v3352 = vpop.f32.mrb[0].mxu0
    %v3353 = vadd.f32 %v3282, %v3352
    %v3354 = vpop.f32.mrb[0].mxu0
    %v3355 = vadd.f32 %v3284, %v3354
    %3356 = vmatprep.mubr.bf16.mxu0 %v395
    %3357 = vmatmul.mubr.bf16.gmra.mrb[0].mxu0 %v394
    %v3358 = vpop.f32.mrb[0].mxu0
    %v3359 = vadd.f32 %v3288, %v3358
    %v3360 = vpop.f32.mrb[0].mxu0
    %v3361 = vadd.f32 %v3290, %v3360
    %v3362 = vpop.f32.mrb[0].mxu0
    %v3363 = vadd.f32 %v3292, %v3362
    %v3364 = vpop.f32.mrb[0].mxu0
    %v3365 = vadd.f32 %v3294, %v3364
    %3366 = vmatprep.mubr.bf16.mxu0 %v412
    %3367 = vmatmul.mubr.bf16.gmra.mrb[0].mxu0 %v411
    %v3368 = vpop.f32.mrb[0].mxu0
    %v3369 = vadd.f32 %v3298, %v3368
    %v3370 = vpop.f32.mrb[0].mxu0
    %v3371 = vadd.f32 %v3300, %v3370
    %v3372 = vpop.f32.mrb[0].mxu0
    %v3373 = vadd.f32 %v3302, %v3372
    %v3374 = vpop.f32.mrb[0].mxu0
    %v3375 = vadd.f32 %v3304, %v3374
    %3376 = vmatprep.mubr.bf16.mxu0 %v429
    %3377 = vmatmul.mubr.bf16.gmra.mrb[0].mxu0 %v428
    %v3378 = vpop.f32.mrb[0].mxu0
    %v3379 = vadd.f32 %v3308, %v3378
    %v3380 = vpop.f32.mrb[0].mxu0
    %v3381 = vadd.f32 %v3310, %v3380
    %v3382 = vpop.f32.mrb[0].mxu0
    %v3383 = vpop.f32.mrb[0].mxu0
    %3384 = vdwg.mxu0
    %3385 = vmatprep.subr.bf16.mxu0 %v2484
    %3386 = vmatpush1.bf16.msra.mxu0 %v2483
    %3387 = vmatprep.subr.bf16.mxu0 %v2487
    %3388 = vmatpush1.bf16.msra.mxu0 %v2486
    %3389 = vmatprep.subr.bf16.mxu0 %v2490
    %3390 = vmatpush1.bf16.msra.mxu0 %v2489
    %3391 = vmatprep.subr.bf16.mxu0 %v2493
    %3392 = vmatpush1.bf16.msra.mxu0 %v2492
    %3393 = vmatprep.subr.bf16.mxu0 %v2496
    %3394 = vmatpush1.bf16.msra.mxu0 %v2495
    %3395 = vmatprep.subr.bf16.mxu0 %v2499
    %3396 = vmatpush1.bf16.msra.mxu0 %v2498
    %3397 = vmatprep.subr.bf16.mxu0 %v2502
    %3398 = vmatpush1.bf16.msra.mxu0 %v2501
    %3399 = vmatprep.subr.bf16.mxu0 %v2505
    %3400 = vmatpush1.bf16.msra.mxu0 %v2504
    %3401 = vmatprep.subr.bf16.mxu0 %v2508
    %3402 = vmatpush1.bf16.msra.mxu0 %v2507
    %3403 = vmatprep.subr.bf16.mxu0 %v2511
    %3404 = vmatpush1.bf16.msra.mxu0 %v2510
    %3405 = vmatprep.subr.bf16.mxu0 %v2514
    %3406 = vmatpush1.bf16.msra.mxu0 %v2513
    %3407 = vmatprep.subr.bf16.mxu0 %v2517
    %3408 = vmatpush1.bf16.msra.mxu0 %v2516
    %3409 = vmatprep.subr.bf16.mxu0 %v2520
    %3410 = vmatpush1.bf16.msra.mxu0 %v2519
    %3411 = vmatprep.subr.bf16.mxu0 %v2523
    %3412 = vmatpush1.bf16.msra.mxu0 %v2522
    %3413 = vmatprep.subr.bf16.mxu0 %v2526
    %3414 = vmatpush1.bf16.msra.mxu0 %v2525
    %3415 = vmatprep.subr.bf16.mxu0 %v2529
    %3416 = vmatpush1.bf16.msra.mxu0 %v2528
    %3417 = vmatprep.mubr.bf16.mxu0 %v380
    %3418 = vmatmul.mubr.bf16.gmra.mrb[0].mxu0 %v379
    %v3419 = vpop.f32.mrb[0].mxu0
    %v3420 = vadd.f32 %v3349, %v3419
    %v3421 = vpop.f32.mrb[0].mxu0
    %v3422 = vadd.f32 %v3351, %v3421
    %v3423 = vpop.f32.mrb[0].mxu0
    %v3424 = vadd.f32 %v3353, %v3423
    %v3425 = vpop.f32.mrb[0].mxu0
    %v3426 = vadd.f32 %v3355, %v3425
    %3427 = vmatprep.mubr.bf16.mxu0 %v397
    %3428 = vmatmul.mubr.bf16.gmra.mrb[0].mxu0 %v396
    %v3429 = vpop.f32.mrb[0].mxu0
    %v3430 = vadd.f32 %v3359, %v3429
    %v3431 = vpop.f32.mrb[0].mxu0
    %v3432 = vadd.f32 %v3361, %v3431
    %v3433 = vpop.f32.mrb[0].mxu0
    %v3434 = vadd.f32 %v3363, %v3433
    %v3435 = vpop.f32.mrb[0].mxu0
    %v3436 = vadd.f32 %v3365, %v3435
    %3437 = vmatprep.mubr.bf16.mxu0 %v414
    %3438 = vmatmul.mubr.bf16.gmra.mrb[0].mxu0 %v413
    %v3439 = vpop.f32.mrb[0].mxu0
    %v3440 = vadd.f32 %v3369, %v3439
    %v3441 = vpop.f32.mrb[0].mxu0
    %v3442 = vadd.f32 %v3371, %v3441
    %v3443 = vpop.f32.mrb[0].mxu0
    %v3444 = vadd.f32 %v3373, %v3443
    %v3445 = vpop.f32.mrb[0].mxu0
    %v3446 = vadd.f32 %v3375, %v3445
    %3447 = vmatprep.mubr.bf16.mxu0 %v431
    %3448 = vmatmul.mubr.bf16.gmra.mrb[0].mxu0 %v430
    %v3449 = vpop.f32.mrb[0].mxu0
    %v3450 = vadd.f32 %v3379, %v3449
    %v3451 = vpop.f32.mrb[0].mxu0
    %v3452 = vadd.f32 %v3381, %v3451
    %v3453 = vpop.f32.mrb[0].mxu0
    %v3454 = vpop.f32.mrb[0].mxu0
    %3455 = vdwg.mxu0
    %3456 = vmatprep.subr.bf16.mxu0 %v2532
    %3457 = vmatpush1.bf16.msra.mxu0 %v2531
    %3458 = vmatprep.subr.bf16.mxu0 %v2535
    %3459 = vmatpush1.bf16.msra.mxu0 %v2534
    %3460 = vmatprep.subr.bf16.mxu0 %v2538
    %3461 = vmatpush1.bf16.msra.mxu0 %v2537
    %3462 = vmatprep.subr.bf16.mxu0 %v2541
    %3463 = vmatpush1.bf16.msra.mxu0 %v2540
    %3464 = vmatprep.subr.bf16.mxu0 %v2544
    %3465 = vmatpush1.bf16.msra.mxu0 %v2543
    %3466 = vmatprep.subr.bf16.mxu0 %v2547
    %3467 = vmatpush1.bf16.msra.mxu0 %v2546
    %3468 = vmatprep.subr.bf16.mxu0 %v2550
    %3469 = vmatpush1.bf16.msra.mxu0 %v2549
    %3470 = vmatprep.subr.bf16.mxu0 %v2553
    %3471 = vmatpush1.bf16.msra.mxu0 %v2552
    %3472 = vmatprep.subr.bf16.mxu0 %v2556
    %3473 = vmatpush1.bf16.msra.mxu0 %v2555
    %3474 = vmatprep.subr.bf16.mxu0 %v2559
    %3475 = vmatpush1.bf16.msra.mxu0 %v2558
    %3476 = vmatprep.subr.bf16.mxu0 %v2562
    %3477 = vmatpush1.bf16.msra.mxu0 %v2561
    %3478 = vmatprep.subr.bf16.mxu0 %v2565
    %3479 = vmatpush1.bf16.msra.mxu0 %v2564
    %3480 = vmatprep.subr.bf16.mxu0 %v2568
    %3481 = vmatpush1.bf16.msra.mxu0 %v2567
    %3482 = vmatprep.subr.bf16.mxu0 %v2571
    %3483 = vmatpush1.bf16.msra.mxu0 %v2570
    %3484 = vmatprep.subr.bf16.mxu0 %v2574
    %3485 = vmatpush1.bf16.msra.mxu0 %v2573
    %3486 = vmatprep.subr.bf16.mxu0 %v2577
    %3487 = vmatpush1.bf16.msra.mxu0 %v2576
    %3488 = vmatprep.mubr.bf16.mxu0 %v382
    %3489 = vmatmul.mubr.bf16.gmra.mrb[0].mxu0 %v381
    %v3490 = vpop.f32.mrb[0].mxu0
    %v3491 = vadd.f32 %v3420, %v3490
    %v3492 = vpop.f32.mrb[0].mxu0
    %v3493 = vadd.f32 %v3422, %v3492
    %v3494 = vpop.f32.mrb[0].mxu0
    %v3495 = vadd.f32 %v3424, %v3494
    %v3496 = vpop.f32.mrb[0].mxu0
    %v3497 = vadd.f32 %v3426, %v3496
    %3498 = vmatprep.mubr.bf16.mxu0 %v399
    %3499 = vmatmul.mubr.bf16.gmra.mrb[0].mxu0 %v398
    %v3500 = vpop.f32.mrb[0].mxu0
    %v3501 = vadd.f32 %v3430, %v3500
    %v3502 = vpop.f32.mrb[0].mxu0
    %v3503 = vadd.f32 %v3432, %v3502
    %v3504 = vpop.f32.mrb[0].mxu0
    %v3505 = vadd.f32 %v3434, %v3504
    %v3506 = vpop.f32.mrb[0].mxu0
    %v3507 = vadd.f32 %v3436, %v3506
    %3508 = vmatprep.mubr.bf16.mxu0 %v416
    %3509 = vmatmul.mubr.bf16.gmra.mrb[0].mxu0 %v415
    %v3510 = vpop.f32.mrb[0].mxu0
    %v3511 = vadd.f32 %v3440, %v3510
    %v3512 = vpop.f32.mrb[0].mxu0
    %v3513 = vadd.f32 %v3442, %v3512
    %v3514 = vpop.f32.mrb[0].mxu0
    %v3515 = vadd.f32 %v3444, %v3514
    %v3516 = vpop.f32.mrb[0].mxu0
    %v3517 = vadd.f32 %v3446, %v3516
    %3518 = vmatprep.mubr.bf16.mxu0 %v433
    %3519 = vmatmul.mubr.bf16.gmra.mrb[0].mxu0 %v432
    %v3520 = vpop.f32.mrb[0].mxu0
    %v3521 = vadd.f32 %v3450, %v3520
    %v3522 = vpop.f32.mrb[0].mxu0
    %v3523 = vadd.f32 %v3452, %v3522
    %v3524 = vpop.f32.mrb[0].mxu0
    %v3525 = vpop.f32.mrb[0].mxu0
    %3526 = vdwg.mxu0
    %3527 = vmatprep.subr.bf16.mxu0 %v2580
    %3528 = vmatpush1.bf16.msra.mxu0 %v2579
    %3529 = vmatprep.subr.bf16.mxu0 %v2583
    %3530 = vmatpush1.bf16.msra.mxu0 %v2582
    %3531 = vmatprep.subr.bf16.mxu0 %v2586
    %3532 = vmatpush1.bf16.msra.mxu0 %v2585
    %3533 = vmatprep.subr.bf16.mxu0 %v2589
    %3534 = vmatpush1.bf16.msra.mxu0 %v2588
    %3535 = vmatprep.subr.bf16.mxu0 %v2592
    %3536 = vmatpush1.bf16.msra.mxu0 %v2591
    %3537 = vmatprep.subr.bf16.mxu0 %v2595
    %3538 = vmatpush1.bf16.msra.mxu0 %v2594
    %3539 = vmatprep.subr.bf16.mxu0 %v2598
    %3540 = vmatpush1.bf16.msra.mxu0 %v2597
    %3541 = vmatprep.subr.bf16.mxu0 %v2601
    %3542 = vmatpush1.bf16.msra.mxu0 %v2600
    %3543 = vmatprep.subr.bf16.mxu0 %v2604
    %3544 = vmatpush1.bf16.msra.mxu0 %v2603
    %3545 = vmatprep.subr.bf16.mxu0 %v2607
    %3546 = vmatpush1.bf16.msra.mxu0 %v2606
    %3547 = vmatprep.subr.bf16.mxu0 %v2610
    %3548 = vmatpush1.bf16.msra.mxu0 %v2609
    %3549 = vmatprep.subr.bf16.mxu0 %v2613
    %3550 = vmatpush1.bf16.msra.mxu0 %v2612
    %3551 = vmatprep.subr.bf16.mxu0 %v2616
    %3552 = vmatpush1.bf16.msra.mxu0 %v2615
    %3553 = vmatprep.subr.bf16.mxu0 %v2619
    %3554 = vmatpush1.bf16.msra.mxu0 %v2618
    %3555 = vmatprep.subr.bf16.mxu0 %v2622
    %3556 = vmatpush1.bf16.msra.mxu0 %v2621
    %3557 = vmatprep.subr.bf16.mxu0 %v2625
    %3558 = vmatpush1.bf16.msra.mxu0 %v2624
    %3559 = vmatprep.mubr.bf16.mxu0 %v384
    %3560 = vmatmul.mubr.bf16.gmra.mrb[0].mxu0 %v383
    %v3561 = vpop.f32.mrb[0].mxu0
    %v3562 = vadd.f32 %v3491, %v3561
    %v3563 = vpop.f32.mrb[0].mxu0
    %v3564 = vadd.f32 %v3493, %v3563
    %v3565 = vpop.f32.mrb[0].mxu0
    %v3566 = vadd.f32 %v3495, %v3565
    %v3567 = vpop.f32.mrb[0].mxu0
    %v3568 = vadd.f32 %v3497, %v3567
    %3569 = vmatprep.mubr.bf16.mxu0 %v401
    %3570 = vmatmul.mubr.bf16.gmra.mrb[0].mxu0 %v400
    %v3571 = vpop.f32.mrb[0].mxu0
    %v3572 = vadd.f32 %v3501, %v3571
    %v3573 = vpop.f32.mrb[0].mxu0
    %v3574 = vadd.f32 %v3503, %v3573
    %v3575 = vpop.f32.mrb[0].mxu0
    %v3576 = vadd.f32 %v3505, %v3575
    %v3577 = vpop.f32.mrb[0].mxu0
    %v3578 = vadd.f32 %v3507, %v3577
    %3579 = vmatprep.mubr.bf16.mxu0 %v418
    %3580 = vmatmul.mubr.bf16.gmra.mrb[0].mxu0 %v417
    %v3581 = vpop.f32.mrb[0].mxu0
    %v3582 = vadd.f32 %v3511, %v3581
    %v3583 = vpop.f32.mrb[0].mxu0
    %v3584 = vadd.f32 %v3513, %v3583
    %v3585 = vpop.f32.mrb[0].mxu0
    %v3586 = vadd.f32 %v3515, %v3585
    %v3587 = vpop.f32.mrb[0].mxu0
    %v3588 = vadd.f32 %v3517, %v3587
    %3589 = vmatprep.mubr.bf16.mxu0 %v435
    %3590 = vmatmul.mubr.bf16.gmra.mrb[0].mxu0 %v434
    %v3591 = vpop.f32.mrb[0].mxu0
    %v3592 = vadd.f32 %v3521, %v3591
    %v3593 = vpop.f32.mrb[0].mxu0
    %v3594 = vadd.f32 %v3523, %v3593
    %v3595 = vpop.f32.mrb[0].mxu0
    %v3596 = vpop.f32.mrb[0].mxu0
    %3597 = vdwg.mxu0
    %3598 = vmatprep.subr.bf16.mxu0 %v2628
    %3599 = vmatpush1.bf16.msra.mxu0 %v2627
    %3600 = vmatprep.subr.bf16.mxu0 0
    %3601 = vmatpush1.bf16.msra.mxu0 0
    %3602 = vmatprep.subr.bf16.mxu0 0
    %3603 = vmatpush1.bf16.msra.mxu0 0
    %3604 = vmatprep.subr.bf16.mxu0 0
    %3605 = vmatpush1.bf16.msra.mxu0 0
    %3606 = vmatprep.subr.bf16.mxu0 0
    %3607 = vmatpush1.bf16.msra.mxu0 0
    %3608 = vmatprep.subr.bf16.mxu0 0
    %3609 = vmatpush1.bf16.msra.mxu0 0
    %3610 = vmatprep.subr.bf16.mxu0 0
    %3611 = vmatpush1.bf16.msra.mxu0 0
    %3612 = vmatprep.subr.bf16.mxu0 0
    %3613 = vmatpush1.bf16.msra.mxu0 0
    %3614 = vmatprep.subr.bf16.mxu0 0
    %3615 = vmatpush1.bf16.msra.mxu0 0
    %3616 = vmatprep.subr.bf16.mxu0 0
    %3617 = vmatpush1.bf16.msra.mxu0 0
    %3618 = vmatprep.subr.bf16.mxu0 0
    %3619 = vmatpush1.bf16.msra.mxu0 0
    %3620 = vmatprep.subr.bf16.mxu0 0
    %3621 = vmatpush1.bf16.msra.mxu0 0
    %3622 = vmatprep.subr.bf16.mxu0 0
    %3623 = vmatpush1.bf16.msra.mxu0 0
    %3624 = vmatprep.subr.bf16.mxu0 0
    %3625 = vmatpush1.bf16.msra.mxu0 0
    %3626 = vmatprep.subr.bf16.mxu0 0
    %3627 = vmatpush1.bf16.msra.mxu0 0
    %3628 = vmatprep.subr.bf16.mxu0 0
    %3629 = vmatpush1.bf16.msra.mxu0 0
    %3630 = vmatprep.mubr.bf16.mxu0 0
    %3631 = vmatmul.mubr.bf16.gmra.mrb[0].mxu0 %v3019
    %v3632 = vpop.f32.mrb[0].mxu0
    %v3633 = vadd.f32 %v3562, %v3632
    %v3634 = vpop.f32.mrb[0].mxu0
    %v3635 = vadd.f32 %v3564, %v3634
    %v3636 = vpop.f32.mrb[0].mxu0
    %v3637 = vadd.f32 %v3566, %v3636
    %v3638 = vpop.f32.mrb[0].mxu0
    %v3639 = vadd.f32 %v3568, %v3638
    %3640 = vmatprep.mubr.bf16.mxu0 0
    %3641 = vmatmul.mubr.bf16.gmra.mrb[0].mxu0 %v3022
    %v3642 = vpop.f32.mrb[0].mxu0
    %v3643 = vadd.f32 %v3572, %v3642
    %v3644 = vpop.f32.mrb[0].mxu0
    %v3645 = vadd.f32 %v3574, %v3644
    %v3646 = vpop.f32.mrb[0].mxu0
    %v3647 = vadd.f32 %v3576, %v3646
    %v3648 = vpop.f32.mrb[0].mxu0
    %v3649 = vadd.f32 %v3578, %v3648
    %3650 = vmatprep.mubr.bf16.mxu0 0
    %3651 = vmatmul.mubr.bf16.gmra.mrb[0].mxu0 %v3025
    %v3652 = vpop.f32.mrb[0].mxu0
    %v3653 = vadd.f32 %v3582, %v3652
    %v3654 = vpop.f32.mrb[0].mxu0
    %v3655 = vadd.f32 %v3584, %v3654
    %v3656 = vpop.f32.mrb[0].mxu0
    %v3657 = vadd.f32 %v3586, %v3656
    %v3658 = vpop.f32.mrb[0].mxu0
    %v3659 = vadd.f32 %v3588, %v3658
    %3660 = vmatprep.mubr.bf16.mxu0 0
    %3661 = vmatmul.mubr.bf16.gmra.mrb[0].mxu0 %v3028
    %v3662 = vpop.f32.mrb[0].mxu0
    %v3663 = vadd.f32 %v3592, %v3662
    %v3664 = vpop.f32.mrb[0].mxu0
    %v3665 = vadd.f32 %v3594, %v3664
    %v3666 = vpop.f32.mrb[0].mxu0
    %v3667 = vpop.f32.mrb[0].mxu0
    %3668 = vdwg.mxu0
    %3669 = vmatprep.subr.bf16.mxu0 0
    %3670 = vmatpush1.bf16.msra.mxu0 %v2245
    %3671 = vmatprep.subr.bf16.mxu0 0
    %3672 = vmatpush1.bf16.msra.mxu0 %v2248
    %3673 = vmatprep.subr.bf16.mxu0 0
    %3674 = vmatpush1.bf16.msra.mxu0 %v2251
    %3675 = vmatprep.subr.bf16.mxu0 0
    %3676 = vmatpush1.bf16.msra.mxu0 %v2254
    %3677 = vmatprep.subr.bf16.mxu0 0
    %3678 = vmatpush1.bf16.msra.mxu0 %v2257
    %3679 = vmatprep.subr.bf16.mxu0 0
    %3680 = vmatpush1.bf16.msra.mxu0 %v2260
    %3681 = vmatprep.subr.bf16.mxu0 0
    %3682 = vmatpush1.bf16.msra.mxu0 %v2263
    %3683 = vmatprep.subr.bf16.mxu0 0
    %3684 = vmatpush1.bf16.msra.mxu0 %v2266
    %3685 = vmatprep.subr.bf16.mxu0 0
    %3686 = vmatpush1.bf16.msra.mxu0 %v2269
    %3687 = vmatprep.subr.bf16.mxu0 0
    %3688 = vmatpush1.bf16.msra.mxu0 %v2272
    %3689 = vmatprep.subr.bf16.mxu0 0
    %3690 = vmatpush1.bf16.msra.mxu0 %v2275
    %3691 = vmatprep.subr.bf16.mxu0 0
    %3692 = vmatpush1.bf16.msra.mxu0 %v2278
    %3693 = vmatprep.subr.bf16.mxu0 0
    %3694 = vmatpush1.bf16.msra.mxu0 %v2281
    %3695 = vmatprep.subr.bf16.mxu0 0
    %3696 = vmatpush1.bf16.msra.mxu0 %v2284
    %3697 = vmatprep.subr.bf16.mxu0 0
    %3698 = vmatpush1.bf16.msra.mxu0 %v2287
    %3699 = vmatprep.subr.bf16.mxu0 0
    %3700 = vmatpush1.bf16.msra.mxu0 %v2290
    %3701 = vmatprep.mubr.bf16.mxu0 %v370
    %3702 = vmatmul.mubr.bf16.gmra.mrb[0].mxu0 %v369
    %v3703 = vpop.f32.mrb[0].mxu0
    %v3704 = vadd.f32 0.0, %v3703
    %v3705 = vpop.f32.mrb[0].mxu0
    %v3706 = vpop.f32.mrb[0].mxu0
    %v3707 = vadd.f32 0.0, %v3706
    %v3708 = vpop.f32.mrb[0].mxu0
    %3709 = vmatprep.mubr.bf16.mxu0 %v387
    %3710 = vmatmul.mubr.bf16.gmra.mrb[0].mxu0 %v386
    %v3711 = vpop.f32.mrb[0].mxu0
    %v3712 = vadd.f32 0.0, %v3711
    %v3713 = vpop.f32.mrb[0].mxu0
    %v3714 = vpop.f32.mrb[0].mxu0
    %v3715 = vadd.f32 0.0, %v3714
    %v3716 = vpop.f32.mrb[0].mxu0
    %3717 = vmatprep.mubr.bf16.mxu0 %v404
    %3718 = vmatmul.mubr.bf16.gmra.mrb[0].mxu0 %v403
    %v3719 = vpop.f32.mrb[0].mxu0
    %v3720 = vadd.f32 0.0, %v3719
    %v3721 = vpop.f32.mrb[0].mxu0
    %v3722 = vpop.f32.mrb[0].mxu0
    %v3723 = vadd.f32 0.0, %v3722
    %v3724 = vpop.f32.mrb[0].mxu0
    %3725 = vmatprep.mubr.bf16.mxu0 %v421
    %3726 = vmatmul.mubr.bf16.gmra.mrb[0].mxu0 %v420
    %v3727 = vpop.f32.mrb[0].mxu0
    %v3728 = vadd.f32 0.0, %v3727
    %v3729 = vpop.f32.mrb[0].mxu0
    %v3730 = vpop.f32.mrb[0].mxu0
    %v3731 = vpop.f32.mrb[0].mxu0
    %3732 = vdwg.mxu0
    %3733 = vmatprep.subr.bf16.mxu0 0
    %3734 = vmatpush1.bf16.msra.mxu0 %v2293
    %3735 = vmatprep.subr.bf16.mxu0 0
    %3736 = vmatpush1.bf16.msra.mxu0 %v2296
    %3737 = vmatprep.subr.bf16.mxu0 0
    %3738 = vmatpush1.bf16.msra.mxu0 %v2299
    %3739 = vmatprep.subr.bf16.mxu0 0
    %3740 = vmatpush1.bf16.msra.mxu0 %v2302
    %3741 = vmatprep.subr.bf16.mxu0 0
    %3742 = vmatpush1.bf16.msra.mxu0 %v2305
    %3743 = vmatprep.subr.bf16.mxu0 0
    %3744 = vmatpush1.bf16.msra.mxu0 %v2308
    %3745 = vmatprep.subr.bf16.mxu0 0
    %3746 = vmatpush1.bf16.msra.mxu0 %v2311
    %3747 = vmatprep.subr.bf16.mxu0 0
    %3748 = vmatpush1.bf16.msra.mxu0 %v2314
    %3749 = vmatprep.subr.bf16.mxu0 0
    %3750 = vmatpush1.bf16.msra.mxu0 %v2317
    %3751 = vmatprep.subr.bf16.mxu0 0
    %3752 = vmatpush1.bf16.msra.mxu0 %v2320
    %3753 = vmatprep.subr.bf16.mxu0 0
    %3754 = vmatpush1.bf16.msra.mxu0 %v2323
    %3755 = vmatprep.subr.bf16.mxu0 0
    %3756 = vmatpush1.bf16.msra.mxu0 %v2326
    %3757 = vmatprep.subr.bf16.mxu0 0
    %3758 = vmatpush1.bf16.msra.mxu0 %v2329
    %3759 = vmatprep.subr.bf16.mxu0 0
    %3760 = vmatpush1.bf16.msra.mxu0 %v2332
    %3761 = vmatprep.subr.bf16.mxu0 0
    %3762 = vmatpush1.bf16.msra.mxu0 %v2335
    %3763 = vmatprep.subr.bf16.mxu0 0
    %3764 = vmatpush1.bf16.msra.mxu0 %v2338
    %3765 = vmatprep.mubr.bf16.mxu0 %v372
    %3766 = vmatmul.mubr.bf16.gmra.mrb[0].mxu0 %v371
    %v3767 = vpop.f32.mrb[0].mxu0
    %v3768 = vadd.f32 %v3704, %v3767
    %v3769 = vpop.f32.mrb[0].mxu0
    %v3770 = vpop.f32.mrb[0].mxu0
    %v3771 = vadd.f32 %v3707, %v3770
    %v3772 = vpop.f32.mrb[0].mxu0
    %3773 = vmatprep.mubr.bf16.mxu0 %v389
    %3774 = vmatmul.mubr.bf16.gmra.mrb[0].mxu0 %v388
    %v3775 = vpop.f32.mrb[0].mxu0
    %v3776 = vadd.f32 %v3712, %v3775
    %v3777 = vpop.f32.mrb[0].mxu0
    %v3778 = vpop.f32.mrb[0].mxu0
    %v3779 = vadd.f32 %v3715, %v3778
    %v3780 = vpop.f32.mrb[0].mxu0
    %3781 = vmatprep.mubr.bf16.mxu0 %v406
    %3782 = vmatmul.mubr.bf16.gmra.mrb[0].mxu0 %v405
    %v3783 = vpop.f32.mrb[0].mxu0
    %v3784 = vadd.f32 %v3720, %v3783
    %v3785 = vpop.f32.mrb[0].mxu0
    %v3786 = vpop.f32.mrb[0].mxu0
    %v3787 = vadd.f32 %v3723, %v3786
    %v3788 = vpop.f32.mrb[0].mxu0
    %3789 = vmatprep.mubr.bf16.mxu0 %v423
    %3790 = vmatmul.mubr.bf16.gmra.mrb[0].mxu0 %v422
    %v3791 = vpop.f32.mrb[0].mxu0
    %v3792 = vadd.f32 %v3728, %v3791
    %v3793 = vpop.f32.mrb[0].mxu0
    %v3794 = vpop.f32.mrb[0].mxu0
    %v3795 = vpop.f32.mrb[0].mxu0
    %3796 = vdwg.mxu0
    %3797 = vmatprep.subr.bf16.mxu0 0
    %3798 = vmatpush1.bf16.msra.mxu0 %v2341
    %3799 = vmatprep.subr.bf16.mxu0 0
    %3800 = vmatpush1.bf16.msra.mxu0 %v2344
    %3801 = vmatprep.subr.bf16.mxu0 0
    %3802 = vmatpush1.bf16.msra.mxu0 %v2347
    %3803 = vmatprep.subr.bf16.mxu0 0
    %3804 = vmatpush1.bf16.msra.mxu0 %v2350
    %3805 = vmatprep.subr.bf16.mxu0 0
    %3806 = vmatpush1.bf16.msra.mxu0 %v2353
    %3807 = vmatprep.subr.bf16.mxu0 0
    %3808 = vmatpush1.bf16.msra.mxu0 %v2356
    %3809 = vmatprep.subr.bf16.mxu0 0
    %3810 = vmatpush1.bf16.msra.mxu0 %v2359
    %3811 = vmatprep.subr.bf16.mxu0 0
    %3812 = vmatpush1.bf16.msra.mxu0 %v2362
    %3813 = vmatprep.subr.bf16.mxu0 0
    %3814 = vmatpush1.bf16.msra.mxu0 %v2365
    %3815 = vmatprep.subr.bf16.mxu0 0
    %3816 = vmatpush1.bf16.msra.mxu0 %v2368
    %3817 = vmatprep.subr.bf16.mxu0 0
    %3818 = vmatpush1.bf16.msra.mxu0 %v2371
    %3819 = vmatprep.subr.bf16.mxu0 0
    %3820 = vmatpush1.bf16.msra.mxu0 %v2374
    %3821 = vmatprep.subr.bf16.mxu0 0
    %3822 = vmatpush1.bf16.msra.mxu0 %v2377
    %3823 = vmatprep.subr.bf16.mxu0 0
    %3824 = vmatpush1.bf16.msra.mxu0 %v2380
    %3825 = vmatprep.subr.bf16.mxu0 0
    %3826 = vmatpush1.bf16.msra.mxu0 %v2383
    %3827 = vmatprep.subr.bf16.mxu0 0
    %3828 = vmatpush1.bf16.msra.mxu0 %v2386
    %3829 = vmatprep.mubr.bf16.mxu0 %v374
    %3830 = vmatmul.mubr.bf16.gmra.mrb[0].mxu0 %v373
    %v3831 = vpop.f32.mrb[0].mxu0
    %v3832 = vadd.f32 %v3768, %v3831
    %v3833 = vpop.f32.mrb[0].mxu0
    %v3834 = vpop.f32.mrb[0].mxu0
    %v3835 = vadd.f32 %v3771, %v3834
    %v3836 = vpop.f32.mrb[0].mxu0
    %3837 = vmatprep.mubr.bf16.mxu0 %v391
    %3838 = vmatmul.mubr.bf16.gmra.mrb[0].mxu0 %v390
    %v3839 = vpop.f32.mrb[0].mxu0
    %v3840 = vadd.f32 %v3776, %v3839
    %v3841 = vpop.f32.mrb[0].mxu0
    %v3842 = vpop.f32.mrb[0].mxu0
    %v3843 = vadd.f32 %v3779, %v3842
    %v3844 = vpop.f32.mrb[0].mxu0
    %3845 = vmatprep.mubr.bf16.mxu0 %v408
    %3846 = vmatmul.mubr.bf16.gmra.mrb[0].mxu0 %v407
    %v3847 = vpop.f32.mrb[0].mxu0
    %v3848 = vadd.f32 %v3784, %v3847
    %v3849 = vpop.f32.mrb[0].mxu0
    %v3850 = vpop.f32.mrb[0].mxu0
    %v3851 = vadd.f32 %v3787, %v3850
    %v3852 = vpop.f32.mrb[0].mxu0
    %3853 = vmatprep.mubr.bf16.mxu0 %v425
    %3854 = vmatmul.mubr.bf16.gmra.mrb[0].mxu0 %v424
    %v3855 = vpop.f32.mrb[0].mxu0
    %v3856 = vadd.f32 %v3792, %v3855
    %v3857 = vpop.f32.mrb[0].mxu0
    %v3858 = vpop.f32.mrb[0].mxu0
    %v3859 = vpop.f32.mrb[0].mxu0
    %3860 = vdwg.mxu0
    %3861 = vmatprep.subr.bf16.mxu0 0
    %3862 = vmatpush1.bf16.msra.mxu0 %v2389
    %3863 = vmatprep.subr.bf16.mxu0 0
    %3864 = vmatpush1.bf16.msra.mxu0 %v2392
    %3865 = vmatprep.subr.bf16.mxu0 0
    %3866 = vmatpush1.bf16.msra.mxu0 %v2395
    %3867 = vmatprep.subr.bf16.mxu0 0
    %3868 = vmatpush1.bf16.msra.mxu0 %v2398
    %3869 = vmatprep.subr.bf16.mxu0 0
    %3870 = vmatpush1.bf16.msra.mxu0 %v2401
    %3871 = vmatprep.subr.bf16.mxu0 0
    %3872 = vmatpush1.bf16.msra.mxu0 %v2404
    %3873 = vmatprep.subr.bf16.mxu0 0
    %3874 = vmatpush1.bf16.msra.mxu0 %v2407
    %3875 = vmatprep.subr.bf16.mxu0 0
    %3876 = vmatpush1.bf16.msra.mxu0 %v2410
    %3877 = vmatprep.subr.bf16.mxu0 0
    %3878 = vmatpush1.bf16.msra.mxu0 %v2413
    %3879 = vmatprep.subr.bf16.mxu0 0
    %3880 = vmatpush1.bf16.msra.mxu0 %v2416
    %3881 = vmatprep.subr.bf16.mxu0 0
    %3882 = vmatpush1.bf16.msra.mxu0 %v2419
    %3883 = vmatprep.subr.bf16.mxu0 0
    %3884 = vmatpush1.bf16.msra.mxu0 %v2422
    %3885 = vmatprep.subr.bf16.mxu0 0
    %3886 = vmatpush1.bf16.msra.mxu0 %v2425
    %3887 = vmatprep.subr.bf16.mxu0 0
    %3888 = vmatpush1.bf16.msra.mxu0 %v2428
    %3889 = vmatprep.subr.bf16.mxu0 0
    %3890 = vmatpush1.bf16.msra.mxu0 %v2431
    %3891 = vmatprep.subr.bf16.mxu0 0
    %3892 = vmatpush1.bf16.msra.mxu0 %v2434
    %3893 = vmatprep.mubr.bf16.mxu0 %v376
    %3894 = vmatmul.mubr.bf16.gmra.mrb[0].mxu0 %v375
    %v3895 = vpop.f32.mrb[0].mxu0
    %v3896 = vadd.f32 %v3832, %v3895
    %v3897 = vpop.f32.mrb[0].mxu0
    %v3898 = vpop.f32.mrb[0].mxu0
    %v3899 = vadd.f32 %v3835, %v3898
    %v3900 = vpop.f32.mrb[0].mxu0
    %3901 = vmatprep.mubr.bf16.mxu0 %v393
    %3902 = vmatmul.mubr.bf16.gmra.mrb[0].mxu0 %v392
    %v3903 = vpop.f32.mrb[0].mxu0
    %v3904 = vadd.f32 %v3840, %v3903
    %v3905 = vpop.f32.mrb[0].mxu0
    %v3906 = vpop.f32.mrb[0].mxu0
    %v3907 = vadd.f32 %v3843, %v3906
    %v3908 = vpop.f32.mrb[0].mxu0
    %3909 = vmatprep.mubr.bf16.mxu0 %v410
    %3910 = vmatmul.mubr.bf16.gmra.mrb[0].mxu0 %v409
    %v3911 = vpop.f32.mrb[0].mxu0
    %v3912 = vadd.f32 %v3848, %v3911
    %v3913 = vpop.f32.mrb[0].mxu0
    %v3914 = vpop.f32.mrb[0].mxu0
    %v3915 = vadd.f32 %v3851, %v3914
    %v3916 = vpop.f32.mrb[0].mxu0
    %3917 = vmatprep.mubr.bf16.mxu0 %v427
    %3918 = vmatmul.mubr.bf16.gmra.mrb[0].mxu0 %v426
    %v3919 = vpop.f32.mrb[0].mxu0
    %v3920 = vadd.f32 %v3856, %v3919
    %v3921 = vpop.f32.mrb[0].mxu0
    %v3922 = vpop.f32.mrb[0].mxu0
    %v3923 = vpop.f32.mrb[0].mxu0
    %3924 = vdwg.mxu0
    %3925 = vmatprep.subr.bf16.mxu0 0
    %3926 = vmatpush1.bf16.msra.mxu0 %v2437
    %3927 = vmatprep.subr.bf16.mxu0 0
    %3928 = vmatpush1.bf16.msra.mxu0 %v2440
    %3929 = vmatprep.subr.bf16.mxu0 0
    %3930 = vmatpush1.bf16.msra.mxu0 %v2443
    %3931 = vmatprep.subr.bf16.mxu0 0
    %3932 = vmatpush1.bf16.msra.mxu0 %v2446
    %3933 = vmatprep.subr.bf16.mxu0 0
    %3934 = vmatpush1.bf16.msra.mxu0 %v2449
    %3935 = vmatprep.subr.bf16.mxu0 0
    %3936 = vmatpush1.bf16.msra.mxu0 %v2452
    %3937 = vmatprep.subr.bf16.mxu0 0
    %3938 = vmatpush1.bf16.msra.mxu0 %v2455
    %3939 = vmatprep.subr.bf16.mxu0 0
    %3940 = vmatpush1.bf16.msra.mxu0 %v2458
    %3941 = vmatprep.subr.bf16.mxu0 0
    %3942 = vmatpush1.bf16.msra.mxu0 %v2461
    %3943 = vmatprep.subr.bf16.mxu0 0
    %3944 = vmatpush1.bf16.msra.mxu0 %v2464
    %3945 = vmatprep.subr.bf16.mxu0 0
    %3946 = vmatpush1.bf16.msra.mxu0 %v2467
    %3947 = vmatprep.subr.bf16.mxu0 0
    %3948 = vmatpush1.bf16.msra.mxu0 %v2470
    %3949 = vmatprep.subr.bf16.mxu0 0
    %3950 = vmatpush1.bf16.msra.mxu0 %v2473
    %3951 = vmatprep.subr.bf16.mxu0 0
    %3952 = vmatpush1.bf16.msra.mxu0 %v2476
    %3953 = vmatprep.subr.bf16.mxu0 0
    %3954 = vmatpush1.bf16.msra.mxu0 %v2479
    %3955 = vmatprep.subr.bf16.mxu0 0
    %3956 = vmatpush1.bf16.msra.mxu0 %v2482
    %3957 = vmatprep.mubr.bf16.mxu0 %v378
    %3958 = vmatmul.mubr.bf16.gmra.mrb[0].mxu0 %v377
    %v3959 = vpop.f32.mrb[0].mxu0
    %v3960 = vadd.f32 %v3896, %v3959
    %v3961 = vpop.f32.mrb[0].mxu0
    %v3962 = vpop.f32.mrb[0].mxu0
    %v3963 = vadd.f32 %v3899, %v3962
    %v3964 = vpop.f32.mrb[0].mxu0
    %3965 = vmatprep.mubr.bf16.mxu0 %v395
    %3966 = vmatmul.mubr.bf16.gmra.mrb[0].mxu0 %v394
    %v3967 = vpop.f32.mrb[0].mxu0
    %v3968 = vadd.f32 %v3904, %v3967
    %v3969 = vpop.f32.mrb[0].mxu0
    %v3970 = vpop.f32.mrb[0].mxu0
    %v3971 = vadd.f32 %v3907, %v3970
    %v3972 = vpop.f32.mrb[0].mxu0
    %3973 = vmatprep.mubr.bf16.mxu0 %v412
    %3974 = vmatmul.mubr.bf16.gmra.mrb[0].mxu0 %v411
    %v3975 = vpop.f32.mrb[0].mxu0
    %v3976 = vadd.f32 %v3912, %v3975
    %v3977 = vpop.f32.mrb[0].mxu0
    %v3978 = vpop.f32.mrb[0].mxu0
    %v3979 = vadd.f32 %v3915, %v3978
    %v3980 = vpop.f32.mrb[0].mxu0
    %3981 = vmatprep.mubr.bf16.mxu0 %v429
    %3982 = vmatmul.mubr.bf16.gmra.mrb[0].mxu0 %v428
    %v3983 = vpop.f32.mrb[0].mxu0
    %v3984 = vadd.f32 %v3920, %v3983
    %v3985 = vpop.f32.mrb[0].mxu0
    %v3986 = vpop.f32.mrb[0].mxu0
    %v3987 = vpop.f32.mrb[0].mxu0
    %3988 = vdwg.mxu0
    %3989 = vmatprep.subr.bf16.mxu0 0
    %3990 = vmatpush1.bf16.msra.mxu0 %v2485
    %3991 = vmatprep.subr.bf16.mxu0 0
    %3992 = vmatpush1.bf16.msra.mxu0 %v2488
    %3993 = vmatprep.subr.bf16.mxu0 0
    %3994 = vmatpush1.bf16.msra.mxu0 %v2491
    %3995 = vmatprep.subr.bf16.mxu0 0
    %3996 = vmatpush1.bf16.msra.mxu0 %v2494
    %3997 = vmatprep.subr.bf16.mxu0 0
    %3998 = vmatpush1.bf16.msra.mxu0 %v2497
    %3999 = vmatprep.subr.bf16.mxu0 0
    %4000 = vmatpush1.bf16.msra.mxu0 %v2500
    %4001 = vmatprep.subr.bf16.mxu0 0
    %4002 = vmatpush1.bf16.msra.mxu0 %v2503
    %4003 = vmatprep.subr.bf16.mxu0 0
    %4004 = vmatpush1.bf16.msra.mxu0 %v2506
    %4005 = vmatprep.subr.bf16.mxu0 0
    %4006 = vmatpush1.bf16.msra.mxu0 %v2509
    %4007 = vmatprep.subr.bf16.mxu0 0
    %4008 = vmatpush1.bf16.msra.mxu0 %v2512
    %4009 = vmatprep.subr.bf16.mxu0 0
    %4010 = vmatpush1.bf16.msra.mxu0 %v2515
    %4011 = vmatprep.subr.bf16.mxu0 0
    %4012 = vmatpush1.bf16.msra.mxu0 %v2518
    %4013 = vmatprep.subr.bf16.mxu0 0
    %4014 = vmatpush1.bf16.msra.mxu0 %v2521
    %4015 = vmatprep.subr.bf16.mxu0 0
    %4016 = vmatpush1.bf16.msra.mxu0 %v2524
    %4017 = vmatprep.subr.bf16.mxu0 0
    %4018 = vmatpush1.bf16.msra.mxu0 %v2527
    %4019 = vmatprep.subr.bf16.mxu0 0
    %4020 = vmatpush1.bf16.msra.mxu0 %v2530
    %4021 = vmatprep.mubr.bf16.mxu0 %v380
    %4022 = vmatmul.mubr.bf16.gmra.mrb[0].mxu0 %v379
    %v4023 = vpop.f32.mrb[0].mxu0
    %v4024 = vadd.f32 %v3960, %v4023
    %v4025 = vpop.f32.mrb[0].mxu0
    %v4026 = vpop.f32.mrb[0].mxu0
    %v4027 = vadd.f32 %v3963, %v4026
    %v4028 = vpop.f32.mrb[0].mxu0
    %4029 = vmatprep.mubr.bf16.mxu0 %v397
    %4030 = vmatmul.mubr.bf16.gmra.mrb[0].mxu0 %v396
    %v4031 = vpop.f32.mrb[0].mxu0
    %v4032 = vadd.f32 %v3968, %v4031
    %v4033 = vpop.f32.mrb[0].mxu0
    %v4034 = vpop.f32.mrb[0].mxu0
    %v4035 = vadd.f32 %v3971, %v4034
    %v4036 = vpop.f32.mrb[0].mxu0
    %4037 = vmatprep.mubr.bf16.mxu0 %v414
    %4038 = vmatmul.mubr.bf16.gmra.mrb[0].mxu0 %v413
    %v4039 = vpop.f32.mrb[0].mxu0
    %v4040 = vadd.f32 %v3976, %v4039
    %v4041 = vpop.f32.mrb[0].mxu0
    %v4042 = vpop.f32.mrb[0].mxu0
    %v4043 = vadd.f32 %v3979, %v4042
    %v4044 = vpop.f32.mrb[0].mxu0
    %4045 = vmatprep.mubr.bf16.mxu0 %v431
    %4046 = vmatmul.mubr.bf16.gmra.mrb[0].mxu0 %v430
    %v4047 = vpop.f32.mrb[0].mxu0
    %v4048 = vadd.f32 %v3984, %v4047
    %v4049 = vpop.f32.mrb[0].mxu0
    %v4050 = vpop.f32.mrb[0].mxu0
    %v4051 = vpop.f32.mrb[0].mxu0
    %4052 = vdwg.mxu0
    %4053 = vmatprep.subr.bf16.mxu0 0
    %4054 = vmatpush1.bf16.msra.mxu0 %v2533
    %4055 = vmatprep.subr.bf16.mxu0 0
    %4056 = vmatpush1.bf16.msra.mxu0 %v2536
    %4057 = vmatprep.subr.bf16.mxu0 0
    %4058 = vmatpush1.bf16.msra.mxu0 %v2539
    %4059 = vmatprep.subr.bf16.mxu0 0
    %4060 = vmatpush1.bf16.msra.mxu0 %v2542
    %4061 = vmatprep.subr.bf16.mxu0 0
    %4062 = vmatpush1.bf16.msra.mxu0 %v2545
    %4063 = vmatprep.subr.bf16.mxu0 0
    %4064 = vmatpush1.bf16.msra.mxu0 %v2548
    %4065 = vmatprep.subr.bf16.mxu0 0
    %4066 = vmatpush1.bf16.msra.mxu0 %v2551
    %4067 = vmatprep.subr.bf16.mxu0 0
    %4068 = vmatpush1.bf16.msra.mxu0 %v2554
    %4069 = vmatprep.subr.bf16.mxu0 0
    %4070 = vmatpush1.bf16.msra.mxu0 %v2557
    %4071 = vmatprep.subr.bf16.mxu0 0
    %4072 = vmatpush1.bf16.msra.mxu0 %v2560
    %4073 = vmatprep.subr.bf16.mxu0 0
    %4074 = vmatpush1.bf16.msra.mxu0 %v2563
    %4075 = vmatprep.subr.bf16.mxu0 0
    %4076 = vmatpush1.bf16.msra.mxu0 %v2566
    %4077 = vmatprep.subr.bf16.mxu0 0
    %4078 = vmatpush1.bf16.msra.mxu0 %v2569
    %4079 = vmatprep.subr.bf16.mxu0 0
    %4080 = vmatpush1.bf16.msra.mxu0 %v2572
    %4081 = vmatprep.subr.bf16.mxu0 0
    %4082 = vmatpush1.bf16.msra.mxu0 %v2575
    %4083 = vmatprep.subr.bf16.mxu0 0
    %4084 = vmatpush1.bf16.msra.mxu0 %v2578
    %4085 = vmatprep.mubr.bf16.mxu0 %v382
    %4086 = vmatmul.mubr.bf16.gmra.mrb[0].mxu0 %v381
    %v4087 = vpop.f32.mrb[0].mxu0
    %v4088 = vadd.f32 %v4024, %v4087
    %v4089 = vpop.f32.mrb[0].mxu0
    %v4090 = vpop.f32.mrb[0].mxu0
    %v4091 = vadd.f32 %v4027, %v4090
    %v4092 = vpop.f32.mrb[0].mxu0
    %4093 = vmatprep.mubr.bf16.mxu0 %v399
    %4094 = vmatmul.mubr.bf16.gmra.mrb[0].mxu0 %v398
    %v4095 = vpop.f32.mrb[0].mxu0
    %v4096 = vadd.f32 %v4032, %v4095
    %v4097 = vpop.f32.mrb[0].mxu0
    %v4098 = vpop.f32.mrb[0].mxu0
    %v4099 = vadd.f32 %v4035, %v4098
    %v4100 = vpop.f32.mrb[0].mxu0
    %4101 = vmatprep.mubr.bf16.mxu0 %v416
    %4102 = vmatmul.mubr.bf16.gmra.mrb[0].mxu0 %v415
    %v4103 = vpop.f32.mrb[0].mxu0
    %v4104 = vadd.f32 %v4040, %v4103
    %v4105 = vpop.f32.mrb[0].mxu0
    %v4106 = vpop.f32.mrb[0].mxu0
    %v4107 = vadd.f32 %v4043, %v4106
    %v4108 = vpop.f32.mrb[0].mxu0
    %4109 = vmatprep.mubr.bf16.mxu0 %v433
    %4110 = vmatmul.mubr.bf16.gmra.mrb[0].mxu0 %v432
    %v4111 = vpop.f32.mrb[0].mxu0
    %v4112 = vadd.f32 %v4048, %v4111
    %v4113 = vpop.f32.mrb[0].mxu0
    %v4114 = vpop.f32.mrb[0].mxu0
    %v4115 = vpop.f32.mrb[0].mxu0
    %4116 = vdwg.mxu0
    %4117 = vmatprep.subr.bf16.mxu0 0
    %4118 = vmatpush1.bf16.msra.mxu0 %v2581
    %4119 = vmatprep.subr.bf16.mxu0 0
    %4120 = vmatpush1.bf16.msra.mxu0 %v2584
    %4121 = vmatprep.subr.bf16.mxu0 0
    %4122 = vmatpush1.bf16.msra.mxu0 %v2587
    %4123 = vmatprep.subr.bf16.mxu0 0
    %4124 = vmatpush1.bf16.msra.mxu0 %v2590
    %4125 = vmatprep.subr.bf16.mxu0 0
    %4126 = vmatpush1.bf16.msra.mxu0 %v2593
    %4127 = vmatprep.subr.bf16.mxu0 0
    %4128 = vmatpush1.bf16.msra.mxu0 %v2596
    %4129 = vmatprep.subr.bf16.mxu0 0
    %4130 = vmatpush1.bf16.msra.mxu0 %v2599
    %4131 = vmatprep.subr.bf16.mxu0 0
    %4132 = vmatpush1.bf16.msra.mxu0 %v2602
    %4133 = vmatprep.subr.bf16.mxu0 0
    %4134 = vmatpush1.bf16.msra.mxu0 %v2605
    %4135 = vmatprep.subr.bf16.mxu0 0
    %4136 = vmatpush1.bf16.msra.mxu0 %v2608
    %4137 = vmatprep.subr.bf16.mxu0 0
    %4138 = vmatpush1.bf16.msra.mxu0 %v2611
    %4139 = vmatprep.subr.bf16.mxu0 0
    %4140 = vmatpush1.bf16.msra.mxu0 %v2614
    %4141 = vmatprep.subr.bf16.mxu0 0
    %4142 = vmatpush1.bf16.msra.mxu0 %v2617
    %4143 = vmatprep.subr.bf16.mxu0 0
    %4144 = vmatpush1.bf16.msra.mxu0 %v2620
    %4145 = vmatprep.subr.bf16.mxu0 0
    %4146 = vmatpush1.bf16.msra.mxu0 %v2623
    %4147 = vmatprep.subr.bf16.mxu0 0
    %4148 = vmatpush1.bf16.msra.mxu0 %v2626
    %4149 = vmatprep.mubr.bf16.mxu0 %v384
    %4150 = vmatmul.mubr.bf16.gmra.mrb[0].mxu0 %v383
    %v4151 = vpop.f32.mrb[0].mxu0
    %v4152 = vadd.f32 %v4088, %v4151
    %v4153 = vpop.f32.mrb[0].mxu0
    %v4154 = vpop.f32.mrb[0].mxu0
    %v4155 = vadd.f32 %v4091, %v4154
    %v4156 = vpop.f32.mrb[0].mxu0
    %4157 = vmatprep.mubr.bf16.mxu0 %v401
    %4158 = vmatmul.mubr.bf16.gmra.mrb[0].mxu0 %v400
    %v4159 = vpop.f32.mrb[0].mxu0
    %v4160 = vadd.f32 %v4096, %v4159
    %v4161 = vpop.f32.mrb[0].mxu0
    %v4162 = vpop.f32.mrb[0].mxu0
    %v4163 = vadd.f32 %v4099, %v4162
    %v4164 = vpop.f32.mrb[0].mxu0
    %4165 = vmatprep.mubr.bf16.mxu0 %v418
    %4166 = vmatmul.mubr.bf16.gmra.mrb[0].mxu0 %v417
    %v4167 = vpop.f32.mrb[0].mxu0
    %v4168 = vadd.f32 %v4104, %v4167
    %v4169 = vpop.f32.mrb[0].mxu0
    %v4170 = vpop.f32.mrb[0].mxu0
    %v4171 = vadd.f32 %v4107, %v4170
    %v4172 = vpop.f32.mrb[0].mxu0
    %4173 = vmatprep.mubr.bf16.mxu0 %v435
    %4174 = vmatmul.mubr.bf16.gmra.mrb[0].mxu0 %v434
    %v4175 = vpop.f32.mrb[0].mxu0
    %v4176 = vadd.f32 %v4112, %v4175
    %v4177 = vpop.f32.mrb[0].mxu0
    %v4178 = vpop.f32.mrb[0].mxu0
    %v4179 = vpop.f32.mrb[0].mxu0
    %4180 = vdwg.mxu0
    %4181 = vmatprep.subr.bf16.mxu0 0
    %4182 = vmatpush1.bf16.msra.mxu0 %v2629
    %4183 = vmatprep.subr.bf16.mxu0 0
    %4184 = vmatpush1.bf16.msra.mxu0 0
    %4185 = vmatprep.subr.bf16.mxu0 0
    %4186 = vmatpush1.bf16.msra.mxu0 0
    %4187 = vmatprep.subr.bf16.mxu0 0
    %4188 = vmatpush1.bf16.msra.mxu0 0
    %4189 = vmatprep.subr.bf16.mxu0 0
    %4190 = vmatpush1.bf16.msra.mxu0 0
    %4191 = vmatprep.subr.bf16.mxu0 0
    %4192 = vmatpush1.bf16.msra.mxu0 0
    %4193 = vmatprep.subr.bf16.mxu0 0
    %4194 = vmatpush1.bf16.msra.mxu0 0
    %4195 = vmatprep.subr.bf16.mxu0 0
    %4196 = vmatpush1.bf16.msra.mxu0 0
    %4197 = vmatprep.subr.bf16.mxu0 0
    %4198 = vmatpush1.bf16.msra.mxu0 0
    %4199 = vmatprep.subr.bf16.mxu0 0
    %4200 = vmatpush1.bf16.msra.mxu0 0
    %4201 = vmatprep.subr.bf16.mxu0 0
    %4202 = vmatpush1.bf16.msra.mxu0 0
    %4203 = vmatprep.subr.bf16.mxu0 0
    %4204 = vmatpush1.bf16.msra.mxu0 0
    %4205 = vmatprep.subr.bf16.mxu0 0
    %4206 = vmatpush1.bf16.msra.mxu0 0
    %4207 = vmatprep.subr.bf16.mxu0 0
    %4208 = vmatpush1.bf16.msra.mxu0 0
    %4209 = vmatprep.subr.bf16.mxu0 0
    %4210 = vmatpush1.bf16.msra.mxu0 0
    %4211 = vmatprep.subr.bf16.mxu0 0
    %4212 = vmatpush1.bf16.msra.mxu0 0
    %4213 = vmatprep.mubr.bf16.mxu0 0
    %4214 = vmatmul.mubr.bf16.gmra.mrb[0].mxu0 %v3019
    %v4215 = vpop.f32.mrb[0].mxu0
    %v4216 = vadd.f32 %v4152, %v4215
    %v4217 = vpop.f32.mrb[0].mxu0
    %v4218 = vpop.f32.mrb[0].mxu0
    %v4219 = vadd.f32 %v4155, %v4218
    %v4220 = vpop.f32.mrb[0].mxu0
    %4221 = vmatprep.mubr.bf16.mxu0 0
    %4222 = vmatmul.mubr.bf16.gmra.mrb[0].mxu0 %v3022
    %v4223 = vpop.f32.mrb[0].mxu0
    %v4224 = vadd.f32 %v4160, %v4223
    %v4225 = vpop.f32.mrb[0].mxu0
    %v4226 = vpop.f32.mrb[0].mxu0
    %v4227 = vadd.f32 %v4163, %v4226
    %v4228 = vpop.f32.mrb[0].mxu0
    %4229 = vmatprep.mubr.bf16.mxu0 0
    %4230 = vmatmul.mubr.bf16.gmra.mrb[0].mxu0 %v3025
    %v4231 = vpop.f32.mrb[0].mxu0
    %v4232 = vadd.f32 %v4168, %v4231
    %v4233 = vpop.f32.mrb[0].mxu0
    %v4234 = vpop.f32.mrb[0].mxu0
    %v4235 = vadd.f32 %v4171, %v4234
    %v4236 = vpop.f32.mrb[0].mxu0
    %4237 = vmatprep.mubr.bf16.mxu0 0
    %4238 = vmatmul.mubr.bf16.gmra.mrb[0].mxu0 %v3028
    %v4239 = vpop.f32.mrb[0].mxu0
    %v4240 = vadd.f32 %v4176, %v4239
    %v4241 = vpop.f32.mrb[0].mxu0
    %v4242 = vpop.f32.mrb[0].mxu0
    %v4243 = vpop.f32.mrb[0].mxu0
    %4244 = vdwg.mxu0
    %v4245 = vadd.f32 %v3633, %v3637
    %v4246 = vadd.f32 %v4245, %v3643
    %v4247 = vadd.f32 %v4246, %v3647
    %v4248 = vadd.f32 %v4247, %v3653
    %v4249 = vadd.f32 %v4248, %v3657
    %vm4250 = vcmask 1040384
    %v4251 = vsel %vm4250, %v3663, 0.0
    %v4252 = vadd.f32 %v4249, %v4251
    %v4253 = vrot.slane %v4252, 4
    %v4254 = vadd.f32 %v4252, %v4253
    %v4255 = vrot.slane %v4254, 2
    %v4256 = vadd.f32 %v4254, %v4255
    %v4257 = vrot.slane %v4256, 1
    %v4258 = vadd.f32 %v4256, %v4257
    %v4259 = vadd.f32 %v3635, %v3639
    %v4260 = vadd.f32 %v4259, %v3645
    %v4261 = vadd.f32 %v4260, %v3649
    %v4262 = vadd.f32 %v4261, %v3655
    %v4263 = vadd.f32 %v4262, %v3659
    %v4264 = vsel %vm4250, %v3665, 0.0
    %v4265 = vadd.f32 %v4263, %v4264
    %v4266 = vrot.slane %v4265, 4
    %v4267 = vadd.f32 %v4265, %v4266
    %v4268 = vrot.slane %v4267, 2
    %v4269 = vadd.f32 %v4267, %v4268
    %v4270 = vrot.slane %v4269, 1
    %v4271 = vadd.f32 %v4269, %v4270
    %vm4272 = vcmask 719872
    %v4273 = vsel %vm4272, %v4216, 0.0
    %v4274 = vsel %vm4272, %v4219, 0.0
    %v4275 = vadd.f32 %v4273, %v4274
    %v4276 = vsel %vm4272, %v4224, 0.0
    %v4277 = vadd.f32 %v4275, %v4276
    %v4278 = vsel %vm4272, %v4227, 0.0
    %v4279 = vadd.f32 %v4277, %v4278
    %v4280 = vsel %vm4272, %v4232, 0.0
    %v4281 = vadd.f32 %v4279, %v4280
    %v4282 = vsel %vm4272, %v4235, 0.0
    %v4283 = vadd.f32 %v4281, %v4282
    %vm4284 = vcmask 712704
    %v4285 = vsel %vm4284, %v4240, 0.0
    %v4286 = vadd.f32 %v4283, %v4285
    %v4287 = vrot.slane %v4286, 4
    %v4288 = vadd.f32 %v4286, %v4287
    %v4289 = vrot.slane %v4288, 2
    %v4290 = vadd.f32 %v4288, %v4289
    %v4291 = vrot.slane %v4290, 1
    %v4292 = vadd.f32 %v4290, %v4291
    %v4293 = vrcp.pop 49.0
    %v4294 = vmul.f32 %v4258, %v4293
    %v4295 = vmul.f32 %v4271, %v4293
    %v4296 = vmul.f32 %v4292, %v4293
    %v4297 = vsub.f32 %v3633, %v4294
    %v4298 = vsub.f32 %v3635, %v4295
    %v4299 = vsub.f32 %v4216, %v4296
    %v4300 = vsub.f32 %v3637, %v4294
    %v4301 = vsub.f32 %v3639, %v4295
    %v4302 = vsub.f32 %v4219, %v4296
    %v4303 = vsub.f32 %v3643, %v4294
    %v4304 = vsub.f32 %v3645, %v4295
    %v4305 = vsub.f32 %v4224, %v4296
    %v4306 = vsub.f32 %v3647, %v4294
    %v4307 = vsub.f32 %v3649, %v4295
    %v4308 = vsub.f32 %v4227, %v4296
    %v4309 = vsub.f32 %v3653, %v4294
    %v4310 = vsub.f32 %v3655, %v4295
    %v4311 = vsub.f32 %v4232, %v4296
    %v4312 = vsub.f32 %v3657, %v4294
    %v4313 = vsub.f32 %v3659, %v4295
    %v4314 = vsub.f32 %v4235, %v4296
    %v4315 = vsub.f32 %v3663, %v4294
    %v4316 = vsub.f32 %v3665, %v4295
    %v4317 = vsub.f32 %v4240, %v4296
    %v4318 = vmul.f32 %v4297, %v4297
    %v4319 = vmul.f32 %v4298, %v4298
    %v4320 = vmul.f32 %v4299, %v4299
    %v4321 = vmul.f32 %v4300, %v4300
    %v4322 = vmul.f32 %v4301, %v4301
    %v4323 = vmul.f32 %v4302, %v4302
    %v4324 = vmul.f32 %v4303, %v4303
    %v4325 = vmul.f32 %v4304, %v4304
    %v4326 = vmul.f32 %v4305, %v4305
    %v4327 = vmul.f32 %v4306, %v4306
    %v4328 = vmul.f32 %v4307, %v4307
    %v4329 = vmul.f32 %v4308, %v4308
    %v4330 = vmul.f32 %v4309, %v4309
    %v4331 = vmul.f32 %v4310, %v4310
    %v4332 = vmul.f32 %v4311, %v4311
    %v4333 = vmul.f32 %v4312, %v4312
    %v4334 = vmul.f32 %v4313, %v4313
    %v4335 = vmul.f32 %v4314, %v4314
    %v4336 = vmul.f32 %v4315, %v4315
    %v4337 = vmul.f32 %v4316, %v4316
    %v4338 = vmul.f32 %v4317, %v4317
    %v4339 = vadd.f32 %v4318, %v4321
    %v4340 = vadd.f32 %v4339, %v4324
    %v4341 = vadd.f32 %v4340, %v4327
    %v4342 = vadd.f32 %v4341, %v4330
    %v4343 = vadd.f32 %v4342, %v4333
    %v4344 = vsel %vm4250, %v4336, 0.0
    %v4345 = vadd.f32 %v4343, %v4344
    %v4346 = vrot.slane %v4345, 4
    %v4347 = vadd.f32 %v4345, %v4346
    %v4348 = vrot.slane %v4347, 2
    %v4349 = vadd.f32 %v4347, %v4348
    %v4350 = vrot.slane %v4349, 1
    %v4351 = vadd.f32 %v4349, %v4350
    %v4352 = vadd.f32 %v4319, %v4322
    %v4353 = vadd.f32 %v4352, %v4325
    %v4354 = vadd.f32 %v4353, %v4328
    %v4355 = vadd.f32 %v4354, %v4331
    %v4356 = vadd.f32 %v4355, %v4334
    %v4357 = vsel %vm4250, %v4337, 0.0
    %v4358 = vadd.f32 %v4356, %v4357
    %v4359 = vrot.slane %v4358, 4
    %v4360 = vadd.f32 %v4358, %v4359
    %v4361 = vrot.slane %v4360, 2
    %v4362 = vadd.f32 %v4360, %v4361
    %v4363 = vrot.slane %v4362, 1
    %v4364 = vadd.f32 %v4362, %v4363
    %v4365 = vsel %vm4272, %v4320, 0.0
    %v4366 = vsel %vm4272, %v4323, 0.0
    %v4367 = vadd.f32 %v4365, %v4366
    %v4368 = vsel %vm4272, %v4326, 0.0
    %v4369 = vadd.f32 %v4367, %v4368
    %v4370 = vsel %vm4272, %v4329, 0.0
    %v4371 = vadd.f32 %v4369, %v4370
    %v4372 = vsel %vm4272, %v4332, 0.0
    %v4373 = vadd.f32 %v4371, %v4372
    %v4374 = vsel %vm4272, %v4335, 0.0
    %v4375 = vadd.f32 %v4373, %v4374
    %v4376 = vsel %vm4284, %v4338, 0.0
    %v4377 = vadd.f32 %v4375, %v4376
    %v4378 = vrot.slane %v4377, 4
    %v4379 = vadd.f32 %v4377, %v4378
    %v4380 = vrot.slane %v4379, 2
    %v4381 = vadd.f32 %v4379, %v4380
    %v4382 = vrot.slane %v4381, 1
    %v4383 = vadd.f32 %v4381, %v4382
    %v4384 = vmul.f32 %v4351, %v4293
    %v4385 = vmul.f32 %v4364, %v4293
    %v4386 = vmul.f32 %v4383, %v4293
    %v4387 = vadd.f32 %v4384, 0.001
    %v4388 = vadd.f32 %v4385, 0.001
    %v4389 = vadd.f32 %v4386, 0.001
    %v4390 = vrsqrt.pop %v4387
    %v4391 = vrsqrt.pop %v4388
    %v4392 = vrsqrt.pop %v4389
    %v4393 = vmul.f32 %v4297, %v4390
    %v4394 = vmul.f32 %v4298, %v4391
    %v4395 = vmul.f32 %v4299, %v4392
    %v4396 = vmul.f32 %v4300, %v4390
    %v4397 = vmul.f32 %v4301, %v4391
    %v4398 = vmul.f32 %v4302, %v4392
    %v4399 = vmul.f32 %v4303, %v4390
    %v4400 = vmul.f32 %v4304, %v4391
    %v4401 = vmul.f32 %v4305, %v4392
    %v4402 = vmul.f32 %v4306, %v4390
    %v4403 = vmul.f32 %v4307, %v4391
    %v4404 = vmul.f32 %v4308, %v4392
    %v4405 = vmul.f32 %v4309, %v4390
    %v4406 = vmul.f32 %v4310, %v4391
    %v4407 = vmul.f32 %v4311, %v4392
    %v4408 = vmul.f32 %v4312, %v4390
    %v4409 = vmul.f32 %v4313, %v4391
    %v4410 = vmul.f32 %v4314, %v4392
    %v4411 = vmul.f32 %v4315, %v4390
    %v4412 = vmul.f32 %v4316, %v4391
    %v4413 = vmul.f32 %v4317, %v4392
    %v4414 = vld [vmem:[%s3] sm:$0x7]
    %v4416 = vlaneseq
    %v4417 = vshrl.u32 %v4416, 7
    %v4418 = vsub.s32 0, %v4417
    %v4419 = vrot.slane %v4414, %v4418
    %v4420 = vlaneseq
    %v4421 = vshrl.u32 %v4420, 7
    %v4422 = vsub.s32 1, %v4421
    %v4423 = vrot.slane %v4414, %v4422
    %v4424 = vlaneseq
    %v4425 = vshrl.u32 %v4424, 7
    %v4426 = vsub.s32 2, %v4425
    %v4427 = vrot.slane %v4414, %v4426
    %v4431 = vmul.f32 %v4393, %v4419
    %v4432 = vmul.f32 %v4394, %v4423
    %v4433 = vmul.f32 %v4395, %v4427
    %v4434 = vmul.f32 %v4396, %v4419
    %v4435 = vmul.f32 %v4397, %v4423
    %v4436 = vmul.f32 %v4398, %v4427
    %v4437 = vmul.f32 %v4399, %v4419
    %v4438 = vmul.f32 %v4400, %v4423
    %v4439 = vmul.f32 %v4401, %v4427
    %v4440 = vmul.f32 %v4402, %v4419
    %v4441 = vmul.f32 %v4403, %v4423
    %v4442 = vmul.f32 %v4404, %v4427
    %v4443 = vmul.f32 %v4405, %v4419
    %v4444 = vmul.f32 %v4406, %v4423
    %v4445 = vmul.f32 %v4407, %v4427
    %v4446 = vmul.f32 %v4408, %v4419
    %v4447 = vmul.f32 %v4409, %v4423
    %v4448 = vmul.f32 %v4410, %v4427
    %v4449 = vmul.f32 %v4411, %v4419
    %v4450 = vmul.f32 %v4412, %v4423
    %v4451 = vmul.f32 %v4413, %v4427
    %v4452 = vld [vmem:[%s4] sm:$0x7]
    %v4454 = vlaneseq
    %v4455 = vshrl.u32 %v4454, 7
    %v4456 = vsub.s32 0, %v4455
    %v4457 = vrot.slane %v4452, %v4456
    %v4458 = vlaneseq
    %v4459 = vshrl.u32 %v4458, 7
    %v4460 = vsub.s32 1, %v4459
    %v4461 = vrot.slane %v4452, %v4460
    %v4462 = vlaneseq
    %v4463 = vshrl.u32 %v4462, 7
    %v4464 = vsub.s32 2, %v4463
    %v4465 = vrot.slane %v4452, %v4464
    %v4469 = vadd.f32 %v4431, %v4457
    %v4470 = vadd.f32 %v4432, %v4461
    %v4471 = vadd.f32 %v4433, %v4465
    %v4472 = vadd.f32 %v4434, %v4457
    %v4473 = vadd.f32 %v4435, %v4461
    %v4474 = vadd.f32 %v4436, %v4465
    %v4475 = vadd.f32 %v4437, %v4457
    %v4476 = vadd.f32 %v4438, %v4461
    %v4477 = vadd.f32 %v4439, %v4465
    %v4478 = vadd.f32 %v4440, %v4457
    %v4479 = vadd.f32 %v4441, %v4461
    %v4480 = vadd.f32 %v4442, %v4465
    %v4481 = vadd.f32 %v4443, %v4457
    %v4482 = vadd.f32 %v4444, %v4461
    %v4483 = vadd.f32 %v4445, %v4465
    %v4484 = vadd.f32 %v4446, %v4457
    %v4485 = vadd.f32 %v4447, %v4461
    %v4486 = vadd.f32 %v4448, %v4465
    %v4487 = vadd.f32 %v4449, %v4457
    %v4488 = vadd.f32 %v4450, %v4461
    %v4489 = vadd.f32 %v4451, %v4465
    %4490 = vst [vmem:[#allocation2] sm:$0xff] %v4469
    %4491 = vst [vmem:[#allocation2 + $0x8] sm:$0xff] %v4470
    %4492 = vst.msk [vmem:[#allocation2 + $0x10] sm:$0xff] %vm4272, %v4471
    %4493 = vst [vmem:[#allocation2 + $0x18] sm:$0xff] %v4472
    %4494 = vst [vmem:[#allocation2 + $0x20] sm:$0xff] %v4473
    %4495 = vst.msk [vmem:[#allocation2 + $0x28] sm:$0xff] %vm4272, %v4474
    %4496 = vst [vmem:[#allocation2 + $0x30] sm:$0xff] %v4475
    %4497 = vst [vmem:[#allocation2 + $0x38] sm:$0xff] %v4476
    %4498 = vst.msk [vmem:[#allocation2 + $0x40] sm:$0xff] %vm4272, %v4477
    %4499 = vst [vmem:[#allocation2 + $0x48] sm:$0xff] %v4478
    %4500 = vst [vmem:[#allocation2 + $0x50] sm:$0xff] %v4479
    %4501 = vst.msk [vmem:[#allocation2 + $0x58] sm:$0xff] %vm4272, %v4480
    %4502 = vst [vmem:[#allocation2 + $0x60] sm:$0xff] %v4481
    %4503 = vst [vmem:[#allocation2 + $0x68] sm:$0xff] %v4482
    %4504 = vst.msk [vmem:[#allocation2 + $0x70] sm:$0xff] %vm4272, %v4483
    %4505 = vst [vmem:[#allocation2 + $0x78] sm:$0xff] %v4484
    %4506 = vst [vmem:[#allocation2 + $0x80] sm:$0xff] %v4485
    %4507 = vst.msk [vmem:[#allocation2 + $0x88] sm:$0xff] %vm4272, %v4486
    %4508 = vst [vmem:[#allocation2 + $0x90] sm:$0x1] %v4487
    %4509 = vst [vmem:[#allocation2 + $0x98] sm:$0x1] %v4488
    %4510 = vst.msk [vmem:[#allocation2 + $0xa0] sm:$0x1] %vm4284, %v4489
    // Predicated region
    $region22: #{tpu_custom_call.1} parent=1 // pred_check
      _
    $region23: #{tpu_custom_call.1} parent=1 // pred_check_branch
      %4512 = sbr.rel (0) target = $region25
    $region24: #{tpu_custom_call.1} parent=1 // pred_region
      %s4514 = ssub.s32 2688, 2688
      %4515 = vsyncadd [#allocation3], %s4514
      %s4516 = sshll.u32 [#allocation2], 4
      %s4517 = int_to_ptr.vmem [resolvable:$true] %s4516
      %4522 = dma.vmem_to_hbm [thread:$0]  %s4517, 2688, %s5, [#allocation3], 384, 384, 24
    $region25: #{tpu_custom_call.1} parent=1 // pred_fallthru
      _
    // Predicated region
    $region26: #{tpu_custom_call.1} parent=1 // pred_check
      _
    $region27: #{tpu_custom_call.1} parent=1 // pred_check_branch
      %4524 = sbr.rel (0) target = $region29
    $region28: #{tpu_custom_call.1} parent=1 // pred_region
      %4525 = dma.done [#allocation3], 2688
    $region29: #{tpu_custom_call.1} parent=1 // pred_fallthru
      _
    %4526 = vsyncpa [#allocation3], 1

</llo_original>
